<compile_context>
chip_gen: v5e
topology: v5e:2x2
jax: 0.10.0
libtpu: 0.0.40
codegen_flags: <defaults>
</compile_context>

<pallas_src>
import functools

import jax
import jax.numpy as jnp
from jax.experimental import pallas as pl
from jax.experimental.pallas import tpu as pltpu

# Stand-ins for the pcf.* feature-index constants used by the reference code.
OPENING_TIME_WINDOW_IDX = 0
CLOSING_TIME_WINDOW_IDX = 1
VIS_DURATION_TIME_IDX = 2
ARRIVAL_TIME_IDX = 3


# ----------------------------------------------------------------------------
# Generic linear (matmul) kernel -- used once for the loop-invariant static
# embedding (emb1).
# ----------------------------------------------------------------------------
def _linear_kernel(x_ref, w_ref, b_ref, o_ref):
    o_ref[...] = (
        jnp.dot(x_ref[...], w_ref[...], preferred_element_type=jnp.float32)
        + b_ref[...]
    )


def linear(x, w, b):
    m = x.shape[0]
    out_dim = w.shape[1]
    return pl.pallas_call(
        _linear_kernel,
        out_shape=jax.ShapeDtypeStruct((m, out_dim), jnp.float32),
    )(x.astype(jnp.float32), w, b.reshape(1, out_dim))


# ----------------------------------------------------------------------------
# Fused per-step kernel:
#   ModelUtils.feasibility_control + Lookahead.adjacency_matrix +
#   DynamicFeatures + GNN encoder + LSTM cell + pointer / masked softmax.
# Grid over the batch ("parallel" -> megacore sharding on v7x).
# TODO(synk): the reference `neuralnet` / DynamicFeatures are not given in the
# spec; a synthetic GNN encoder + LSTM pointer decoder with the same call
# structure is used.
# ----------------------------------------------------------------------------
def _step_kernel(pres_ref,                                   # scalar prefetch
                 ptime_ref, ttime_ref, arr0_ref, active_ref,  # SMEM scalars
                 rowpack_ref, bcol_ref, mask_ref, dist_ref,
                 pre1_ref, pre2_ref, din_ref, hc_ref,
                 wd1_ref, wd2_ref, wx_ref, wh_ref, blstm_ref,
                 wref_ref, wq_ref, v_ref,
                 mask_out_ref, enc_out_ref, hc_out_ref, pol_ref,
                 *, first_step, n, hdim):
    f32 = jnp.float32
    b = pl.program_id(0)
    pa = pres_ref[b]            # present action
    pt = ptime_ref[b]           # present time
    tt = ttime_ref[0]           # budget of the first active row (mask c2)
    a0 = arr0_ref[b]            # per-row tour budget (adjacency c2)
    act = active_ref[b]         # row still active?

    rows = rowpack_ref[0]                        # (8, N) sublane-packed planes
    tw_o = rows[0:1, :]
    tw_c = rows[1:2, :]
    dur = rows[2:3, :]
    arrb = rows[3:4, :]
    dlast = rows[4:5, :]                         # dist[:, -1] in row layout

    # one-hot selectors for the present action (row + column layout)
    lane = jax.lax.broadcasted_iota(jnp.int32, (1, n), 1)
    onehot_row = (lane == pa).astype(f32)                       # (1, N)
    subl = jax.lax.broadcasted_iota(jnp.int32, (n, 1), 0)
    onehot_col = (subl == pa).astype(f32)                       # (N, 1)

    dist = dist_ref[...]                                        # (N, N)
    dpa_row = jnp.dot(onehot_row, dist, preferred_element_type=f32)   # dist[pa,:]
    dpa_col = jax.lax.dot_general(dist, onehot_col,
                                  (((0,), (0,)), ((), ())),
                                  preferred_element_type=f32)   # dist[pa,:] as (N,1)

    # ---- feasibility mask (row layout over destination node j) ----
    arrive = dpa_row + pt
    wait = jnp.maximum(0.0, tw_o - arrive)
    reach = arrive + wait
    c1 = (reach <= tw_c).astype(f32)
    c2 = ((reach + dur + dlast) <= tt).astype(f32)
    m_old = mask_ref[0]                                         # (1, N)
    if first_step:
        m = m_old
    else:
        m = jnp.where(lane == pa, 0.0, m_old)
    new_mask = m * c1 * c2
    # rows outside the active set keep their old mask (reference batch_idx)
    mask_out_ref[0] = jnp.where(act > 0, new_mask, m_old)

    # ---- dynamic features (TODO(synk): DynamicFeatures not in spec; synthetic) ----
    dyn = jnp.concatenate(
        [arrive, wait, tw_c - reach, arrb - (reach + dur)], axis=0)   # (4, N)

    # ---- lookahead adjacency, kept entirely in VMEM / registers ----
    bcol = bcol_ref[0]                                          # (N, F)
    tw_o_col = bcol[:, OPENING_TIME_WINDOW_IDX:OPENING_TIME_WINDOW_IDX + 1]
    dur_col = bcol[:, VIS_DURATION_TIME_IDX:VIS_DURATION_TIME_IDX + 1]
    arrive_c = dpa_col + pt
    wait_c = jnp.maximum(0.0, tw_o_col - arrive_c)
    fpt_col = arrive_c + wait_c + dur_col                       # (N, 1)
    arrive2 = dist + fpt_col                                    # dist[i,j] + fpt[i]
    wait2 = jnp.maximum(0.0, tw_o_col - arrive2)
    reach2 = arrive2 + wait2
    c1m = (reach2 <= tw_c).astype(f32)                          # tw_close[j]
    c2m = ((reach2 + dur + dlast) <= a0).astype(f32)            # budget[b]
    ii = jax.lax.broadcasted_iota(jnp.int32, (n, n), 0)
    jj = jax.lax.broadcasted_iota(jnp.int32, (n, n), 1)
    adj = jnp.where(ii == jj, 1.0, new_mask * c1m * c2m)        # diagonal := 1

    # ---- GNN encoder: relu(pre1 + dyn@wd1 + A_norm @ (pre2 + dyn@wd2)) ----
    deg = jnp.sum(adj, axis=1, keepdims=True)
    a_norm = adj * pl.reciprocal(jnp.maximum(deg, 1.0), approx=True)
    dyn1 = jax.lax.dot_general(dyn, wd1_ref[...], (((0,), (0,)), ((), ())),
                               preferred_element_type=f32)      # (N, E)
    dyn2 = jax.lax.dot_general(dyn, wd2_ref[...], (((0,), (0,)), ((), ())),
                               preferred_element_type=f32)      # (N, E)
    agg = jnp.dot(a_norm, pre2_ref[0] + dyn2, preferred_element_type=f32)
    enc = jnp.maximum(pre1_ref[0] + dyn1 + agg, 0.0)            # (N, E)
    enc_out_ref[0] = enc

    # ---- LSTM cell (single fused 4H-wide matmuls, 4H = 128 lanes) ----
    d_in = din_ref[0]                                           # (1, E)
    hc = hc_ref[0]                                              # (1, 2H)
    h_prev = hc[:, 0:hdim]
    c_prev = hc[:, hdim:2 * hdim]
    gates = (jnp.dot(d_in, wx_ref[...], preferred_element_type=f32)
             + jnp.dot(h_prev, wh_ref[...], preferred_element_type=f32)
             + blstm_ref[...])                                  # (1, 4H)
    i_g = jax.nn.sigmoid(gates[:, 0:hdim])
    f_g = jax.nn.sigmoid(gates[:, hdim:2 * hdim])
    g_g = jnp.tanh(gates[:, 2 * hdim:3 * hdim])
    o_g = jax.nn.sigmoid(gates[:, 3 * hdim:4 * hdim])
    c_new = f_g * c_prev + i_g * g_g
    h_new = o_g * jnp.tanh(c_new)
    hc_out_ref[0] = jnp.concatenate([h_new, c_new], axis=1)

    # ---- pointer attention + masked softmax (exact normalisation) ----
    u = jnp.tanh(jnp.dot(enc, wref_ref[...], preferred_element_type=f32)
                 + jnp.dot(h_new, wq_ref[...], preferred_element_type=f32))
    s = jax.lax.dot_general(v_ref[...], u, (((1,), (1,)), ((), ())),
                            preferred_element_type=f32)         # (1, N)
    s = jnp.where(new_mask > 0.0, s, -1e9)
    s = s - jnp.max(s, axis=1, keepdims=True)
    p = jnp.exp(s)
    pol_ref[0] = p / jnp.sum(p, axis=1, keepdims=True)


def _step_call(pres, ptime, ttime, arr0, active, rowpack, bcol, mask3, dist,
               pre1, pre2, d_in, hc, wd1, wd2, w_x, w_h, b_lstm,
               w_ref, w_q, v, *, first_step):
    b, _, n = mask3.shape
    e = pre1.shape[2]
    hdim = hc.shape[2] // 2
    f = bcol.shape[2]
    kernel = functools.partial(_step_kernel, first_step=first_step, n=n, hdim=hdim)
    per_b3 = lambda i, p: (i, 0, 0)
    fixed2 = lambda i, p: (0, 0)
    smem = pl.BlockSpec(memory_space=pltpu.MemorySpace.SMEM)

    mask_out, enc_out, hc_out, policy = pl.pallas_call(
        kernel,
        out_shape=(jax.ShapeDtypeStruct((b, 1, n), jnp.float32),
                   jax.ShapeDtypeStruct((b, n, e), jnp.float32),
                   jax.ShapeDtypeStruct((b, 1, 2 * hdim), jnp.float32),
                   jax.ShapeDtypeStruct((b, 1, n), jnp.float32)),
        grid_spec=pltpu.PrefetchScalarGridSpec(
            num_scalar_prefetch=1,
            grid=(b,),
            in_specs=[
                smem,                                   # present time (B,)
                smem,                                   # ttime (1,)
                smem,                                   # per-row budget (B,)
                smem,                                   # active flags (B,)
                pl.BlockSpec((1, 8, n), per_b3),        # sublane-packed row planes
                pl.BlockSpec((1, n, f), per_b3),        # binputs (column layout)
                pl.BlockSpec((1, 1, n), per_b3),        # mask
                pl.BlockSpec((n, n), fixed2),           # dist
                pl.BlockSpec((1, n, e), per_b3),        # pre1 (static enc term)
                pl.BlockSpec((1, n, e), per_b3),        # pre2 (static agg term)
                pl.BlockSpec((1, 1, e), per_b3),        # decoder input row
                pl.BlockSpec((1, 1, 2 * hdim), per_b3),  # (h, c)
                pl.BlockSpec((4, e), fixed2),           # wd1
                pl.BlockSpec((4, e), fixed2),           # wd2
                pl.BlockSpec((e, 4 * hdim), fixed2),    # w_x
                pl.BlockSpec((hdim, 4 * hdim), fixed2),  # w_h
                pl.BlockSpec((1, 4 * hdim), fixed2),    # lstm bias
                pl.BlockSpec((e, e), fixed2),           # w_ref
                pl.BlockSpec((hdim, e), fixed2),        # w_q
                pl.BlockSpec((1, e), fixed2),           # v
            ],
            out_specs=[
                pl.BlockSpec((1, 1, n), per_b3),
                pl.BlockSpec((1, n, e), per_b3),
                pl.BlockSpec((1, 1, 2 * hdim), per_b3),
                pl.BlockSpec((1, 1, n), per_b3),
            ],
        ),
        compiler_params=pltpu.CompilerParams(dimension_semantics=("parallel",)),
    )(pres.astype(jnp.int32), ptime, ttime, arr0, active,
      rowpack, bcol, mask3, dist, pre1, pre2, d_in, hc,
      wd1, wd2, w_x, w_h, b_lstm, w_ref, w_q, v)
    return (mask_out.reshape(b, n), enc_out,
            hc_out.reshape(b, 2 * hdim), policy.reshape(b, n))


# ----------------------------------------------------------------------------
# Small glue (plain JAX, fused by XLA): action selection + one_step_update.
# ----------------------------------------------------------------------------
def _select_actions(policy, infer_type, key):
    bsz = policy.shape[0]
    if infer_type == "stochastic":
        logits = jnp.log(policy + 1e-20)
        act = jax.random.categorical(key, logits, axis=1)
        logp = jnp.log(policy[jnp.arange(bsz), act] + 1e-20)
        ent = -jnp.sum(policy * jnp.log(policy + 1e-20), axis=1)
    else:  # greedy
        prob = jnp.max(policy, axis=1)
        act = jnp.argmax(policy, axis=1)
        logp = jnp.log(prob)
        ent = jnp.zeros((bsz,), jnp.float32)
    return act.astype(jnp.int32), logp, ent


def _one_step_update(binputs, dist, pres, fut, ptime, active):
    bsz = pres.shape[0]
    rows = jnp.arange(bsz)
    arrive = dist[pres, fut][:, None] + ptime
    tw_o = binputs[rows, fut, OPENING_TIME_WINDOW_IDX][:, None]
    dur = binputs[rows, fut, VIS_DURATION_TIME_IDX][:, None]
    wait = jnp.maximum(0.0, tw_o - arrive)
    new_time = arrive + wait + dur
    pres_b = jnp.where(active, fut, 0).astype(jnp.int32)
    time_b = jnp.where(active[:, None], new_time, 0.0)
    return pres_b, time_b, active


# ----------------------------------------------------------------------------
# RunEpisode.forward -- everything on device; one host sync at the very end.
# The reference shrinks the batch with a data-dependent `batch_idx`; here the
# full batch is kept and sub-batching is emulated with an `active` row mask
# (inactive rows get zeros, exactly like the zero-filled buffers in PyTorch).
# ----------------------------------------------------------------------------
@functools.partial(jax.jit, static_argnames=("infer_type", "max_steps"))
def _run_episode_jit(params, binputs, bdata_scaled, start_time, dist_mat, key,
                     *, infer_type, max_steps):
    f32 = jnp.float32
    bsz, n, _ = binputs.shape
    eh = params["w_sta"].shape[1]
    e = 2 * eh
    hdim = params["h0"].shape[1]

    binputs = binputs.astype(f32)
    dist_mat = dist_mat.astype(f32)

    # ---- loop-invariant planes / fused weights (computed once) ----
    tw_o = binputs[:, :, OPENING_TIME_WINDOW_IDX]
    tw_c = binputs[:, :, CLOSING_TIME_WINDOW_IDX]
    dur = binputs[:, :, VIS_DURATION_TIME_IDX]
    arr = binputs[:, :, ARRIVAL_TIME_IDX]
    dlast = jnp.broadcast_to(dist_mat[:, -1][None, :], (bsz, n))
    zero = jnp.zeros_like(tw_o)
    rowpack = jnp.stack([tw_o, tw_c, dur, arr, dlast, zero, zero, zero], axis=1)
    arr0_all = binputs[:, 0, ARRIVAL_TIME_IDX]                   # (B,)

    emb1 = linear(bdata_scaled.reshape(bsz * n, -1), params["w_sta"],
                  params["b_sta"]).reshape(bsz, n, eh)           # loop-invariant
    w1, w2 = params["w_enc1"], params["w_enc2"]
    w1s, w1d = w1[:eh], w1[eh:]
    w2s, w2d = w2[:eh], w2[eh:]
    b_dyn = params["b_dyn"].reshape(1, eh)
    pre1 = jnp.einsum("bne,ef->bnf", emb1, w1s) + (b_dyn @ w1d) + params["b_enc"]
    pre2 = jnp.einsum("bne,ef->bnf", emb1, w2s) + (b_dyn @ w2d)
    wd1 = params["w_dyn"] @ w1d                                  # (4, E)
    wd2 = params["w_dyn"] @ w2d                                  # (4, E)
    w_x, w_h = params["w_x"], params["w_h"]
    b_lstm = (params["b_x"] + params["b_h"]).reshape(1, 4 * hdim)

    def step(pres, ptime, mask, active, prev_enc, hc, first_step):
        ttime = arr0_all[jnp.argmax(active)].reshape(1)
        d_in = prev_enc[jnp.arange(bsz), pres].reshape(bsz, 1, e)
        return _step_call(pres, ptime.reshape(bsz), ttime, arr0_all,
                          active.astype(jnp.int32), rowpack, binputs,
                          mask.reshape(bsz, 1, n), dist_mat, pre1, pre2,
                          d_in, hc.reshape(bsz, 1, 2 * hdim),
                          wd1, wd2, w_x, w_h, b_lstm,
                          params["w_ref"], params["w_q"], params["v"],
                          first_step=first_step)

    # ---- initial state ----
    mask = jnp.ones((bsz, n), f32)
    ptime = start_time * jnp.ones((bsz, 1), f32)
    pres = jnp.zeros((bsz,), jnp.int32)
    active = jnp.ones((bsz,), dtype=bool)
    hc = jnp.concatenate([jnp.broadcast_to(params["h0"], (bsz, hdim)),
                          jnp.broadcast_to(params["c0"], (bsz, hdim))], axis=1)
    zero_enc = jnp.zeros((bsz, n, e), f32)

    # ---- pre-loop passes (mirrors the PyTorch reference) ----
    mask, enc_out, _, _ = step(pres, ptime, mask, active, zero_enc, hc, True)
    mask, enc_out, hc, policy = step(pres, ptime, mask, active, enc_out, hc, False)
    done = ~jnp.any(mask[:, -1] > 0.0)

    # ---- fixed-size output buffers (max_steps safety cap) ----
    act_buf = jnp.zeros((max_steps + 1, bsz), jnp.int32)   # row 0 = initial zeros
    logp_buf = jnp.zeros((max_steps, bsz), f32)
    ent_buf = jnp.zeros((max_steps, bsz), f32)
    stepm_buf = jnp.zeros((max_steps, bsz), dtype=bool)

    carry = (jnp.int32(0), done, key, mask, ptime, pres, active,
             hc, enc_out, policy, act_buf, logp_buf, ent_buf, stepm_buf)

    def cond_fn(c):
        return jnp.logical_and(~c[1], c[0] < max_steps)

    def body_fn(c):
        (step_i, _, key, mask, ptime, pres, active, hc, enc_out, policy,
         act_buf, logp_buf, ent_buf, stepm_buf) = c
        key, sub = jax.random.split(key)
        fut, logp, ent = _select_actions(policy, infer_type, sub)
        pres_n, ptime_n, step_mask = _one_step_update(binputs, dist_mat, pres,
                                                      fut, ptime, active)
        logp_buf = logp_buf.at[step_i].set(jnp.where(active, logp, 0.0))
        ent_buf = ent_buf.at[step_i].set(jnp.where(active, ent, 0.0))
        stepm_buf = stepm_buf.at[step_i].set(step_mask)
        act_buf = act_buf.at[step_i + 1].set(pres_n)

        mask_n, enc_out_n, hc_n, policy_n = step(pres_n, ptime_n, mask, active,
                                                 enc_out, hc, False)
        done_n = ~jnp.any(mask_n[:, -1] > 0.0)
        active_n = mask_n[:, -1] > 0.0
        return (step_i + 1, done_n, key, mask_n, ptime_n, pres_n, active_n,
                hc_n, enc_out_n, policy_n,
                act_buf, logp_buf, ent_buf, stepm_buf)

    carry = jax.lax.while_loop(cond_fn, body_fn, carry)
    nsteps = carry[0]
    act_buf, logp_buf, ent_buf, stepm_buf = carry[10], carry[11], carry[12], carry[13]
    return nsteps, act_buf, logp_buf, ent_buf, stepm_buf


def run_episode(params, binputs, bdata_scaled, start_time, dist_mat,
                infer_type="greedy", rng=None):
    bsz, n, _ = binputs.shape
    if rng is None:
        rng = jax.random.PRNGKey(0)
    max_steps = n + 2  # safety cap; the reference loop ends naturally before this
    nsteps, act_buf, logp_buf, ent_buf, stepm_buf = _run_episode_jit(
        params, binputs, bdata_scaled, start_time, dist_mat, rng,
        infer_type=infer_type, max_steps=max_steps)
    t = int(nsteps)  # single device->host sync for the whole episode
    lactions = [act_buf[i] for i in range(t + 1)]
    return (lactions, logp_buf[:t].T, ent_buf[:t].T, stepm_buf[:t].T)


# ----------------------------------------------------------------------------
# Deterministic synthetic parameters.
# ----------------------------------------------------------------------------
def init_params(key, *, feat_sta=4, feat_dyn=4, emb_half=16, hidden=32):
    ks = jax.random.split(key, 11)
    e = 2 * emb_half

    def w(k, shape, scale=0.1):
        return scale * jax.random.normal(k, shape, dtype=jnp.float32)

    return {
        "w_sta": w(ks[0], (feat_sta, emb_half)),
        "b_sta": jnp.zeros((emb_half,), jnp.float32),
        "w_dyn": w(ks[1], (feat_dyn, emb_half)),
        "b_dyn": jnp.zeros((emb_half,), jnp.float32),
        "w_enc1": w(ks[2], (e, e)),
        "w_enc2": w(ks[3], (e, e)),
        "b_enc": jnp.zeros((1, e), jnp.float32),
        "w_x": w(ks[4], (e, 4 * hidden)),
        "b_x": jnp.zeros((4 * hidden,), jnp.float32),
        "w_h": w(ks[5], (hidden, 4 * hidden)),
        "b_h": jnp.zeros((4 * hidden,), jnp.float32),
        "w_ref": w(ks[6], (e, e)),
        "w_q": w(ks[7], (hidden, e)),
        "v": w(ks[8], (1, e)),
        "h0": w(ks[9], (1, hidden)),
        "c0": w(ks[10], (1, hidden)),
    }


if __name__ == "__main__":
    B, N = 2, 8
    key = jax.random.PRNGKey(0)
    kc, ko, kw, ks = jax.random.split(key, 4)

    coords = jax.random.uniform(kc, (N, 2), dtype=jnp.float32)
    dist_mat = jnp.sqrt(
        jnp.sum((coords[:, None, :] - coords[None, :, :]) ** 2, axis=-1) + 1e-9)
    tw_open = jax.random.uniform(ko, (B, N), dtype=jnp.float32, minval=0.0, maxval=1.0)
    tw_close = tw_open + 4.0 + jax.random.uniform(kw, (B, N), dtype=jnp.float32)
    dur = 0.1 * jnp.ones((B, N), jnp.float32)
    arr_budget = 20.0 * jnp.ones((B, N), jnp.float32)
    # binputs feature order: [tw_open, tw_close, visit_duration, max_arrival]
    binputs = jnp.stack([tw_open, tw_close, dur, arr_budget], axis=-1)   # (B, N, 4)
    bdata_scaled = jax.random.normal(ks, (B, N, 4), dtype=jnp.float32)

    params = init_params(jax.random.PRNGKey(42))

    lactions, llog_probs, lentropy, lstep_mask = run_episode(
        params, binputs, bdata_scaled, 0.0, dist_mat, infer_type="greedy")

    jax.block_until_ready((llog_probs, lentropy, lstep_mask, lactions[-1]))
    assert llog_probs.shape[0] == B
    assert llog_probs.shape == lentropy.shape == lstep_mask.shape
    assert len(lactions) == llog_probs.shape[1] + 1
    print("KERNEL_OK")
</pallas_src>

<mosaic_0001>
module attributes {stable_mosaic.version = 11 : i64} {
  func.func @_linear_kernel(%arg0: memref<16x4xf32, #tpu.memory_space<vmem>>, %arg1: memref<4x16xf32, #tpu.memory_space<vmem>>, %arg2: memref<1x16xf32, #tpu.memory_space<vmem>>, %arg3: memref<16x16xf32, #tpu.memory_space<vmem>>) attributes {dimension_semantics = [], scalar_prefetch = 0 : i64, scratch_operands = 0 : i64, tpu.core_type = #tpu.core_type<tc>} {
    %c0 = arith.constant 0 : index
    %c0_0 = arith.constant 0 : index
    %0 = vector.load %arg0[%c0, %c0_0] : memref<16x4xf32, #tpu.memory_space<vmem>>, vector<16x4xf32>
    %c0_1 = arith.constant 0 : index
    %c0_2 = arith.constant 0 : index
    %1 = vector.load %arg1[%c0_1, %c0_2] : memref<4x16xf32, #tpu.memory_space<vmem>>, vector<4x16xf32>
    %cst = arith.constant dense<0.000000e+00> : vector<16x16xf32>
    %2 = tpu.matmul %0, %1, %cst {dimension_numbers = #tpu.dot_dimension_numbers<[1], [0], [0], [1], [0, 0, 1, 1], [], []>} : vector<16x4xf32>, vector<4x16xf32>, vector<16x16xf32> -> vector<16x16xf32>
    %c0_3 = arith.constant 0 : index
    %c0_4 = arith.constant 0 : index
    %3 = vector.load %arg2[%c0_3, %c0_4] : memref<1x16xf32, #tpu.memory_space<vmem>>, vector<1x16xf32>
    %4 = vector.broadcast %3 : vector<1x16xf32> to vector<16x16xf32>
    %5 = arith.addf %2, %4 : vector<16x16xf32>
    %c0_5 = arith.constant 0 : index
    %c0_6 = arith.constant 0 : index
    %6 = vector.load %arg3[%c0_5, %c0_6] : memref<16x16xf32, #tpu.memory_space<vmem>>, vector<16x16xf32>
    tpu.vector_store %arg3[%c0_5, %c0_6], %5 {strides = array<i32>} : memref<16x16xf32, #tpu.memory_space<vmem>>, vector<16x16xf32>,
    return
  }
}

module attributes {stable_mosaic.version = 11 : i64} {
  func.func @_step_kernel(%arg0: i32, %arg1: memref<2xi32, #tpu.memory_space<smem>>, %arg2: memref<2xf32, #tpu.memory_space<smem>>, %arg3: memref<1xf32, #tpu.memory_space<smem>>, %arg4: memref<2xf32, #tpu.memory_space<smem>>, %arg5: memref<2xi32, #tpu.memory_space<smem>>, %arg6: memref<1x8x8xf32, #tpu.memory_space<vmem>>, %arg7: memref<1x8x4xf32, #tpu.memory_space<vmem>>, %arg8: memref<1x1x8xf32, #tpu.memory_space<vmem>>, %arg9: memref<8x8xf32, #tpu.memory_space<vmem>>, %arg10: memref<1x8x32xf32, #tpu.memory_space<vmem>>, %arg11: memref<1x8x32xf32, #tpu.memory_space<vmem>>, %arg12: memref<1x1x32xf32, #tpu.memory_space<vmem>>, %arg13: memref<1x1x64xf32, #tpu.memory_space<vmem>>, %arg14: memref<4x32xf32, #tpu.memory_space<vmem>>, %arg15: memref<4x32xf32, #tpu.memory_space<vmem>>, %arg16: memref<32x128xf32, #tpu.memory_space<vmem>>, %arg17: memref<32x128xf32, #tpu.memory_space<vmem>>, %arg18: memref<1x128xf32, #tpu.memory_space<vmem>>, %arg19: memref<32x32xf32, #tpu.memory_space<vmem>>, %arg20: memref<32x32xf32, #tpu.memory_space<vmem>>, %arg21: memref<1x32xf32, #tpu.memory_space<vmem>>, %arg22: memref<1x1x8xf32, #tpu.memory_space<vmem>>, %arg23: memref<1x8x32xf32, #tpu.memory_space<vmem>>, %arg24: memref<1x1x64xf32, #tpu.memory_space<vmem>>, %arg25: memref<1x1x8xf32, #tpu.memory_space<vmem>>) attributes {dimension_semantics = [#tpu.dimension_semantics<parallel>], iteration_bounds = array<i64: 2>, scalar_prefetch = 1 : i64, scratch_operands = 0 : i64, tpu.core_type = #tpu.core_type<tc>, window_params = [{transform_indices = @transform_0, window_bounds = array<i64: 2>}, {transform_indices = @transform_1, window_bounds = array<i64: 1>}, {transform_indices = @transform_2, window_bounds = array<i64: 2>}, {transform_indices = @transform_3, window_bounds = array<i64: 2>}, {transform_indices = @transform_4, window_bounds = array<i64: 1, 8, 8>}, {transform_indices = @transform_5, window_bounds = array<i64: 1, 8, 4>}, {transform_indices = @transform_6, window_bounds = array<i64: 1, 1, 8>}, {pipeline_mode = #tpu.pipeline_mode<synchronous>, transform_indices = @transform_7, window_bounds = array<i64: 8, 8>}, {transform_indices = @transform_8, window_bounds = array<i64: 1, 8, 32>}, {transform_indices = @transform_9, window_bounds = array<i64: 1, 8, 32>}, {transform_indices = @transform_10, window_bounds = array<i64: 1, 1, 32>}, {transform_indices = @transform_11, window_bounds = array<i64: 1, 1, 64>}, {pipeline_mode = #tpu.pipeline_mode<synchronous>, transform_indices = @transform_12, window_bounds = array<i64: 4, 32>}, {pipeline_mode = #tpu.pipeline_mode<synchronous>, transform_indices = @transform_13, window_bounds = array<i64: 4, 32>}, {pipeline_mode = #tpu.pipeline_mode<synchronous>, transform_indices = @transform_14, window_bounds = array<i64: 32, 128>}, {pipeline_mode = #tpu.pipeline_mode<synchronous>, transform_indices = @transform_15, window_bounds = array<i64: 32, 128>}, {pipeline_mode = #tpu.pipeline_mode<synchronous>, transform_indices = @transform_16, window_bounds = array<i64: 1, 128>}, {pipeline_mode = #tpu.pipeline_mode<synchronous>, transform_indices = @transform_17, window_bounds = array<i64: 32, 32>}, {pipeline_mode = #tpu.pipeline_mode<synchronous>, transform_indices = @transform_18, window_bounds = array<i64: 32, 32>}, {pipeline_mode = #tpu.pipeline_mode<synchronous>, transform_indices = @transform_19, window_bounds = array<i64: 1, 32>}, {transform_indices = @transform_20, window_bounds = array<i64: 1, 1, 8>}, {transform_indices = @transform_21, window_bounds = array<i64: 1, 8, 32>}, {transform_indices = @transform_22, window_bounds = array<i64: 1, 1, 64>}, {transform_indices = @transform_23, window_bounds = array<i64: 1, 1, 8>}]} {
    %0 = arith.index_cast %arg0 : i32 to index
    %1 = memref.load %arg1[%0] : memref<2xi32, #tpu.memory_space<smem>>
    %2 = arith.index_cast %arg0 : i32 to index
    %3 = memref.load %arg2[%2] : memref<2xf32, #tpu.memory_space<smem>>
    %c0 = arith.constant 0 : index
    %4 = memref.load %arg3[%c0] : memref<1xf32, #tpu.memory_space<smem>>
    %5 = arith.index_cast %arg0 : i32 to index
    %6 = memref.load %arg4[%5] : memref<2xf32, #tpu.memory_space<smem>>
    %7 = arith.index_cast %arg0 : i32 to index
    %8 = memref.load %arg5[%7] : memref<2xi32, #tpu.memory_space<smem>>
    %c0_0 = arith.constant 0 : index
    %c0_1 = arith.constant 0 : index
    %c0_2 = arith.constant 0 : index
    %9 = vector.load %arg6[%c0_0, %c0_1, %c0_2] : memref<1x8x8xf32, #tpu.memory_space<vmem>>, vector<1x8x8xf32>
    %10 = vector.shape_cast %9 : vector<1x8x8xf32> to vector<8x8xf32>
    %11 = vector.extract_strided_slice %10 {offsets = [0, 0], sizes = [1, 8], strides = [1, 1]} : vector<8x8xf32> to vector<1x8xf32>
    %12 = vector.extract_strided_slice %10 {offsets = [1, 0], sizes = [1, 8], strides = [1, 1]} : vector<8x8xf32> to vector<1x8xf32>
    %13 = vector.extract_strided_slice %10 {offsets = [2, 0], sizes = [1, 8], strides = [1, 1]} : vector<8x8xf32> to vector<1x8xf32>
    %14 = vector.extract_strided_slice %10 {offsets = [3, 0], sizes = [1, 8], strides = [1, 1]} : vector<8x8xf32> to vector<1x8xf32>
    %15 = vector.extract_strided_slice %10 {offsets = [4, 0], sizes = [1, 8], strides = [1, 1]} : vector<8x8xf32> to vector<1x8xf32>
    %16 = tpu.iota {dimensions = array<i32: 1>} : vector<1x8xi32>
    %17 = vector.broadcast %1 : i32 to vector<1x8xi32>
    %18 = arith.cmpi eq, %16, %17 : vector<1x8xi32>
    %19 = arith.extui %18 : vector<1x8xi1> to vector<1x8xi32>
    %20 = arith.sitofp %19 : vector<1x8xi32> to vector<1x8xf32>
    %21 = tpu.iota {dimensions = array<i32: 0>} : vector<8x1xi32>
    %22 = vector.broadcast %1 : i32 to vector<8x1xi32>
    %23 = arith.cmpi eq, %21, %22 : vector<8x1xi32>
    %24 = arith.extui %23 : vector<8x1xi1> to vector<8x1xi32>
    %25 = arith.sitofp %24 : vector<8x1xi32> to vector<8x1xf32>
    %c0_3 = arith.constant 0 : index
    %c0_4 = arith.constant 0 : index
    %26 = vector.load %arg9[%c0_3, %c0_4] : memref<8x8xf32, #tpu.memory_space<vmem>>, vector<8x8xf32>
    %cst = arith.constant dense<0.000000e+00> : vector<1x8xf32>
    %27 = tpu.matmul %20, %26, %cst {dimension_numbers = #tpu.dot_dimension_numbers<[1], [0], [0], [1], [0, 0, 1, 1], [], []>} : vector<1x8xf32>, vector<8x8xf32>, vector<1x8xf32> -> vector<1x8xf32>
    %cst_5 = arith.constant dense<0.000000e+00> : vector<8x1xf32>
    %28 = tpu.matmul %26, %25, %cst_5 {dimension_numbers = #tpu.dot_dimension_numbers<[0], [0], [1], [1], [0, 1, 1, 1], [], []>} : vector<8x8xf32>, vector<8x1xf32>, vector<8x1xf32> -> vector<8x1xf32>
    %29 = vector.broadcast %3 : f32 to vector<1x8xf32>
    %30 = arith.addf %27, %29 : vector<1x8xf32>
    %31 = arith.subf %11, %30 : vector<1x8xf32>
    %cst_6 = arith.constant 0.000000e+00 : f32
    %32 = vector.broadcast %cst_6 : f32 to vector<1x8xf32>
    %33 = arith.maximumf %32, %31 : vector<1x8xf32>
    %34 = arith.addf %30, %33 : vector<1x8xf32>
    %35 = arith.cmpf ole, %34, %12 : vector<1x8xf32>
    %36 = arith.extui %35 : vector<1x8xi1> to vector<1x8xi32>
    %37 = arith.sitofp %36 : vector<1x8xi32> to vector<1x8xf32>
    %38 = arith.addf %34, %13 : vector<1x8xf32>
    %39 = arith.addf %38, %15 : vector<1x8xf32>
    %40 = vector.broadcast %4 : f32 to vector<1x8xf32>
    %41 = arith.cmpf ole, %39, %40 : vector<1x8xf32>
    %42 = arith.extui %41 : vector<1x8xi1> to vector<1x8xi32>
    %43 = arith.sitofp %42 : vector<1x8xi32> to vector<1x8xf32>
    %c0_7 = arith.constant 0 : index
    %c0_8 = arith.constant 0 : index
    %c0_9 = arith.constant 0 : index
    %44 = vector.load %arg8[%c0_7, %c0_8, %c0_9] : memref<1x1x8xf32, #tpu.memory_space<vmem>>, vector<1x1x8xf32>
    %45 = vector.shape_cast %44 : vector<1x1x8xf32> to vector<1x8xf32>
    %46 = arith.mulf %45, %37 : vector<1x8xf32>
    %47 = arith.mulf %46, %43 : vector<1x8xf32>
    %c0_i32 = arith.constant 0 : i32
    %48 = arith.cmpi sgt, %8, %c0_i32 : i32
    %49 = arith.select %48, %47, %45 : vector<1x8xf32>
    %c0_10 = arith.constant 0 : index
    %c0_11 = arith.constant 0 : index
    %c0_12 = arith.constant 0 : index
    %50 = vector.load %arg22[%c0_10, %c0_11, %c0_12] : memref<1x1x8xf32, #tpu.memory_space<vmem>>, vector<1x1x8xf32>
    %51 = vector.shape_cast %50 : vector<1x1x8xf32> to vector<1x8xf32>
    %52 = vector.shape_cast %49 : vector<1x8xf32> to vector<1x1x8xf32>
    tpu.vector_store %arg22[%c0_10, %c0_11, %c0_12], %52 {strides = array<i32>} : memref<1x1x8xf32, #tpu.memory_space<vmem>>, vector<1x1x8xf32>,
    %53 = arith.subf %12, %34 : vector<1x8xf32>
    %54 = arith.addf %34, %13 : vector<1x8xf32>
    %55 = arith.subf %14, %54 : vector<1x8xf32>
    %56 = tpu.concatenate %30, %33, %53, %55 in 0 : vector<1x8xf32>, vector<1x8xf32>, vector<1x8xf32>, vector<1x8xf32> -> vector<4x8xf32>
    %c0_13 = arith.constant 0 : index
    %c0_14 = arith.constant 0 : index
    %c0_15 = arith.constant 0 : index
    %57 = vector.load %arg7[%c0_13, %c0_14, %c0_15] : memref<1x8x4xf32, #tpu.memory_space<vmem>>, vector<1x8x4xf32>
    %58 = vector.shape_cast %57 : vector<1x8x4xf32> to vector<8x4xf32>
    %59 = vector.extract_strided_slice %58 {offsets = [0, 0], sizes = [8, 1], strides = [1, 1]} : vector<8x4xf32> to vector<8x1xf32>
    %60 = vector.extract_strided_slice %58 {offsets = [0, 2], sizes = [8, 1], strides = [1, 1]} : vector<8x4xf32> to vector<8x1xf32>
    %61 = vector.broadcast %3 : f32 to vector<8x1xf32>
    %62 = arith.addf %28, %61 : vector<8x1xf32>
    %63 = arith.subf %59, %62 : vector<8x1xf32>
    %cst_16 = arith.constant 0.000000e+00 : f32
    %64 = vector.broadcast %cst_16 : f32 to vector<8x1xf32>
    %65 = arith.maximumf %64, %63 : vector<8x1xf32>
    %66 = arith.addf %62, %65 : vector<8x1xf32>
    %67 = arith.addf %66, %60 : vector<8x1xf32>
    %68 = vector.broadcast %67 : vector<8x1xf32> to vector<8x8xf32>
    %69 = arith.addf %26, %68 : vector<8x8xf32>
    %70 = vector.broadcast %59 : vector<8x1xf32> to vector<8x8xf32>
    %71 = arith.subf %70, %69 : vector<8x8xf32>
    %cst_17 = arith.constant 0.000000e+00 : f32
    %72 = vector.broadcast %cst_17 : f32 to vector<8x8xf32>
    %73 = arith.maximumf %72, %71 : vector<8x8xf32>
    %74 = arith.addf %69, %73 : vector<8x8xf32>
    %75 = vector.broadcast %12 : vector<1x8xf32> to vector<8x8xf32>
    %76 = arith.cmpf ole, %74, %75 : vector<8x8xf32>
    %77 = arith.extui %76 : vector<8x8xi1> to vector<8x8xi32>
    %78 = arith.sitofp %77 : vector<8x8xi32> to vector<8x8xf32>
    %79 = vector.broadcast %13 : vector<1x8xf32> to vector<8x8xf32>
    %80 = arith.addf %74, %79 : vector<8x8xf32>
    %81 = vector.broadcast %15 : vector<1x8xf32> to vector<8x8xf32>
    %82 = arith.addf %80, %81 : vector<8x8xf32>
    %83 = vector.broadcast %6 : f32 to vector<8x8xf32>
    %84 = arith.cmpf ole, %82, %83 : vector<8x8xf32>
    %85 = arith.extui %84 : vector<8x8xi1> to vector<8x8xi32>
    %86 = arith.sitofp %85 : vector<8x8xi32> to vector<8x8xf32>
    %87 = tpu.iota {dimensions = array<i32: 0>} : vector<8x8xi32>
    %88 = tpu.iota {dimensions = array<i32: 1>} : vector<8x8xi32>
    %89 = arith.cmpi eq, %87, %88 : vector<8x8xi32>
    %90 = vector.broadcast %47 : vector<1x8xf32> to vector<8x8xf32>
    %91 = arith.mulf %90, %78 : vector<8x8xf32>
    %92 = arith.mulf %91, %86 : vector<8x8xf32>
    %cst_18 = arith.constant 1.000000e+00 : f32
    %93 = vector.broadcast %cst_18 : f32 to vector<8x8xf32>
    %94 = arith.select %89, %93, %92 : vector<8x8xi1>, vector<8x8xf32>
    %cst_19 = arith.constant dense<0.000000e+00> : vector<8xf32>
    %95 = vector.multi_reduction <add>, %94, %cst_19 [1] : vector<8x8xf32> to vector<8xf32>
    %96 = vector.shape_cast %95 : vector<8xf32> to vector<8x1xf32>
    %cst_20 = arith.constant 1.000000e+00 : f32
    %97 = vector.broadcast %cst_20 : f32 to vector<8x1xf32>
    %98 = arith.maximumf %96, %97 : vector<8x1xf32>
    %99 = tpu.reciprocal %98 {approx = true} : vector<8x1xf32> -> vector<8x1xf32>
    %100 = vector.broadcast %99 : vector<8x1xf32> to vector<8x8xf32>
    %101 = arith.mulf %94, %100 : vector<8x8xf32>
    %c0_21 = arith.constant 0 : index
    %c0_22 = arith.constant 0 : index
    %102 = vector.load %arg14[%c0_21, %c0_22] : memref<4x32xf32, #tpu.memory_space<vmem>>, vector<4x32xf32>
    %cst_23 = arith.constant dense<0.000000e+00> : vector<8x32xf32>
    %103 = tpu.matmul %56, %102, %cst_23 {dimension_numbers = #tpu.dot_dimension_numbers<[0], [0], [1], [1], [0, 1, 1, 1], [], []>} : vector<4x8xf32>, vector<4x32xf32>, vector<8x32xf32> -> vector<8x32xf32>
    %c0_24 = arith.constant 0 : index
    %c0_25 = arith.constant 0 : index
    %104 = vector.load %arg15[%c0_24, %c0_25] : memref<4x32xf32, #tpu.memory_space<vmem>>, vector<4x32xf32>
    %cst_26 = arith.constant dense<0.000000e+00> : vector<8x32xf32>
    %105 = tpu.matmul %56, %104, %cst_26 {dimension_numbers = #tpu.dot_dimension_numbers<[0], [0], [1], [1], [0, 1, 1, 1], [], []>} : vector<4x8xf32>, vector<4x32xf32>, vector<8x32xf32> -> vector<8x32xf32>
    %c0_27 = arith.constant 0 : index
    %c0_28 = arith.constant 0 : index
    %c0_29 = arith.constant 0 : index
    %106 = vector.load %arg11[%c0_27, %c0_28, %c0_29] : memref<1x8x32xf32, #tpu.memory_space<vmem>>, vector<1x8x32xf32>
    %107 = vector.shape_cast %106 : vector<1x8x32xf32> to vector<8x32xf32>
    %108 = arith.addf %107, %105 : vector<8x32xf32>
    %cst_30 = arith.constant dense<0.000000e+00> : vector<8x32xf32>
    %109 = tpu.matmul %101, %108, %cst_30 {dimension_numbers = #tpu.dot_dimension_numbers<[1], [0], [0], [1], [0, 0, 1, 1], [], []>} : vector<8x8xf32>, vector<8x32xf32>, vector<8x32xf32> -> vector<8x32xf32>
    %c0_31 = arith.constant 0 : index
    %c0_32 = arith.constant 0 : index
    %c0_33 = arith.constant 0 : index
    %110 = vector.load %arg10[%c0_31, %c0_32, %c0_33] : memref<1x8x32xf32, #tpu.memory_space<vmem>>, vector<1x8x32xf32>
    %111 = vector.shape_cast %110 : vector<1x8x32xf32> to vector<8x32xf32>
    %112 = arith.addf %111, %103 : vector<8x32xf32>
    %113 = arith.addf %112, %109 : vector<8x32xf32>
    %cst_34 = arith.constant 0.000000e+00 : f32
    %114 = vector.broadcast %cst_34 : f32 to vector<8x32xf32>
    %115 = arith.maximumf %113, %114 : vector<8x32xf32>
    %c0_35 = arith.constant 0 : index
    %c0_36 = arith.constant 0 : index
    %c0_37 = arith.constant 0 : index
    %116 = vector.load %arg23[%c0_35, %c0_36, %c0_37] : memref<1x8x32xf32, #tpu.memory_space<vmem>>, vector<1x8x32xf32>
    %117 = vector.shape_cast %116 : vector<1x8x32xf32> to vector<8x32xf32>
    %118 = vector.shape_cast %115 : vector<8x32xf32> to vector<1x8x32xf32>
    tpu.vector_store %arg23[%c0_35, %c0_36, %c0_37], %118 {strides = array<i32>} : memref<1x8x32xf32, #tpu.memory_space<vmem>>, vector<1x8x32xf32>,
    %c0_38 = arith.constant 0 : index
    %c0_39 = arith.constant 0 : index
    %c0_40 = arith.constant 0 : index
    %119 = vector.load %arg12[%c0_38, %c0_39, %c0_40] : memref<1x1x32xf32, #tpu.memory_space<vmem>>, vector<1x1x32xf32>
    %120 = vector.shape_cast %119 : vector<1x1x32xf32> to vector<1x32xf32>
    %c0_41 = arith.constant 0 : index
    %c0_42 = arith.constant 0 : index
    %c0_43 = arith.constant 0 : index
    %121 = vector.load %arg13[%c0_41, %c0_42, %c0_43] : memref<1x1x64xf32, #tpu.memory_space<vmem>>, vector<1x1x64xf32>
    %122 = vector.shape_cast %121 : vector<1x1x64xf32> to vector<1x64xf32>
    %123 = vector.extract_strided_slice %122 {offsets = [0, 0], sizes = [1, 32], strides = [1, 1]} : vector<1x64xf32> to vector<1x32xf32>
    %124 = vector.extract_strided_slice %122 {offsets = [0, 32], sizes = [1, 32], strides = [1, 1]} : vector<1x64xf32> to vector<1x32xf32>
    %c0_44 = arith.constant 0 : index
    %c0_45 = arith.constant 0 : index
    %125 = vector.load %arg16[%c0_44, %c0_45] : memref<32x128xf32, #tpu.memory_space<vmem>>, vector<32x128xf32>
    %cst_46 = arith.constant dense<0.000000e+00> : vector<1x128xf32>
    %126 = tpu.matmul %120, %125, %cst_46 {dimension_numbers = #tpu.dot_dimension_numbers<[1], [0], [0], [1], [0, 0, 1, 1], [], []>} : vector<1x32xf32>, vector<32x128xf32>, vector<1x128xf32> -> vector<1x128xf32>
    %c0_47 = arith.constant 0 : index
    %c0_48 = arith.constant 0 : index
    %127 = vector.load %arg17[%c0_47, %c0_48] : memref<32x128xf32, #tpu.memory_space<vmem>>, vector<32x128xf32>
    %cst_49 = arith.constant dense<0.000000e+00> : vector<1x128xf32>
    %128 = tpu.matmul %123, %127, %cst_49 {dimension_numbers = #tpu.dot_dimension_numbers<[1], [0], [0], [1], [0, 0, 1, 1], [], []>} : vector<1x32xf32>, vector<32x128xf32>, vector<1x128xf32> -> vector<1x128xf32>
    %129 = arith.addf %126, %128 : vector<1x128xf32>
    %c0_50 = arith.constant 0 : index
    %c0_51 = arith.constant 0 : index
    %130 = vector.load %arg18[%c0_50, %c0_51] : memref<1x128xf32, #tpu.memory_space<vmem>>, vector<1x128xf32>
    %131 = arith.addf %129, %130 : vector<1x128xf32>
    %132 = vector.extract_strided_slice %131 {offsets = [0, 0], sizes = [1, 32], strides = [1, 1]} : vector<1x128xf32> to vector<1x32xf32>
    %133 = arith.negf %132 : vector<1x32xf32>
    %134 = math.exp %133 : vector<1x32xf32>
    %cst_52 = arith.constant 1.000000e+00 : f32
    %135 = vector.broadcast %cst_52 : f32 to vector<1x32xf32>
    %136 = arith.addf %135, %134 : vector<1x32xf32>
    %137 = arith.divf %135, %136 : vector<1x32xf32>
    %138 = vector.extract_strided_slice %131 {offsets = [0, 32], sizes = [1, 32], strides = [1, 1]} : vector<1x128xf32> to vector<1x32xf32>
    %139 = arith.negf %138 : vector<1x32xf32>
    %140 = math.exp %139 : vector<1x32xf32>
    %cst_53 = arith.constant 1.000000e+00 : f32
    %141 = vector.broadcast %cst_53 : f32 to vector<1x32xf32>
    %142 = arith.addf %141, %140 : vector<1x32xf32>
    %143 = arith.divf %141, %142 : vector<1x32xf32>
    %144 = vector.extract_strided_slice %131 {offsets = [0, 64], sizes = [1, 32], strides = [1, 1]} : vector<1x128xf32> to vector<1x32xf32>
    %145 = math.tanh %144 : vector<1x32xf32>
    %146 = vector.extract_strided_slice %131 {offsets = [0, 96], sizes = [1, 32], strides = [1, 1]} : vector<1x128xf32> to vector<1x32xf32>
    %147 = arith.negf %146 : vector<1x32xf32>
    %148 = math.exp %147 : vector<1x32xf32>
    %cst_54 = arith.constant 1.000000e+00 : f32
    %149 = vector.broadcast %cst_54 : f32 to vector<1x32xf32>
    %150 = arith.addf %149, %148 : vector<1x32xf32>
    %151 = arith.divf %149, %150 : vector<1x32xf32>
    %152 = arith.mulf %143, %124 : vector<1x32xf32>
    %153 = arith.mulf %137, %145 : vector<1x32xf32>
    %154 = arith.addf %152, %153 : vector<1x32xf32>
    %155 = math.tanh %154 : vector<1x32xf32>
    %156 = arith.mulf %151, %155 : vector<1x32xf32>
    %157 = tpu.concatenate %156, %154 in 1 : vector<1x32xf32>, vector<1x32xf32> -> vector<1x64xf32>
    %c0_55 = arith.constant 0 : index
    %c0_56 = arith.constant 0 : index
    %c0_57 = arith.constant 0 : index
    %158 = vector.load %arg24[%c0_55, %c0_56, %c0_57] : memref<1x1x64xf32, #tpu.memory_space<vmem>>, vector<1x1x64xf32>
    %159 = vector.shape_cast %158 : vector<1x1x64xf32> to vector<1x64xf32>
    %160 = vector.shape_cast %157 : vector<1x64xf32> to vector<1x1x64xf32>
    tpu.vector_store %arg24[%c0_55, %c0_56, %c0_57], %160 {strides = array<i32>} : memref<1x1x64xf32, #tpu.memory_space<vmem>>, vector<1x1x64xf32>,
    %c0_58 = arith.constant 0 : index
    %c0_59 = arith.constant 0 : index
    %161 = vector.load %arg19[%c0_58, %c0_59] : memref<32x32xf32, #tpu.memory_space<vmem>>, vector<32x32xf32>
    %cst_60 = arith.constant dense<0.000000e+00> : vector<8x32xf32>
    %162 = tpu.matmul %115, %161, %cst_60 {dimension_numbers = #tpu.dot_dimension_numbers<[1], [0], [0], [1], [0, 0, 1, 1], [], []>} : vector<8x32xf32>, vector<32x32xf32>, vector<8x32xf32> -> vector<8x32xf32>
    %c0_61 = arith.constant 0 : index
    %c0_62 = arith.constant 0 : index
    %163 = vector.load %arg20[%c0_61, %c0_62] : memref<32x32xf32, #tpu.memory_space<vmem>>, vector<32x32xf32>
    %cst_63 = arith.constant dense<0.000000e+00> : vector<1x32xf32>
    %164 = tpu.matmul %156, %163, %cst_63 {dimension_numbers = #tpu.dot_dimension_numbers<[1], [0], [0], [1], [0, 0, 1, 1], [], []>} : vector<1x32xf32>, vector<32x32xf32>, vector<1x32xf32> -> vector<1x32xf32>
    %165 = vector.broadcast %164 : vector<1x32xf32> to vector<8x32xf32>
    %166 = arith.addf %162, %165 : vector<8x32xf32>
    %167 = math.tanh %166 : vector<8x32xf32>
    %c0_64 = arith.constant 0 : index
    %c0_65 = arith.constant 0 : index
    %168 = vector.load %arg21[%c0_64, %c0_65] : memref<1x32xf32, #tpu.memory_space<vmem>>, vector<1x32xf32>
    %cst_66 = arith.constant dense<0.000000e+00> : vector<1x8xf32>
    %169 = tpu.matmul %168, %167, %cst_66 {dimension_numbers = #tpu.dot_dimension_numbers<[1], [1], [0], [0], [0, 0, 1, 0], [], []>} : vector<1x32xf32>, vector<8x32xf32>, vector<1x8xf32> -> vector<1x8xf32>
    %cst_67 = arith.constant 0.000000e+00 : f32
    %170 = vector.broadcast %cst_67 : f32 to vector<1x8xf32>
    %171 = arith.cmpf ogt, %47, %170 : vector<1x8xf32>
    %cst_68 = arith.constant -1.000000e+09 : f32
    %172 = vector.broadcast %cst_68 : f32 to vector<1x8xf32>
    %173 = arith.select %171, %169, %172 : vector<1x8xi1>, vector<1x8xf32>
    %cst_69 = arith.constant dense<0xFF800000> : vector<1xf32>
    %174 = vector.multi_reduction <maximumf>, %173, %cst_69 [1] : vector<1x8xf32> to vector<1xf32>
    %175 = vector.shape_cast %174 : vector<1xf32> to vector<1x1xf32>
    %176 = vector.broadcast %175 : vector<1x1xf32> to vector<1x8xf32>
    %177 = arith.subf %173, %176 : vector<1x8xf32>
    %178 = math.exp %177 : vector<1x8xf32>
    %cst_70 = arith.constant dense<0.000000e+00> : vector<1xf32>
    %179 = vector.multi_reduction <add>, %178, %cst_70 [1] : vector<1x8xf32> to vector<1xf32>
    %180 = vector.shape_cast %179 : vector<1xf32> to vector<1x1xf32>
    %181 = vector.broadcast %180 : vector<1x1xf32> to vector<1x8xf32>
    %182 = arith.divf %178, %181 : vector<1x8xf32>
    %c0_71 = arith.constant 0 : index
    %c0_72 = arith.constant 0 : index
    %c0_73 = arith.constant 0 : index
    %183 = vector.load %arg25[%c0_71, %c0_72, %c0_73] : memref<1x1x8xf32, #tpu.memory_space<vmem>>, vector<1x1x8xf32>
    %184 = vector.shape_cast %183 : vector<1x1x8xf32> to vector<1x8xf32>
    %185 = vector.shape_cast %182 : vector<1x8xf32> to vector<1x1x8xf32>
    tpu.vector_store %arg25[%c0_71, %c0_72, %c0_73], %185 {strides = array<i32>} : memref<1x1x8xf32, #tpu.memory_space<vmem>>, vector<1x1x8xf32>,
    return
  }
  func.func @transform_0(%arg0: i32, %arg1: memref<2xi32, #tpu.memory_space<smem>>) -> i32 {
    %c0_i32 = arith.constant 0 : i32
    %c0_i32_0 = arith.constant 0 : i32
    return %c0_i32 : i32
  }
  func.func @transform_1(%arg0: i32, %arg1: memref<2xi32, #tpu.memory_space<smem>>) -> i32 {
    %c0_i32 = arith.constant 0 : i32
    %c0_i32_0 = arith.constant 0 : i32
    return %c0_i32 : i32
  }
  func.func @transform_2(%arg0: i32, %arg1: memref<2xi32, #tpu.memory_space<smem>>) -> i32 {
    %c0_i32 = arith.constant 0 : i32
    %c0_i32_0 = arith.constant 0 : i32
    return %c0_i32 : i32
  }
  func.func @transform_3(%arg0: i32, %arg1: memref<2xi32, #tpu.memory_space<smem>>) -> i32 {
    %c0_i32 = arith.constant 0 : i32
    %c0_i32_0 = arith.constant 0 : i32
    return %c0_i32 : i32
  }
  func.func @transform_4(%arg0: i32, %arg1: memref<2xi32, #tpu.memory_space<smem>>) -> (i32, i32, i32) {
    %c0_i32 = arith.constant 0 : i32
    %c0_i32_0 = arith.constant 0 : i32
    %c0_i32_1 = arith.constant 0 : i32
    return %arg0, %c0_i32, %c0_i32_0 : i32, i32, i32
  }
  func.func @transform_5(%arg0: i32, %arg1: memref<2xi32, #tpu.memory_space<smem>>) -> (i32, i32, i32) {
    %c0_i32 = arith.constant 0 : i32
    %c0_i32_0 = arith.constant 0 : i32
    %c0_i32_1 = arith.constant 0 : i32
    return %arg0, %c0_i32, %c0_i32_0 : i32, i32, i32
  }
  func.func @transform_6(%arg0: i32, %arg1: memref<2xi32, #tpu.memory_space<smem>>) -> (i32, i32, i32) {
    %c0_i32 = arith.constant 0 : i32
    %c0_i32_0 = arith.constant 0 : i32
    %c0_i32_1 = arith.constant 0 : i32
    return %arg0, %c0_i32, %c0_i32_0 : i32, i32, i32
  }
  func.func @transform_7(%arg0: i32, %arg1: memref<2xi32, #tpu.memory_space<smem>>) -> (i32, i32) {
    %c0_i32 = arith.constant 0 : i32
    %c0_i32_0 = arith.constant 0 : i32
    %c0_i32_1 = arith.constant 0 : i32
    return %c0_i32, %c0_i32_0 : i32, i32
  }
  func.func @transform_8(%arg0: i32, %arg1: memref<2xi32, #tpu.memory_space<smem>>) -> (i32, i32, i32) {
    %c0_i32 = arith.constant 0 : i32
    %c0_i32_0 = arith.constant 0 : i32
    %c0_i32_1 = arith.constant 0 : i32
    return %arg0, %c0_i32, %c0_i32_0 : i32, i32, i32
  }
  func.func @transform_9(%arg0: i32, %arg1: memref<2xi32, #tpu.memory_space<smem>>) -> (i32, i32, i32) {
    %c0_i32 = arith.constant 0 : i32
    %c0_i32_0 = arith.constant 0 : i32
    %c0_i32_1 = arith.constant 0 : i32
    return %arg0, %c0_i32, %c0_i32_0 : i32, i32, i32
  }
  func.func @transform_10(%arg0: i32, %arg1: memref<2xi32, #tpu.memory_space<smem>>) -> (i32, i32, i32) {
    %c0_i32 = arith.constant 0 : i32
    %c0_i32_0 = arith.constant 0 : i32
    %c0_i32_1 = arith.constant 0 : i32
    return %arg0, %c0_i32, %c0_i32_0 : i32, i32, i32
  }
  func.func @transform_11(%arg0: i32, %arg1: memref<2xi32, #tpu.memory_space<smem>>) -> (i32, i32, i32) {
    %c0_i32 = arith.constant 0 : i32
    %c0_i32_0 = arith.constant 0 : i32
    %c0_i32_1 = arith.constant 0 : i32
    return %arg0, %c0_i32, %c0_i32_0 : i32, i32, i32
  }
  func.func @transform_12(%arg0: i32, %arg1: memref<2xi32, #tpu.memory_space<smem>>) -> (i32, i32) {
    %c0_i32 = arith.constant 0 : i32
    %c0_i32_0 = arith.constant 0 : i32
    %c0_i32_1 = arith.constant 0 : i32
    return %c0_i32, %c0_i32_0 : i32, i32
  }
  func.func @transform_13(%arg0: i32, %arg1: memref<2xi32, #tpu.memory_space<smem>>) -> (i32, i32) {
    %c0_i32 = arith.constant 0 : i32
    %c0_i32_0 = arith.constant 0 : i32
    %c0_i32_1 = arith.constant 0 : i32
    return %c0_i32, %c0_i32_0 : i32, i32
  }
  func.func @transform_14(%arg0: i32, %arg1: memref<2xi32, #tpu.memory_space<smem>>) -> (i32, i32) {
    %c0_i32 = arith.constant 0 : i32
    %c0_i32_0 = arith.constant 0 : i32
    %c0_i32_1 = arith.constant 0 : i32
    return %c0_i32, %c0_i32_0 : i32, i32
  }
  func.func @transform_15(%arg0: i32, %arg1: memref<2xi32, #tpu.memory_space<smem>>) -> (i32, i32) {
    %c0_i32 = arith.constant 0 : i32
    %c0_i32_0 = arith.constant 0 : i32
    %c0_i32_1 = arith.constant 0 : i32
    return %c0_i32, %c0_i32_0 : i32, i32
  }
  func.func @transform_16(%arg0: i32, %arg1: memref<2xi32, #tpu.memory_space<smem>>) -> (i32, i32) {
    %c0_i32 = arith.constant 0 : i32
    %c0_i32_0 = arith.constant 0 : i32
    %c0_i32_1 = arith.constant 0 : i32
    return %c0_i32, %c0_i32_0 : i32, i32
  }
  func.func @transform_17(%arg0: i32, %arg1: memref<2xi32, #tpu.memory_space<smem>>) -> (i32, i32) {
    %c0_i32 = arith.constant 0 : i32
    %c0_i32_0 = arith.constant 0 : i32
    %c0_i32_1 = arith.constant 0 : i32
    return %c0_i32, %c0_i32_0 : i32, i32
  }
  func.func @transform_18(%arg0: i32, %arg1: memref<2xi32, #tpu.memory_space<smem>>) -> (i32, i32) {
    %c0_i32 = arith.constant 0 : i32
    %c0_i32_0 = arith.constant 0 : i32
    %c0_i32_1 = arith.constant 0 : i32
    return %c0_i32, %c0_i32_0 : i32, i32
  }
  func.func @transform_19(%arg0: i32, %arg1: memref<2xi32, #tpu.memory_space<smem>>) -> (i32, i32) {
    %c0_i32 = arith.constant 0 : i32
    %c0_i32_0 = arith.constant 0 : i32
    %c0_i32_1 = arith.constant 0 : i32
    return %c0_i32, %c0_i32_0 : i32, i32
  }
  func.func @transform_20(%arg0: i32, %arg1: memref<2xi32, #tpu.memory_space<smem>>) -> (i32, i32, i32) {
    %c0_i32 = arith.constant 0 : i32
    %c0_i32_0 = arith.constant 0 : i32
    %c0_i32_1 = arith.constant 0 : i32
    return %arg0, %c0_i32, %c0_i32_0 : i32, i32, i32
  }
  func.func @transform_21(%arg0: i32, %arg1: memref<2xi32, #tpu.memory_space<smem>>) -> (i32, i32, i32) {
    %c0_i32 = arith.constant 0 : i32
    %c0_i32_0 = arith.constant 0 : i32
    %c0_i32_1 = arith.constant 0 : i32
    return %arg0, %c0_i32, %c0_i32_0 : i32, i32, i32
  }
  func.func @transform_22(%arg0: i32, %arg1: memref<2xi32, #tpu.memory_space<smem>>) -> (i32, i32, i32) {
    %c0_i32 = arith.constant 0 : i32
    %c0_i32_0 = arith.constant 0 : i32
    %c0_i32_1 = arith.constant 0 : i32
    return %arg0, %c0_i32, %c0_i32_0 : i32, i32, i32
  }
  func.func @transform_23(%arg0: i32, %arg1: memref<2xi32, #tpu.memory_space<smem>>) -> (i32, i32, i32) {
    %c0_i32 = arith.constant 0 : i32
    %c0_i32_0 = arith.constant 0 : i32
    %c0_i32_1 = arith.constant 0 : i32
    return %arg0, %c0_i32, %c0_i32_0 : i32, i32, i32
  }
}

module attributes {stable_mosaic.version = 11 : i64} {
  func.func @_step_kernel(%arg0: i32, %arg1: memref<2xi32, #tpu.memory_space<smem>>, %arg2: memref<2xf32, #tpu.memory_space<smem>>, %arg3: memref<1xf32, #tpu.memory_space<smem>>, %arg4: memref<2xf32, #tpu.memory_space<smem>>, %arg5: memref<2xi32, #tpu.memory_space<smem>>, %arg6: memref<1x8x8xf32, #tpu.memory_space<vmem>>, %arg7: memref<1x8x4xf32, #tpu.memory_space<vmem>>, %arg8: memref<1x1x8xf32, #tpu.memory_space<vmem>>, %arg9: memref<8x8xf32, #tpu.memory_space<vmem>>, %arg10: memref<1x8x32xf32, #tpu.memory_space<vmem>>, %arg11: memref<1x8x32xf32, #tpu.memory_space<vmem>>, %arg12: memref<1x1x32xf32, #tpu.memory_space<vmem>>, %arg13: memref<1x1x64xf32, #tpu.memory_space<vmem>>, %arg14: memref<4x32xf32, #tpu.memory_space<vmem>>, %arg15: memref<4x32xf32, #tpu.memory_space<vmem>>, %arg16: memref<32x128xf32, #tpu.memory_space<vmem>>, %arg17: memref<32x128xf32, #tpu.memory_space<vmem>>, %arg18: memref<1x128xf32, #tpu.memory_space<vmem>>, %arg19: memref<32x32xf32, #tpu.memory_space<vmem>>, %arg20: memref<32x32xf32, #tpu.memory_space<vmem>>, %arg21: memref<1x32xf32, #tpu.memory_space<vmem>>, %arg22: memref<1x1x8xf32, #tpu.memory_space<vmem>>, %arg23: memref<1x8x32xf32, #tpu.memory_space<vmem>>, %arg24: memref<1x1x64xf32, #tpu.memory_space<vmem>>, %arg25: memref<1x1x8xf32, #tpu.memory_space<vmem>>) attributes {dimension_semantics = [#tpu.dimension_semantics<parallel>], iteration_bounds = array<i64: 2>, scalar_prefetch = 1 : i64, scratch_operands = 0 : i64, tpu.core_type = #tpu.core_type<tc>, window_params = [{transform_indices = @transform_0, window_bounds = array<i64: 2>}, {transform_indices = @transform_1, window_bounds = array<i64: 1>}, {transform_indices = @transform_2, window_bounds = array<i64: 2>}, {transform_indices = @transform_3, window_bounds = array<i64: 2>}, {transform_indices = @transform_4, window_bounds = array<i64: 1, 8, 8>}, {transform_indices = @transform_5, window_bounds = array<i64: 1, 8, 4>}, {transform_indices = @transform_6, window_bounds = array<i64: 1, 1, 8>}, {pipeline_mode = #tpu.pipeline_mode<synchronous>, transform_indices = @transform_7, window_bounds = array<i64: 8, 8>}, {transform_indices = @transform_8, window_bounds = array<i64: 1, 8, 32>}, {transform_indices = @transform_9, window_bounds = array<i64: 1, 8, 32>}, {transform_indices = @transform_10, window_bounds = array<i64: 1, 1, 32>}, {transform_indices = @transform_11, window_bounds = array<i64: 1, 1, 64>}, {pipeline_mode = #tpu.pipeline_mode<synchronous>, transform_indices = @transform_12, window_bounds = array<i64: 4, 32>}, {pipeline_mode = #tpu.pipeline_mode<synchronous>, transform_indices = @transform_13, window_bounds = array<i64: 4, 32>}, {pipeline_mode = #tpu.pipeline_mode<synchronous>, transform_indices = @transform_14, window_bounds = array<i64: 32, 128>}, {pipeline_mode = #tpu.pipeline_mode<synchronous>, transform_indices = @transform_15, window_bounds = array<i64: 32, 128>}, {pipeline_mode = #tpu.pipeline_mode<synchronous>, transform_indices = @transform_16, window_bounds = array<i64: 1, 128>}, {pipeline_mode = #tpu.pipeline_mode<synchronous>, transform_indices = @transform_17, window_bounds = array<i64: 32, 32>}, {pipeline_mode = #tpu.pipeline_mode<synchronous>, transform_indices = @transform_18, window_bounds = array<i64: 32, 32>}, {pipeline_mode = #tpu.pipeline_mode<synchronous>, transform_indices = @transform_19, window_bounds = array<i64: 1, 32>}, {transform_indices = @transform_20, window_bounds = array<i64: 1, 1, 8>}, {transform_indices = @transform_21, window_bounds = array<i64: 1, 8, 32>}, {transform_indices = @transform_22, window_bounds = array<i64: 1, 1, 64>}, {transform_indices = @transform_23, window_bounds = array<i64: 1, 1, 8>}]} {
    %0 = arith.index_cast %arg0 : i32 to index
    %1 = memref.load %arg1[%0] : memref<2xi32, #tpu.memory_space<smem>>
    %2 = arith.index_cast %arg0 : i32 to index
    %3 = memref.load %arg2[%2] : memref<2xf32, #tpu.memory_space<smem>>
    %c0 = arith.constant 0 : index
    %4 = memref.load %arg3[%c0] : memref<1xf32, #tpu.memory_space<smem>>
    %5 = arith.index_cast %arg0 : i32 to index
    %6 = memref.load %arg4[%5] : memref<2xf32, #tpu.memory_space<smem>>
    %7 = arith.index_cast %arg0 : i32 to index
    %8 = memref.load %arg5[%7] : memref<2xi32, #tpu.memory_space<smem>>
    %c0_0 = arith.constant 0 : index
    %c0_1 = arith.constant 0 : index
    %c0_2 = arith.constant 0 : index
    %9 = vector.load %arg6[%c0_0, %c0_1, %c0_2] : memref<1x8x8xf32, #tpu.memory_space<vmem>>, vector<1x8x8xf32>
    %10 = vector.shape_cast %9 : vector<1x8x8xf32> to vector<8x8xf32>
    %11 = vector.extract_strided_slice %10 {offsets = [0, 0], sizes = [1, 8], strides = [1, 1]} : vector<8x8xf32> to vector<1x8xf32>
    %12 = vector.extract_strided_slice %10 {offsets = [1, 0], sizes = [1, 8], strides = [1, 1]} : vector<8x8xf32> to vector<1x8xf32>
    %13 = vector.extract_strided_slice %10 {offsets = [2, 0], sizes = [1, 8], strides = [1, 1]} : vector<8x8xf32> to vector<1x8xf32>
    %14 = vector.extract_strided_slice %10 {offsets = [3, 0], sizes = [1, 8], strides = [1, 1]} : vector<8x8xf32> to vector<1x8xf32>
    %15 = vector.extract_strided_slice %10 {offsets = [4, 0], sizes = [1, 8], strides = [1, 1]} : vector<8x8xf32> to vector<1x8xf32>
    %16 = tpu.iota {dimensions = array<i32: 1>} : vector<1x8xi32>
    %17 = vector.broadcast %1 : i32 to vector<1x8xi32>
    %18 = arith.cmpi eq, %16, %17 : vector<1x8xi32>
    %19 = arith.extui %18 : vector<1x8xi1> to vector<1x8xi32>
    %20 = arith.sitofp %19 : vector<1x8xi32> to vector<1x8xf32>
    %21 = tpu.iota {dimensions = array<i32: 0>} : vector<8x1xi32>
    %22 = vector.broadcast %1 : i32 to vector<8x1xi32>
    %23 = arith.cmpi eq, %21, %22 : vector<8x1xi32>
    %24 = arith.extui %23 : vector<8x1xi1> to vector<8x1xi32>
    %25 = arith.sitofp %24 : vector<8x1xi32> to vector<8x1xf32>
    %c0_3 = arith.constant 0 : index
    %c0_4 = arith.constant 0 : index
    %26 = vector.load %arg9[%c0_3, %c0_4] : memref<8x8xf32, #tpu.memory_space<vmem>>, vector<8x8xf32>
    %cst = arith.constant dense<0.000000e+00> : vector<1x8xf32>
    %27 = tpu.matmul %20, %26, %cst {dimension_numbers = #tpu.dot_dimension_numbers<[1], [0], [0], [1], [0, 0, 1, 1], [], []>} : vector<1x8xf32>, vector<8x8xf32>, vector<1x8xf32> -> vector<1x8xf32>
    %cst_5 = arith.constant dense<0.000000e+00> : vector<8x1xf32>
    %28 = tpu.matmul %26, %25, %cst_5 {dimension_numbers = #tpu.dot_dimension_numbers<[0], [0], [1], [1], [0, 1, 1, 1], [], []>} : vector<8x8xf32>, vector<8x1xf32>, vector<8x1xf32> -> vector<8x1xf32>
    %29 = vector.broadcast %3 : f32 to vector<1x8xf32>
    %30 = arith.addf %27, %29 : vector<1x8xf32>
    %31 = arith.subf %11, %30 : vector<1x8xf32>
    %cst_6 = arith.constant 0.000000e+00 : f32
    %32 = vector.broadcast %cst_6 : f32 to vector<1x8xf32>
    %33 = arith.maximumf %32, %31 : vector<1x8xf32>
    %34 = arith.addf %30, %33 : vector<1x8xf32>
    %35 = arith.cmpf ole, %34, %12 : vector<1x8xf32>
    %36 = arith.extui %35 : vector<1x8xi1> to vector<1x8xi32>
    %37 = arith.sitofp %36 : vector<1x8xi32> to vector<1x8xf32>
    %38 = arith.addf %34, %13 : vector<1x8xf32>
    %39 = arith.addf %38, %15 : vector<1x8xf32>
    %40 = vector.broadcast %4 : f32 to vector<1x8xf32>
    %41 = arith.cmpf ole, %39, %40 : vector<1x8xf32>
    %42 = arith.extui %41 : vector<1x8xi1> to vector<1x8xi32>
    %43 = arith.sitofp %42 : vector<1x8xi32> to vector<1x8xf32>
    %c0_7 = arith.constant 0 : index
    %c0_8 = arith.constant 0 : index
    %c0_9 = arith.constant 0 : index
    %44 = vector.load %arg8[%c0_7, %c0_8, %c0_9] : memref<1x1x8xf32, #tpu.memory_space<vmem>>, vector<1x1x8xf32>
    %45 = vector.shape_cast %44 : vector<1x1x8xf32> to vector<1x8xf32>
    %46 = vector.broadcast %1 : i32 to vector<1x8xi32>
    %47 = arith.cmpi eq, %16, %46 : vector<1x8xi32>
    %cst_10 = arith.constant 0.000000e+00 : f32
    %48 = vector.broadcast %cst_10 : f32 to vector<1x8xf32>
    %49 = arith.select %47, %48, %45 : vector<1x8xi1>, vector<1x8xf32>
    %50 = arith.mulf %49, %37 : vector<1x8xf32>
    %51 = arith.mulf %50, %43 : vector<1x8xf32>
    %c0_i32 = arith.constant 0 : i32
    %52 = arith.cmpi sgt, %8, %c0_i32 : i32
    %53 = arith.select %52, %51, %45 : vector<1x8xf32>
    %c0_11 = arith.constant 0 : index
    %c0_12 = arith.constant 0 : index
    %c0_13 = arith.constant 0 : index
    %54 = vector.load %arg22[%c0_11, %c0_12, %c0_13] : memref<1x1x8xf32, #tpu.memory_space<vmem>>, vector<1x1x8xf32>
    %55 = vector.shape_cast %54 : vector<1x1x8xf32> to vector<1x8xf32>
    %56 = vector.shape_cast %53 : vector<1x8xf32> to vector<1x1x8xf32>
    tpu.vector_store %arg22[%c0_11, %c0_12, %c0_13], %56 {strides = array<i32>} : memref<1x1x8xf32, #tpu.memory_space<vmem>>, vector<1x1x8xf32>,
    %57 = arith.subf %12, %34 : vector<1x8xf32>
    %58 = arith.addf %34, %13 : vector<1x8xf32>
    %59 = arith.subf %14, %58 : vector<1x8xf32>
    %60 = tpu.concatenate %30, %33, %57, %59 in 0 : vector<1x8xf32>, vector<1x8xf32>, vector<1x8xf32>, vector<1x8xf32> -> vector<4x8xf32>
    %c0_14 = arith.constant 0 : index
    %c0_15 = arith.constant 0 : index
    %c0_16 = arith.constant 0 : index
    %61 = vector.load %arg7[%c0_14, %c0_15, %c0_16] : memref<1x8x4xf32, #tpu.memory_space<vmem>>, vector<1x8x4xf32>
    %62 = vector.shape_cast %61 : vector<1x8x4xf32> to vector<8x4xf32>
    %63 = vector.extract_strided_slice %62 {offsets = [0, 0], sizes = [8, 1], strides = [1, 1]} : vector<8x4xf32> to vector<8x1xf32>
    %64 = vector.extract_strided_slice %62 {offsets = [0, 2], sizes = [8, 1], strides = [1, 1]} : vector<8x4xf32> to vector<8x1xf32>
    %65 = vector.broadcast %3 : f32 to vector<8x1xf32>
    %66 = arith.addf %28, %65 : vector<8x1xf32>
    %67 = arith.subf %63, %66 : vector<8x1xf32>
    %cst_17 = arith.constant 0.000000e+00 : f32
    %68 = vector.broadcast %cst_17 : f32 to vector<8x1xf32>
    %69 = arith.maximumf %68, %67 : vector<8x1xf32>
    %70 = arith.addf %66, %69 : vector<8x1xf32>
    %71 = arith.addf %70, %64 : vector<8x1xf32>
    %72 = vector.broadcast %71 : vector<8x1xf32> to vector<8x8xf32>
    %73 = arith.addf %26, %72 : vector<8x8xf32>
    %74 = vector.broadcast %63 : vector<8x1xf32> to vector<8x8xf32>
    %75 = arith.subf %74, %73 : vector<8x8xf32>
    %cst_18 = arith.constant 0.000000e+00 : f32
    %76 = vector.broadcast %cst_18 : f32 to vector<8x8xf32>
    %77 = arith.maximumf %76, %75 : vector<8x8xf32>
    %78 = arith.addf %73, %77 : vector<8x8xf32>
    %79 = vector.broadcast %12 : vector<1x8xf32> to vector<8x8xf32>
    %80 = arith.cmpf ole, %78, %79 : vector<8x8xf32>
    %81 = arith.extui %80 : vector<8x8xi1> to vector<8x8xi32>
    %82 = arith.sitofp %81 : vector<8x8xi32> to vector<8x8xf32>
    %83 = vector.broadcast %13 : vector<1x8xf32> to vector<8x8xf32>
    %84 = arith.addf %78, %83 : vector<8x8xf32>
    %85 = vector.broadcast %15 : vector<1x8xf32> to vector<8x8xf32>
    %86 = arith.addf %84, %85 : vector<8x8xf32>
    %87 = vector.broadcast %6 : f32 to vector<8x8xf32>
    %88 = arith.cmpf ole, %86, %87 : vector<8x8xf32>
    %89 = arith.extui %88 : vector<8x8xi1> to vector<8x8xi32>
    %90 = arith.sitofp %89 : vector<8x8xi32> to vector<8x8xf32>
    %91 = tpu.iota {dimensions = array<i32: 0>} : vector<8x8xi32>
    %92 = tpu.iota {dimensions = array<i32: 1>} : vector<8x8xi32>
    %93 = arith.cmpi eq, %91, %92 : vector<8x8xi32>
    %94 = vector.broadcast %51 : vector<1x8xf32> to vector<8x8xf32>
    %95 = arith.mulf %94, %82 : vector<8x8xf32>
    %96 = arith.mulf %95, %90 : vector<8x8xf32>
    %cst_19 = arith.constant 1.000000e+00 : f32
    %97 = vector.broadcast %cst_19 : f32 to vector<8x8xf32>
    %98 = arith.select %93, %97, %96 : vector<8x8xi1>, vector<8x8xf32>
    %cst_20 = arith.constant dense<0.000000e+00> : vector<8xf32>
    %99 = vector.multi_reduction <add>, %98, %cst_20 [1] : vector<8x8xf32> to vector<8xf32>
    %100 = vector.shape_cast %99 : vector<8xf32> to vector<8x1xf32>
    %cst_21 = arith.constant 1.000000e+00 : f32
    %101 = vector.broadcast %cst_21 : f32 to vector<8x1xf32>
    %102 = arith.maximumf %100, %101 : vector<8x1xf32>
    %103 = tpu.reciprocal %102 {approx = true} : vector<8x1xf32> -> vector<8x1xf32>
    %104 = vector.broadcast %103 : vector<8x1xf32> to vector<8x8xf32>
    %105 = arith.mulf %98, %104 : vector<8x8xf32>
    %c0_22 = arith.constant 0 : index
    %c0_23 = arith.constant 0 : index
    %106 = vector.load %arg14[%c0_22, %c0_23] : memref<4x32xf32, #tpu.memory_space<vmem>>, vector<4x32xf32>
    %cst_24 = arith.constant dense<0.000000e+00> : vector<8x32xf32>
    %107 = tpu.matmul %60, %106, %cst_24 {dimension_numbers = #tpu.dot_dimension_numbers<[0], [0], [1], [1], [0, 1, 1, 1], [], []>} : vector<4x8xf32>, vector<4x32xf32>, vector<8x32xf32> -> vector<8x32xf32>
    %c0_25 = arith.constant 0 : index
    %c0_26 = arith.constant 0 : index
    %108 = vector.load %arg15[%c0_25, %c0_26] : memref<4x32xf32, #tpu.memory_space<vmem>>, vector<4x32xf32>
    %cst_27 = arith.constant dense<0.000000e+00> : vector<8x32xf32>
    %109 = tpu.matmul %60, %108, %cst_27 {dimension_numbers = #tpu.dot_dimension_numbers<[0], [0], [1], [1], [0, 1, 1, 1], [], []>} : vector<4x8xf32>, vector<4x32xf32>, vector<8x32xf32> -> vector<8x32xf32>
    %c0_28 = arith.constant 0 : index
    %c0_29 = arith.constant 0 : index
    %c0_30 = arith.constant 0 : index
    %110 = vector.load %arg11[%c0_28, %c0_29, %c0_30] : memref<1x8x32xf32, #tpu.memory_space<vmem>>, vector<1x8x32xf32>
    %111 = vector.shape_cast %110 : vector<1x8x32xf32> to vector<8x32xf32>
    %112 = arith.addf %111, %109 : vector<8x32xf32>
    %cst_31 = arith.constant dense<0.000000e+00> : vector<8x32xf32>
    %113 = tpu.matmul %105, %112, %cst_31 {dimension_numbers = #tpu.dot_dimension_numbers<[1], [0], [0], [1], [0, 0, 1, 1], [], []>} : vector<8x8xf32>, vector<8x32xf32>, vector<8x32xf32> -> vector<8x32xf32>
    %c0_32 = arith.constant 0 : index
    %c0_33 = arith.constant 0 : index
    %c0_34 = arith.constant 0 : index
    %114 = vector.load %arg10[%c0_32, %c0_33, %c0_34] : memref<1x8x32xf32, #tpu.memory_space<vmem>>, vector<1x8x32xf32>
    %115 = vector.shape_cast %114 : vector<1x8x32xf32> to vector<8x32xf32>
    %116 = arith.addf %115, %107 : vector<8x32xf32>
    %117 = arith.addf %116, %113 : vector<8x32xf32>
    %cst_35 = arith.constant 0.000000e+00 : f32
    %118 = vector.broadcast %cst_35 : f32 to vector<8x32xf32>
    %119 = arith.maximumf %117, %118 : vector<8x32xf32>
    %c0_36 = arith.constant 0 : index
    %c0_37 = arith.constant 0 : index
    %c0_38 = arith.constant 0 : index
    %120 = vector.load %arg23[%c0_36, %c0_37, %c0_38] : memref<1x8x32xf32, #tpu.memory_space<vmem>>, vector<1x8x32xf32>
    %121 = vector.shape_cast %120 : vector<1x8x32xf32> to vector<8x32xf32>
    %122 = vector.shape_cast %119 : vector<8x32xf32> to vector<1x8x32xf32>
    tpu.vector_store %arg23[%c0_36, %c0_37, %c0_38], %122 {strides = array<i32>} : memref<1x8x32xf32, #tpu.memory_space<vmem>>, vector<1x8x32xf32>,
    %c0_39 = arith.constant 0 : index
    %c0_40 = arith.constant 0 : index
    %c0_41 = arith.constant 0 : index
    %123 = vector.load %arg12[%c0_39, %c0_40, %c0_41] : memref<1x1x32xf32, #tpu.memory_space<vmem>>, vector<1x1x32xf32>
    %124 = vector.shape_cast %123 : vector<1x1x32xf32> to vector<1x32xf32>
    %c0_42 = arith.constant 0 : index
    %c0_43 = arith.constant 0 : index
    %c0_44 = arith.constant 0 : index
    %125 = vector.load %arg13[%c0_42, %c0_43, %c0_44] : memref<1x1x64xf32, #tpu.memory_space<vmem>>, vector<1x1x64xf32>
    %126 = vector.shape_cast %125 : vector<1x1x64xf32> to vector<1x64xf32>
    %127 = vector.extract_strided_slice %126 {offsets = [0, 0], sizes = [1, 32], strides = [1, 1]} : vector<1x64xf32> to vector<1x32xf32>
    %128 = vector.extract_strided_slice %126 {offsets = [0, 32], sizes = [1, 32], strides = [1, 1]} : vector<1x64xf32> to vector<1x32xf32>
    %c0_45 = arith.constant 0 : index
    %c0_46 = arith.constant 0 : index
    %129 = vector.load %arg16[%c0_45, %c0_46] : memref<32x128xf32, #tpu.memory_space<vmem>>, vector<32x128xf32>
    %cst_47 = arith.constant dense<0.000000e+00> : vector<1x128xf32>
    %130 = tpu.matmul %124, %129, %cst_47 {dimension_numbers = #tpu.dot_dimension_numbers<[1], [0], [0], [1], [0, 0, 1, 1], [], []>} : vector<1x32xf32>, vector<32x128xf32>, vector<1x128xf32> -> vector<1x128xf32>
    %c0_48 = arith.constant 0 : index
    %c0_49 = arith.constant 0 : index
    %131 = vector.load %arg17[%c0_48, %c0_49] : memref<32x128xf32, #tpu.memory_space<vmem>>, vector<32x128xf32>
    %cst_50 = arith.constant dense<0.000000e+00> : vector<1x128xf32>
    %132 = tpu.matmul %127, %131, %cst_50 {dimension_numbers = #tpu.dot_dimension_numbers<[1], [0], [0], [1], [0, 0, 1, 1], [], []>} : vector<1x32xf32>, vector<32x128xf32>, vector<1x128xf32> -> vector<1x128xf32>
    %133 = arith.addf %130, %132 : vector<1x128xf32>
    %c0_51 = arith.constant 0 : index
    %c0_52 = arith.constant 0 : index
    %134 = vector.load %arg18[%c0_51, %c0_52] : memref<1x128xf32, #tpu.memory_space<vmem>>, vector<1x128xf32>
    %135 = arith.addf %133, %134 : vector<1x128xf32>
    %136 = vector.extract_strided_slice %135 {offsets = [0, 0], sizes = [1, 32], strides = [1, 1]} : vector<1x128xf32> to vector<1x32xf32>
    %137 = arith.negf %136 : vector<1x32xf32>
    %138 = math.exp %137 : vector<1x32xf32>
    %cst_53 = arith.constant 1.000000e+00 : f32
    %139 = vector.broadcast %cst_53 : f32 to vector<1x32xf32>
    %140 = arith.addf %139, %138 : vector<1x32xf32>
    %141 = arith.divf %139, %140 : vector<1x32xf32>
    %142 = vector.extract_strided_slice %135 {offsets = [0, 32], sizes = [1, 32], strides = [1, 1]} : vector<1x128xf32> to vector<1x32xf32>
    %143 = arith.negf %142 : vector<1x32xf32>
    %144 = math.exp %143 : vector<1x32xf32>
    %cst_54 = arith.constant 1.000000e+00 : f32
    %145 = vector.broadcast %cst_54 : f32 to vector<1x32xf32>
    %146 = arith.addf %145, %144 : vector<1x32xf32>
    %147 = arith.divf %145, %146 : vector<1x32xf32>
    %148 = vector.extract_strided_slice %135 {offsets = [0, 64], sizes = [1, 32], strides = [1, 1]} : vector<1x128xf32> to vector<1x32xf32>
    %149 = math.tanh %148 : vector<1x32xf32>
    %150 = vector.extract_strided_slice %135 {offsets = [0, 96], sizes = [1, 32], strides = [1, 1]} : vector<1x128xf32> to vector<1x32xf32>
    %151 = arith.negf %150 : vector<1x32xf32>
    %152 = math.exp %151 : vector<1x32xf32>
    %cst_55 = arith.constant 1.000000e+00 : f32
    %153 = vector.broadcast %cst_55 : f32 to vector<1x32xf32>
    %154 = arith.addf %153, %152 : vector<1x32xf32>
    %155 = arith.divf %153, %154 : vector<1x32xf32>
    %156 = arith.mulf %147, %128 : vector<1x32xf32>
    %157 = arith.mulf %141, %149 : vector<1x32xf32>
    %158 = arith.addf %156, %157 : vector<1x32xf32>
    %159 = math.tanh %158 : vector<1x32xf32>
    %160 = arith.mulf %155, %159 : vector<1x32xf32>
    %161 = tpu.concatenate %160, %158 in 1 : vector<1x32xf32>, vector<1x32xf32> -> vector<1x64xf32>
    %c0_56 = arith.constant 0 : index
    %c0_57 = arith.constant 0 : index
    %c0_58 = arith.constant 0 : index
    %162 = vector.load %arg24[%c0_56, %c0_57, %c0_58] : memref<1x1x64xf32, #tpu.memory_space<vmem>>, vector<1x1x64xf32>
    %163 = vector.shape_cast %162 : vector<1x1x64xf32> to vector<1x64xf32>
    %164 = vector.shape_cast %161 : vector<1x64xf32> to vector<1x1x64xf32>
    tpu.vector_store %arg24[%c0_56, %c0_57, %c0_58], %164 {strides = array<i32>} : memref<1x1x64xf32, #tpu.memory_space<vmem>>, vector<1x1x64xf32>,
    %c0_59 = arith.constant 0 : index
    %c0_60 = arith.constant 0 : index
    %165 = vector.load %arg19[%c0_59, %c0_60] : memref<32x32xf32, #tpu.memory_space<vmem>>, vector<32x32xf32>
    %cst_61 = arith.constant dense<0.000000e+00> : vector<8x32xf32>
    %166 = tpu.matmul %119, %165, %cst_61 {dimension_numbers = #tpu.dot_dimension_numbers<[1], [0], [0], [1], [0, 0, 1, 1], [], []>} : vector<8x32xf32>, vector<32x32xf32>, vector<8x32xf32> -> vector<8x32xf32>
    %c0_62 = arith.constant 0 : index
    %c0_63 = arith.constant 0 : index
    %167 = vector.load %arg20[%c0_62, %c0_63] : memref<32x32xf32, #tpu.memory_space<vmem>>, vector<32x32xf32>
    %cst_64 = arith.constant dense<0.000000e+00> : vector<1x32xf32>
    %168 = tpu.matmul %160, %167, %cst_64 {dimension_numbers = #tpu.dot_dimension_numbers<[1], [0], [0], [1], [0, 0, 1, 1], [], []>} : vector<1x32xf32>, vector<32x32xf32>, vector<1x32xf32> -> vector<1x32xf32>
    %169 = vector.broadcast %168 : vector<1x32xf32> to vector<8x32xf32>
    %170 = arith.addf %166, %169 : vector<8x32xf32>
    %171 = math.tanh %170 : vector<8x32xf32>
    %c0_65 = arith.constant 0 : index
    %c0_66 = arith.constant 0 : index
    %172 = vector.load %arg21[%c0_65, %c0_66] : memref<1x32xf32, #tpu.memory_space<vmem>>, vector<1x32xf32>
    %cst_67 = arith.constant dense<0.000000e+00> : vector<1x8xf32>
    %173 = tpu.matmul %172, %171, %cst_67 {dimension_numbers = #tpu.dot_dimension_numbers<[1], [1], [0], [0], [0, 0, 1, 0], [], []>} : vector<1x32xf32>, vector<8x32xf32>, vector<1x8xf32> -> vector<1x8xf32>
    %cst_68 = arith.constant 0.000000e+00 : f32
    %174 = vector.broadcast %cst_68 : f32 to vector<1x8xf32>
    %175 = arith.cmpf ogt, %51, %174 : vector<1x8xf32>
    %cst_69 = arith.constant -1.000000e+09 : f32
    %176 = vector.broadcast %cst_69 : f32 to vector<1x8xf32>
    %177 = arith.select %175, %173, %176 : vector<1x8xi1>, vector<1x8xf32>
    %cst_70 = arith.constant dense<0xFF800000> : vector<1xf32>
    %178 = vector.multi_reduction <maximumf>, %177, %cst_70 [1] : vector<1x8xf32> to vector<1xf32>
    %179 = vector.shape_cast %178 : vector<1xf32> to vector<1x1xf32>
    %180 = vector.broadcast %179 : vector<1x1xf32> to vector<1x8xf32>
    %181 = arith.subf %177, %180 : vector<1x8xf32>
    %182 = math.exp %181 : vector<1x8xf32>
    %cst_71 = arith.constant dense<0.000000e+00> : vector<1xf32>
    %183 = vector.multi_reduction <add>, %182, %cst_71 [1] : vector<1x8xf32> to vector<1xf32>
    %184 = vector.shape_cast %183 : vector<1xf32> to vector<1x1xf32>
    %185 = vector.broadcast %184 : vector<1x1xf32> to vector<1x8xf32>
    %186 = arith.divf %182, %185 : vector<1x8xf32>
    %c0_72 = arith.constant 0 : index
    %c0_73 = arith.constant 0 : index
    %c0_74 = arith.constant 0 : index
    %187 = vector.load %arg25[%c0_72, %c0_73, %c0_74] : memref<1x1x8xf32, #tpu.memory_space<vmem>>, vector<1x1x8xf32>
    %188 = vector.shape_cast %187 : vector<1x1x8xf32> to vector<1x8xf32>
    %189 = vector.shape_cast %186 : vector<1x8xf32> to vector<1x1x8xf32>
    tpu.vector_store %arg25[%c0_72, %c0_73, %c0_74], %189 {strides = array<i32>} : memref<1x1x8xf32, #tpu.memory_space<vmem>>, vector<1x1x8xf32>,
    return
  }
  func.func @transform_0(%arg0: i32, %arg1: memref<2xi32, #tpu.memory_space<smem>>) -> i32 {
    %c0_i32 = arith.constant 0 : i32
    %c0_i32_0 = arith.constant 0 : i32
    return %c0_i32 : i32
  }
  func.func @transform_1(%arg0: i32, %arg1: memref<2xi32, #tpu.memory_space<smem>>) -> i32 {
    %c0_i32 = arith.constant 0 : i32
    %c0_i32_0 = arith.constant 0 : i32
    return %c0_i32 : i32
  }
  func.func @transform_2(%arg0: i32, %arg1: memref<2xi32, #tpu.memory_space<smem>>) -> i32 {
    %c0_i32 = arith.constant 0 : i32
    %c0_i32_0 = arith.constant 0 : i32
    return %c0_i32 : i32
  }
  func.func @transform_3(%arg0: i32, %arg1: memref<2xi32, #tpu.memory_space<smem>>) -> i32 {
    %c0_i32 = arith.constant 0 : i32
    %c0_i32_0 = arith.constant 0 : i32
    return %c0_i32 : i32
  }
  func.func @transform_4(%arg0: i32, %arg1: memref<2xi32, #tpu.memory_space<smem>>) -> (i32, i32, i32) {
    %c0_i32 = arith.constant 0 : i32
    %c0_i32_0 = arith.constant 0 : i32
    %c0_i32_1 = arith.constant 0 : i32
    return %arg0, %c0_i32, %c0_i32_0 : i32, i32, i32
  }
  func.func @transform_5(%arg0: i32, %arg1: memref<2xi32, #tpu.memory_space<smem>>) -> (i32, i32, i32) {
    %c0_i32 = arith.constant 0 : i32
    %c0_i32_0 = arith.constant 0 : i32
    %c0_i32_1 = arith.constant 0 : i32
    return %arg0, %c0_i32, %c0_i32_0 : i32, i32, i32
  }
  func.func @transform_6(%arg0: i32, %arg1: memref<2xi32, #tpu.memory_space<smem>>) -> (i32, i32, i32) {
    %c0_i32 = arith.constant 0 : i32
    %c0_i32_0 = arith.constant 0 : i32
    %c0_i32_1 = arith.constant 0 : i32
    return %arg0, %c0_i32, %c0_i32_0 : i32, i32, i32
  }
  func.func @transform_7(%arg0: i32, %arg1: memref<2xi32, #tpu.memory_space<smem>>) -> (i32, i32) {
    %c0_i32 = arith.constant 0 : i32
    %c0_i32_0 = arith.constant 0 : i32
    %c0_i32_1 = arith.constant 0 : i32
    return %c0_i32, %c0_i32_0 : i32, i32
  }
  func.func @transform_8(%arg0: i32, %arg1: memref<2xi32, #tpu.memory_space<smem>>) -> (i32, i32, i32) {
    %c0_i32 = arith.constant 0 : i32
    %c0_i32_0 = arith.constant 0 : i32
    %c0_i32_1 = arith.constant 0 : i32
    return %arg0, %c0_i32, %c0_i32_0 : i32, i32, i32
  }
  func.func @transform_9(%arg0: i32, %arg1: memref<2xi32, #tpu.memory_space<smem>>) -> (i32, i32, i32) {
    %c0_i32 = arith.constant 0 : i32
    %c0_i32_0 = arith.constant 0 : i32
    %c0_i32_1 = arith.constant 0 : i32
    return %arg0, %c0_i32, %c0_i32_0 : i32, i32, i32
  }
  func.func @transform_10(%arg0: i32, %arg1: memref<2xi32, #tpu.memory_space<smem>>) -> (i32, i32, i32) {
    %c0_i32 = arith.constant 0 : i32
    %c0_i32_0 = arith.constant 0 : i32
    %c0_i32_1 = arith.constant 0 : i32
    return %arg0, %c0_i32, %c0_i32_0 : i32, i32, i32
  }
  func.func @transform_11(%arg0: i32, %arg1: memref<2xi32, #tpu.memory_space<smem>>) -> (i32, i32, i32) {
    %c0_i32 = arith.constant 0 : i32
    %c0_i32_0 = arith.constant 0 : i32
    %c0_i32_1 = arith.constant 0 : i32
    return %arg0, %c0_i32, %c0_i32_0 : i32, i32, i32
  }
  func.func @transform_12(%arg0: i32, %arg1: memref<2xi32, #tpu.memory_space<smem>>) -> (i32, i32) {
    %c0_i32 = arith.constant 0 : i32
    %c0_i32_0 = arith.constant 0 : i32
    %c0_i32_1 = arith.constant 0 : i32
    return %c0_i32, %c0_i32_0 : i32, i32
  }
  func.func @transform_13(%arg0: i32, %arg1: memref<2xi32, #tpu.memory_space<smem>>) -> (i32, i32) {
    %c0_i32 = arith.constant 0 : i32
    %c0_i32_0 = arith.constant 0 : i32
    %c0_i32_1 = arith.constant 0 : i32
    return %c0_i32, %c0_i32_0 : i32, i32
  }
  func.func @transform_14(%arg0: i32, %arg1: memref<2xi32, #tpu.memory_space<smem>>) -> (i32, i32) {
    %c0_i32 = arith.constant 0 : i32
    %c0_i32_0 = arith.constant 0 : i32
    %c0_i32_1 = arith.constant 0 : i32
    return %c0_i32, %c0_i32_0 : i32, i32
  }
  func.func @transform_15(%arg0: i32, %arg1: memref<2xi32, #tpu.memory_space<smem>>) -> (i32, i32) {
    %c0_i32 = arith.constant 0 : i32
    %c0_i32_0 = arith.constant 0 : i32
    %c0_i32_1 = arith.constant 0 : i32
    return %c0_i32, %c0_i32_0 : i32, i32
  }
  func.func @transform_16(%arg0: i32, %arg1: memref<2xi32, #tpu.memory_space<smem>>) -> (i32, i32) {
    %c0_i32 = arith.constant 0 : i32
    %c0_i32_0 = arith.constant 0 : i32
    %c0_i32_1 = arith.constant 0 : i32
    return %c0_i32, %c0_i32_0 : i32, i32
  }
  func.func @transform_17(%arg0: i32, %arg1: memref<2xi32, #tpu.memory_space<smem>>) -> (i32, i32) {
    %c0_i32 = arith.constant 0 : i32
    %c0_i32_0 = arith.constant 0 : i32
    %c0_i32_1 = arith.constant 0 : i32
    return %c0_i32, %c0_i32_0 : i32, i32
  }
  func.func @transform_18(%arg0: i32, %arg1: memref<2xi32, #tpu.memory_space<smem>>) -> (i32, i32) {
    %c0_i32 = arith.constant 0 : i32
    %c0_i32_0 = arith.constant 0 : i32
    %c0_i32_1 = arith.constant 0 : i32
    return %c0_i32, %c0_i32_0 : i32, i32
  }
  func.func @transform_19(%arg0: i32, %arg1: memref<2xi32, #tpu.memory_space<smem>>) -> (i32, i32) {
    %c0_i32 = arith.constant 0 : i32
    %c0_i32_0 = arith.constant 0 : i32
    %c0_i32_1 = arith.constant 0 : i32
    return %c0_i32, %c0_i32_0 : i32, i32
  }
  func.func @transform_20(%arg0: i32, %arg1: memref<2xi32, #tpu.memory_space<smem>>) -> (i32, i32, i32) {
    %c0_i32 = arith.constant 0 : i32
    %c0_i32_0 = arith.constant 0 : i32
    %c0_i32_1 = arith.constant 0 : i32
    return %arg0, %c0_i32, %c0_i32_0 : i32, i32, i32
  }
  func.func @transform_21(%arg0: i32, %arg1: memref<2xi32, #tpu.memory_space<smem>>) -> (i32, i32, i32) {
    %c0_i32 = arith.constant 0 : i32
    %c0_i32_0 = arith.constant 0 : i32
    %c0_i32_1 = arith.constant 0 : i32
    return %arg0, %c0_i32, %c0_i32_0 : i32, i32, i32
  }
  func.func @transform_22(%arg0: i32, %arg1: memref<2xi32, #tpu.memory_space<smem>>) -> (i32, i32, i32) {
    %c0_i32 = arith.constant 0 : i32
    %c0_i32_0 = arith.constant 0 : i32
    %c0_i32_1 = arith.constant 0 : i32
    return %arg0, %c0_i32, %c0_i32_0 : i32, i32, i32
  }
  func.func @transform_23(%arg0: i32, %arg1: memref<2xi32, #tpu.memory_space<smem>>) -> (i32, i32, i32) {
    %c0_i32 = arith.constant 0 : i32
    %c0_i32_0 = arith.constant 0 : i32
    %c0_i32_1 = arith.constant 0 : i32
    return %arg0, %c0_i32, %c0_i32_0 : i32, i32, i32
  }
}

</mosaic_0001>

<llo_original>
// kernel: mul.1
$region0: #{mul.1}
  #allocation0 [shape = 's32[1]{0}', space=sflag, size = 0x4, scoped, tag = 'scoped memory for mul.1']
  %s0 = inlined_call_operand.<no memory space> [shape: f32[], index: 0, kind: input, shape index: {}]
  %s1 = inlined_call_operand.vmem [shape: f32[2,1], index: 1, kind: output, shape index: {}]
  %v2 = vstv %s0
  %3 = vst [vmem:[%s1] sm:$0x1] %v2

// kernel: _run_episode_jit.3
$region0: #{_run_episode_jit.3}
  #allocation0 [shape = 'u32[]', space=smem, size = 0x4, offset = 0x4, fixed_abs, tag = 'smem constant byte address 0x4 - core index']
  #allocation1 [shape = 'u32[72,128]{1,0:T(1,128)}', space=vmem, size = 0x9000, scoped, tag = 'internal scratch']
  %s0 = inlined_call_operand.vmem [shape: f32[16,4], index: 0, kind: input, shape index: {}]
  %s1 = inlined_call_operand.vmem [shape: f32[4,16], index: 1, kind: input, shape index: {}]
  %s2 = inlined_call_operand.vmem [shape: f32[1,16], index: 2, kind: input, shape index: {}]
  %s3 = inlined_call_operand.vmem [shape: f32[16,16], index: 3, kind: output, shape index: {}]
  %s4 = sld [smem:[#allocation0]]
  $region22: #{_run_episode_jit.3} parent=0
    _
  %s6 = ssub.s32 1, %s4
  %s7 = scalar_select 0, %s6, %s4
  // Predicated region
  $region2: #{_run_episode_jit.3} parent=0 // pred_check
    _
  $region3: #{_run_episode_jit.3} parent=0 // pred_check_branch
    %9 = sbr.rel (0) target = $region5
  $region4: #{_run_episode_jit.3} parent=0 // pred_region
    _
  $region5: #{_run_episode_jit.3} parent=0 // pred_fallthru
    _
  // Predicated region
  $region6: #{_run_episode_jit.3} parent=0 // pred_check
    _
  $region7: #{_run_episode_jit.3} parent=0 // pred_check_branch
    %11 = sbr.rel (0) target = $region9
  $region8: #{_run_episode_jit.3} parent=0 // pred_region
    _
  $region9: #{_run_episode_jit.3} parent=0 // pred_fallthru
    _
  // Predicated region
  $region10: #{_run_episode_jit.3} parent=0 // pred_check
    _
  $region11: #{_run_episode_jit.3} parent=0 // pred_check_branch
    %13 = sbr.rel (0) target = $region13
  $region12: #{_run_episode_jit.3} parent=0 // pred_region
    _
  $region13: #{_run_episode_jit.3} parent=0 // pred_fallthru
    _
  %v14 = vld [vmem:[%s0] sm:$0xff]
  %v15 = vld [vmem:[%s0 + $0x8] sm:$0xff]
  %v16 = vld [vmem:[%s1] sm:$0xf]
  %v17 = vld [vmem:[%s2] sm:$0x1]
  %v19 = vperm.slane %v17, 0
  %vm21 = vcmask 31744
  %v23 = vsel %vm21, %v14, 0
  %v26 = vsel %vm21, %v15, 0
  %vm28 = vcmask 1043456
  %v30 = vsel %vm28, %v16, 0
  %32 = vmatpush.msra.mxu0 0.0
  %33 = vmatpush.msra.mxu0 0.0
  %34 = vmatpush.msra.mxu0 0.0
  %35 = vmatpush.msra.mxu0 0.0
  %36 = vmatpush.msra.mxu0 0.0
  %37 = vmatpush.msra.mxu0 0.0
  %38 = vmatpush.msra.mxu0 0.0
  %39 = vmatpush.msra.mxu0 0.0
  %40 = vmatpush.msra.mxu0 0.0
  %41 = vmatpush.msra.mxu0 0.0
  %42 = vmatpush.msra.mxu0 0.0
  %43 = vmatpush.msra.mxu0 0.0
  %44 = vmatpush.msra.mxu0 0.0
  %45 = vmatpush.msra.mxu0 0.0
  %46 = vmatpush.msra.mxu0 0.0
  %47 = vmatpush.msra.mxu0 %v30
  %48 = vmatmul.f32.gmra.mxu0 %v23
  %v49 = vpop.f32.mrf.mxu0
  %v50 = vadd.f32 %v19, %v49
  %51 = vmatmul.f32.gmra.mxu0 %v26
  %v52 = vpop.f32.mrf.mxu0
  %v53 = vadd.f32 %v19, %v52
  %54 = vdwg.mxu0
  %vm55 = vcmask 130048
  %56 = vst.msk [vmem:[%s3] sm:$0xff] %vm55, %v50
  %57 = vst.msk [vmem:[%s3 + $0x8] sm:$0xff] %vm55, %v53
  // Predicated region
  $region14: #{_run_episode_jit.3} parent=0 // pred_check
    _
  $region15: #{_run_episode_jit.3} parent=0 // pred_check_branch
    %59 = sbr.rel (0) target = $region17
  $region16: #{_run_episode_jit.3} parent=0 // pred_region
    _
  $region17: #{_run_episode_jit.3} parent=0 // pred_fallthru
    _
  // Predicated region
  $region18: #{_run_episode_jit.3} parent=0 // pred_check
    _
  $region19: #{_run_episode_jit.3} parent=0 // pred_check_branch
    %61 = sbr.rel (0) target = $region21
  $region20: #{_run_episode_jit.3} parent=0 // pred_region
    _
  $region21: #{_run_episode_jit.3} parent=0 // pred_fallthru
    _

// kernel: _run_episode_jit.4
$region0: #{_run_episode_jit.4}
  #allocation0 [shape = 'u32[]', space=smem, size = 0x4, offset = 0x4, fixed_abs, tag = 'smem constant byte address 0x4 - core index']
  #allocation1 [shape = 'u32[72,128]{1,0:T(1,128)}', space=vmem, size = 0x9000, scoped, tag = 'internal scratch']
  #allocation2 [shape = 's32[1]{0}', space=sflag, size = 0x4, scoped, tag = 'scoped memory for _run_episode_jit.4']
  #allocation3 [shape = 'u8[512]{0}', space=smem, size = 0x200, scoped, tag = 'prefetched SMEM operand 0']
  #allocation4 [shape = 'f32[1]{0:T(128)S(6)}', space=smem, size = 0x200, scoped, tag = 'scoped memory for _run_episode_jit.4']
  %s0 = inlined_call_operand.vmem [shape: s32[2], index: 0, kind: input, shape index: {}]
  %s1 = inlined_call_operand.vmem [shape: f32[2], index: 1, kind: input, shape index: {}]
  %s2 = inlined_call_operand.<no memory space> [shape: f32[1], index: 2, kind: input, shape index: {}]
  %s3 = inlined_call_operand.vmem [shape: f32[2], index: 3, kind: input, shape index: {}]
  %s4 = inlined_call_operand.vmem [shape: s32[2], index: 4, kind: input, shape index: {}]
  %s5 = inlined_call_operand.vmem [shape: f32[2,8,8], index: 5, kind: input, shape index: {}]
  %s6 = inlined_call_operand.vmem [shape: f32[2,8,4], index: 6, kind: input, shape index: {}]
  %s7 = inlined_call_operand.vmem [shape: f32[2,1,8], index: 7, kind: input, shape index: {}]
  %s8 = inlined_call_operand.vmem [shape: f32[8,8], index: 8, kind: input, shape index: {}]
  %s9 = inlined_call_operand.vmem [shape: f32[2,8,32], index: 9, kind: input, shape index: {}]
  %s10 = inlined_call_operand.vmem [shape: f32[2,8,32], index: 10, kind: input, shape index: {}]
  %s11 = inlined_call_operand.vmem [shape: f32[2,1,32], index: 11, kind: input, shape index: {}]
  %s12 = inlined_call_operand.vmem [shape: f32[2,1,64], index: 12, kind: input, shape index: {}]
  %s13 = inlined_call_operand.vmem [shape: f32[4,32], index: 13, kind: input, shape index: {}]
  %s14 = inlined_call_operand.vmem [shape: f32[4,32], index: 14, kind: input, shape index: {}]
  %s15 = inlined_call_operand.vmem [shape: f32[32,128], index: 15, kind: input, shape index: {}]
  %s16 = inlined_call_operand.vmem [shape: f32[32,128], index: 16, kind: input, shape index: {}]
  %s17 = inlined_call_operand.vmem [shape: f32[1,128], index: 17, kind: input, shape index: {}]
  %s18 = inlined_call_operand.vmem [shape: f32[32,32], index: 18, kind: input, shape index: {}]
  %s19 = inlined_call_operand.vmem [shape: f32[32,32], index: 19, kind: input, shape index: {}]
  %s20 = inlined_call_operand.vmem [shape: f32[1,32], index: 20, kind: input, shape index: {}]
  %s21 = inlined_call_operand.vmem [shape: f32[2,1,8], index: 21, kind: output, shape index: {0}]
  %s22 = inlined_call_operand.vmem [shape: f32[2,8,32], index: 22, kind: output, shape index: {1}]
  %s23 = inlined_call_operand.hbm [shape: f32[2,1,64], index: 23, kind: output, shape index: {2}]
  %s24 = inlined_call_operand.hbm [shape: f32[2,1,8], index: 24, kind: output, shape index: {3}]
  %25 = xla_tuple %s21, %s22, %s23, %s24
  %s26 = sld [smem:[#allocation0]]
  $region149: #{_run_episode_jit.4} parent=0
    _
  %s28 = ssub.s32 1, %s26
  %s29 = scalar_select 0, %s28, %s26
  %s31 = sshll.u32 %s0, 4
  %s32 = int_to_ptr.vmem [resolvable:$true] %s31
  %34 = dma.vmem_to_smem %s32, 16, [#allocation3], [#allocation2]
  %35 = sst [smem:[#allocation4]] %s2
  %37 = dma.done [#allocation2], 16
  %38 = sfence
  $region1: #{_run_episode_jit.4} parent=0
    #allocation5 [shape = 'u8[512]{0}', space=smem, size = 0x200, scoped, tag = 'input window, operand 1, single buffered']
    #allocation6 [shape = 's32[2]{0}', space=sflag, size = 0x8, scoped, tag = 'scoped memory for _run_episode_jit.4']
    #allocation7 [shape = 's32[2]{0}', space=sflag, size = 0x8, scoped, tag = 'scoped memory for _run_episode_jit.4']
    #allocation8 [shape = 'u8[512]{0}', space=smem, size = 0x200, scoped, tag = 'input window, operand 3, single buffered']
    #allocation9 [shape = 's32[1]{0}', space=sflag, size = 0x4, scoped, tag = 'scoped memory for _run_episode_jit.4']
    #allocation10 [shape = 'u8[512]{0}', space=smem, size = 0x200, scoped, tag = 'input window, operand 4, single buffered']
    #allocation11 [shape = 'u8[1024]{0}', space=vmem, size = 0x400, scoped, tag = 'output window, operand 2']
    #allocation12 [shape = 'u8[1024]{0}', space=vmem, size = 0x400, scoped, tag = 'output window, operand 3']
    #allocation13 [shape = 's32[2]{0}', space=sflag, size = 0x8, scoped, tag = 'scoped memory for _run_episode_jit.4']
    %39 = vsyncpa [#allocation7], 0
    %40 = vsyncpa [#allocation9], 0
    %41 = vsyncpa [#allocation6], 0
    %s42 = scalar_lea.sflag [#allocation6], 1
    %43 = vsyncpa %s42, 0
    %44 = vsyncpa [#allocation13], 0
    %s45 = scalar_lea.sflag [#allocation13], 1
    %46 = vsyncpa %s45, 0
    loop: start=0, step=1, limit=4
    $region2: #{_run_episode_jit.4} parent=1 // loop_pre_header
      _
    $region3: #{_run_episode_jit.4} parent=1 // loop_header
      %s48 = sphi 0, %s52
      %p49 = scmp.ge.s32.totalorder %s48, 4
      %s56 = sphi 0, %s56
      %s58 = sphi 0, %s56
      %s59 = sphi 0, %s58
      %s73 = sphi 0, %s59
      %s77 = sphi 0, %s77
      %s79 = sphi 0, %s77
      %s80 = sphi 0, %s79
      %s94 = sphi 0, %s80
      %s98 = sphi 0, %s98
      %s100 = sphi 0, %s98
      %s101 = sphi 0, %s100
      %s115 = sphi 0, %s101
      %s119 = sphi 0, %s119
      %s121 = sphi 0, %s119
      %s122 = sphi 0, %s121
      %s136 = sphi 0, %s122
      %s142 = sphi 0, %s144
      %s145 = sphi 0, %s142
      %s146 = sphi 0, %s145
      %s162 = sphi 0, %s146
      %s168 = sphi 0, %s170
      %s171 = sphi 0, %s168
      %s172 = sphi 0, %s171
      %s188 = sphi 0, %s172
      %s194 = sphi 0, %s196
      %s197 = sphi 0, %s194
      %s198 = sphi 0, %s197
      %s214 = sphi 0, %s198
      %s218 = sphi 0, %s218
      %s220 = sphi 0, %s218
      %s221 = sphi 0, %s220
      %s235 = sphi 0, %s221
      %s241 = sphi 0, %s243
      %s244 = sphi 0, %s241
      %s245 = sphi 0, %s244
      %s261 = sphi 0, %s245
      %s267 = sphi 0, %s269
      %s270 = sphi 0, %s267
      %s271 = sphi 0, %s270
      %s287 = sphi 0, %s271
      %s293 = sphi 0, %s295
      %s296 = sphi 0, %s293
      %s297 = sphi 0, %s296
      %s313 = sphi 0, %s297
      %s319 = sphi 0, %s321
      %s322 = sphi 0, %s319
      %s323 = sphi 0, %s322
      %s339 = sphi 0, %s323
      %s343 = sphi 0, %s343
      %s345 = sphi 0, %s343
      %s346 = sphi 0, %s345
      %s360 = sphi 0, %s346
      %s364 = sphi 0, %s364
      %s366 = sphi 0, %s364
      %s367 = sphi 0, %s366
      %s381 = sphi 0, %s367
      %s385 = sphi 0, %s385
      %s387 = sphi 0, %s385
      %s388 = sphi 0, %s387
      %s402 = sphi 0, %s388
      %s406 = sphi 0, %s406
      %s408 = sphi 0, %s406
      %s409 = sphi 0, %s408
      %s423 = sphi 0, %s409
      %s427 = sphi 0, %s427
      %s429 = sphi 0, %s427
      %s430 = sphi 0, %s429
      %s444 = sphi 0, %s430
      %s448 = sphi 0, %s448
      %s450 = sphi 0, %s448
      %s451 = sphi 0, %s450
      %s465 = sphi 0, %s451
      %s469 = sphi 0, %s469
      %s471 = sphi 0, %s469
      %s472 = sphi 0, %s471
      %s486 = sphi 0, %s472
      %s490 = sphi 0, %s490
      %s492 = sphi 0, %s490
      %s493 = sphi 0, %s492
      %s507 = sphi 0, %s493
      %s513 = sphi 0, %s515
      %s516 = sphi 0, %s513
      %s517 = sphi 0, %s516
      %s533 = sphi 0, %s517
      %s539 = sphi 0, %s541
      %s542 = sphi 0, %s539
      %s543 = sphi 0, %s542
      %s559 = sphi 0, %s543
      %s565 = sphi 0, %s567
      %s568 = sphi 0, %s565
      %s569 = sphi 0, %s568
      %s585 = sphi 0, %s569
      %s591 = sphi 0, %s593
      %s594 = sphi 0, %s591
      %s595 = sphi 0, %s594
      %s611 = sphi 0, %s595
    $region4: #{_run_episode_jit.4} parent=1 // loop_header_branch
      %51 = sbr.rel (%p49) target = $region8
    $region5: #{_run_episode_jit.4} parent=1 // loop_body
      %s53 = ssub.s32 %s48, 1
      %s54 = ssub.s32 %s48, 2
      %s55 = sadd.s32 %s48, 1
      %s57 = sadd.s32 %s56, 1
      %p60 = scmp.eq.s32.totalorder %s48, 1
      %p61 = scmp.ne.s32.totalorder %s56, %s58
      %p62 = scmp.eq.s32.totalorder %s48, 0
      %p63 = por %p61, %p62
      %p64 = scmp.ne.s32.totalorder %s56, %s58
      %p65 = scmp.eq.s32.totalorder %s53, 1
      %p66 = por %p64, %p65
      %p67 = scmp.ne.s32.totalorder %s58, %s59
      %p68 = scmp.eq.s32.totalorder %s53, 0
      %p69 = por %p67, %p68
      %p70 = scmp.ne.s32.totalorder %s58, %s59
      %p71 = scmp.eq.s32.totalorder %s54, 1
      %p72 = por %p70, %p71
      %p74 = scmp.ne.s32.totalorder %s59, %s73
      %p75 = scmp.eq.s32.totalorder %s54, 0
      %p76 = por %p74, %p75
      %s78 = sadd.s32 %s77, 1
      %p81 = scmp.eq.s32.totalorder %s48, 1
      %p82 = scmp.ne.s32.totalorder %s77, %s79
      %p83 = scmp.eq.s32.totalorder %s48, 0
      %p84 = por %p82, %p83
      %p85 = scmp.ne.s32.totalorder %s77, %s79
      %p86 = scmp.eq.s32.totalorder %s53, 1
      %p87 = por %p85, %p86
      %p88 = scmp.ne.s32.totalorder %s79, %s80
      %p89 = scmp.eq.s32.totalorder %s53, 0
      %p90 = por %p88, %p89
      %p91 = scmp.ne.s32.totalorder %s79, %s80
      %p92 = scmp.eq.s32.totalorder %s54, 1
      %p93 = por %p91, %p92
      %p95 = scmp.ne.s32.totalorder %s80, %s94
      %p96 = scmp.eq.s32.totalorder %s54, 0
      %p97 = por %p95, %p96
      %s99 = sadd.s32 %s98, 1
      %p102 = scmp.eq.s32.totalorder %s48, 1
      %p103 = scmp.ne.s32.totalorder %s98, %s100
      %p104 = scmp.eq.s32.totalorder %s48, 0
      %p105 = por %p103, %p104
      %p106 = scmp.ne.s32.totalorder %s98, %s100
      %p107 = scmp.eq.s32.totalorder %s53, 1
      %p108 = por %p106, %p107
      %p109 = scmp.ne.s32.totalorder %s100, %s101
      %p110 = scmp.eq.s32.totalorder %s53, 0
      %p111 = por %p109, %p110
      %p112 = scmp.ne.s32.totalorder %s100, %s101
      %p113 = scmp.eq.s32.totalorder %s54, 1
      %p114 = por %p112, %p113
      %p116 = scmp.ne.s32.totalorder %s101, %s115
      %p117 = scmp.eq.s32.totalorder %s54, 0
      %p118 = por %p116, %p117
      %s120 = sadd.s32 %s119, 1
      %p123 = scmp.eq.s32.totalorder %s48, 1
      %p124 = scmp.ne.s32.totalorder %s119, %s121
      %p125 = scmp.eq.s32.totalorder %s48, 0
      %p126 = por %p124, %p125
      %p127 = scmp.ne.s32.totalorder %s119, %s121
      %p128 = scmp.eq.s32.totalorder %s53, 1
      %p129 = por %p127, %p128
      %p130 = scmp.ne.s32.totalorder %s121, %s122
      %p131 = scmp.eq.s32.totalorder %s53, 0
      %p132 = por %p130, %p131
      %p133 = scmp.ne.s32.totalorder %s121, %s122
      %p134 = scmp.eq.s32.totalorder %s54, 1
      %p135 = por %p133, %p134
      %p137 = scmp.ne.s32.totalorder %s122, %s136
      %p138 = scmp.eq.s32.totalorder %s54, 0
      %p139 = por %p137, %p138
      %s140 = ssub.s32 %s48, %s55
      %p141 = scmp.eq.s32.totalorder %s140, 0
      %s143 = sadd.s32 %s142, 1
      %s144 = scalar_select %p141, %s142, %s143
      %p147 = pneg %p141
      %p148 = scmp.eq.s32.totalorder %s48, 1
      %p149 = por %p147, %p148
      %p150 = scmp.ne.s32.totalorder %s142, %s145
      %p151 = scmp.eq.s32.totalorder %s48, 0
      %p152 = por %p150, %p151
      %p153 = scmp.ne.s32.totalorder %s142, %s145
      %p154 = scmp.eq.s32.totalorder %s53, 1
      %p155 = por %p153, %p154
      %p156 = scmp.ne.s32.totalorder %s145, %s146
      %p157 = scmp.eq.s32.totalorder %s53, 0
      %p158 = por %p156, %p157
      %p159 = scmp.ne.s32.totalorder %s145, %s146
      %p160 = scmp.eq.s32.totalorder %s54, 1
      %p161 = por %p159, %p160
      %p163 = scmp.ne.s32.totalorder %s146, %s162
      %p164 = scmp.eq.s32.totalorder %s54, 0
      %p165 = por %p163, %p164
      %s166 = ssub.s32 %s48, %s55
      %p167 = scmp.eq.s32.totalorder %s166, 0
      %s169 = sadd.s32 %s168, 1
      %s170 = scalar_select %p167, %s168, %s169
      %p173 = pneg %p167
      %p174 = scmp.eq.s32.totalorder %s48, 1
      %p175 = por %p173, %p174
      %p176 = scmp.ne.s32.totalorder %s168, %s171
      %p177 = scmp.eq.s32.totalorder %s48, 0
      %p178 = por %p176, %p177
      %p179 = scmp.ne.s32.totalorder %s168, %s171
      %p180 = scmp.eq.s32.totalorder %s53, 1
      %p181 = por %p179, %p180
      %p182 = scmp.ne.s32.totalorder %s171, %s172
      %p183 = scmp.eq.s32.totalorder %s53, 0
      %p184 = por %p182, %p183
      %p185 = scmp.ne.s32.totalorder %s171, %s172
      %p186 = scmp.eq.s32.totalorder %s54, 1
      %p187 = por %p185, %p186
      %p189 = scmp.ne.s32.totalorder %s172, %s188
      %p190 = scmp.eq.s32.totalorder %s54, 0
      %p191 = por %p189, %p190
      %s192 = ssub.s32 %s48, %s55
      %p193 = scmp.eq.s32.totalorder %s192, 0
      %s195 = sadd.s32 %s194, 1
      %s196 = scalar_select %p193, %s194, %s195
      %p199 = pneg %p193
      %p200 = scmp.eq.s32.totalorder %s48, 1
      %p201 = por %p199, %p200
      %p202 = scmp.ne.s32.totalorder %s194, %s197
      %p203 = scmp.eq.s32.totalorder %s48, 0
      %p204 = por %p202, %p203
      %p205 = scmp.ne.s32.totalorder %s194, %s197
      %p206 = scmp.eq.s32.totalorder %s53, 1
      %p207 = por %p205, %p206
      %p208 = scmp.ne.s32.totalorder %s197, %s198
      %p209 = scmp.eq.s32.totalorder %s53, 0
      %p210 = por %p208, %p209
      %p211 = scmp.ne.s32.totalorder %s197, %s198
      %p212 = scmp.eq.s32.totalorder %s54, 1
      %p213 = por %p211, %p212
      %p215 = scmp.ne.s32.totalorder %s198, %s214
      %p216 = scmp.eq.s32.totalorder %s54, 0
      %p217 = por %p215, %p216
      %s219 = sadd.s32 %s218, 1
      %p222 = scmp.eq.s32.totalorder %s48, 1
      %p223 = scmp.ne.s32.totalorder %s218, %s220
      %p224 = scmp.eq.s32.totalorder %s48, 0
      %p225 = por %p223, %p224
      %p226 = scmp.ne.s32.totalorder %s218, %s220
      %p227 = scmp.eq.s32.totalorder %s53, 1
      %p228 = por %p226, %p227
      %p229 = scmp.ne.s32.totalorder %s220, %s221
      %p230 = scmp.eq.s32.totalorder %s53, 0
      %p231 = por %p229, %p230
      %p232 = scmp.ne.s32.totalorder %s220, %s221
      %p233 = scmp.eq.s32.totalorder %s54, 1
      %p234 = por %p232, %p233
      %p236 = scmp.ne.s32.totalorder %s221, %s235
      %p237 = scmp.eq.s32.totalorder %s54, 0
      %p238 = por %p236, %p237
      %s239 = ssub.s32 %s48, %s55
      %p240 = scmp.eq.s32.totalorder %s239, 0
      %s242 = sadd.s32 %s241, 1
      %s243 = scalar_select %p240, %s241, %s242
      %p246 = pneg %p240
      %p247 = scmp.eq.s32.totalorder %s48, 1
      %p248 = por %p246, %p247
      %p249 = scmp.ne.s32.totalorder %s241, %s244
      %p250 = scmp.eq.s32.totalorder %s48, 0
      %p251 = por %p249, %p250
      %p252 = scmp.ne.s32.totalorder %s241, %s244
      %p253 = scmp.eq.s32.totalorder %s53, 1
      %p254 = por %p252, %p253
      %p255 = scmp.ne.s32.totalorder %s244, %s245
      %p256 = scmp.eq.s32.totalorder %s53, 0
      %p257 = por %p255, %p256
      %p258 = scmp.ne.s32.totalorder %s244, %s245
      %p259 = scmp.eq.s32.totalorder %s54, 1
      %p260 = por %p258, %p259
      %p262 = scmp.ne.s32.totalorder %s245, %s261
      %p263 = scmp.eq.s32.totalorder %s54, 0
      %p264 = por %p262, %p263
      %s265 = ssub.s32 %s48, %s55
      %p266 = scmp.eq.s32.totalorder %s265, 0
      %s268 = sadd.s32 %s267, 1
      %s269 = scalar_select %p266, %s267, %s268
      %p272 = pneg %p266
      %p273 = scmp.eq.s32.totalorder %s48, 1
      %p274 = por %p272, %p273
      %p275 = scmp.ne.s32.totalorder %s267, %s270
      %p276 = scmp.eq.s32.totalorder %s48, 0
      %p277 = por %p275, %p276
      %p278 = scmp.ne.s32.totalorder %s267, %s270
      %p279 = scmp.eq.s32.totalorder %s53, 1
      %p280 = por %p278, %p279
      %p281 = scmp.ne.s32.totalorder %s270, %s271
      %p282 = scmp.eq.s32.totalorder %s53, 0
      %p283 = por %p281, %p282
      %p284 = scmp.ne.s32.totalorder %s270, %s271
      %p285 = scmp.eq.s32.totalorder %s54, 1
      %p286 = por %p284, %p285
      %p288 = scmp.ne.s32.totalorder %s271, %s287
      %p289 = scmp.eq.s32.totalorder %s54, 0
      %p290 = por %p288, %p289
      %s291 = ssub.s32 %s48, %s55
      %p292 = scmp.eq.s32.totalorder %s291, 0
      %s294 = sadd.s32 %s293, 1
      %s295 = scalar_select %p292, %s293, %s294
      %p298 = pneg %p292
      %p299 = scmp.eq.s32.totalorder %s48, 1
      %p300 = por %p298, %p299
      %p301 = scmp.ne.s32.totalorder %s293, %s296
      %p302 = scmp.eq.s32.totalorder %s48, 0
      %p303 = por %p301, %p302
      %p304 = scmp.ne.s32.totalorder %s293, %s296
      %p305 = scmp.eq.s32.totalorder %s53, 1
      %p306 = por %p304, %p305
      %p307 = scmp.ne.s32.totalorder %s296, %s297
      %p308 = scmp.eq.s32.totalorder %s53, 0
      %p309 = por %p307, %p308
      %p310 = scmp.ne.s32.totalorder %s296, %s297
      %p311 = scmp.eq.s32.totalorder %s54, 1
      %p312 = por %p310, %p311
      %p314 = scmp.ne.s32.totalorder %s297, %s313
      %p315 = scmp.eq.s32.totalorder %s54, 0
      %p316 = por %p314, %p315
      %s317 = ssub.s32 %s48, %s55
      %p318 = scmp.eq.s32.totalorder %s317, 0
      %s320 = sadd.s32 %s319, 1
      %s321 = scalar_select %p318, %s319, %s320
      %p324 = pneg %p318
      %p325 = scmp.eq.s32.totalorder %s48, 1
      %p326 = por %p324, %p325
      %p327 = scmp.ne.s32.totalorder %s319, %s322
      %p328 = scmp.eq.s32.totalorder %s48, 0
      %p329 = por %p327, %p328
      %p330 = scmp.ne.s32.totalorder %s319, %s322
      %p331 = scmp.eq.s32.totalorder %s53, 1
      %p332 = por %p330, %p331
      %p333 = scmp.ne.s32.totalorder %s322, %s323
      %p334 = scmp.eq.s32.totalorder %s53, 0
      %p335 = por %p333, %p334
      %p336 = scmp.ne.s32.totalorder %s322, %s323
      %p337 = scmp.eq.s32.totalorder %s54, 1
      %p338 = por %p336, %p337
      %p340 = scmp.ne.s32.totalorder %s323, %s339
      %p341 = scmp.eq.s32.totalorder %s54, 0
      %p342 = por %p340, %p341
      %s344 = sadd.s32 %s343, 1
      %p347 = scmp.eq.s32.totalorder %s48, 1
      %p348 = scmp.ne.s32.totalorder %s343, %s345
      %p349 = scmp.eq.s32.totalorder %s48, 0
      %p350 = por %p348, %p349
      %p351 = scmp.ne.s32.totalorder %s343, %s345
      %p352 = scmp.eq.s32.totalorder %s53, 1
      %p353 = por %p351, %p352
      %p354 = scmp.ne.s32.totalorder %s345, %s346
      %p355 = scmp.eq.s32.totalorder %s53, 0
      %p356 = por %p354, %p355
      %p357 = scmp.ne.s32.totalorder %s345, %s346
      %p358 = scmp.eq.s32.totalorder %s54, 1
      %p359 = por %p357, %p358
      %p361 = scmp.ne.s32.totalorder %s346, %s360
      %p362 = scmp.eq.s32.totalorder %s54, 0
      %p363 = por %p361, %p362
      %s365 = sadd.s32 %s364, 1
      %p368 = scmp.eq.s32.totalorder %s48, 1
      %p369 = scmp.ne.s32.totalorder %s364, %s366
      %p370 = scmp.eq.s32.totalorder %s48, 0
      %p371 = por %p369, %p370
      %p372 = scmp.ne.s32.totalorder %s364, %s366
      %p373 = scmp.eq.s32.totalorder %s53, 1
      %p374 = por %p372, %p373
      %p375 = scmp.ne.s32.totalorder %s366, %s367
      %p376 = scmp.eq.s32.totalorder %s53, 0
      %p377 = por %p375, %p376
      %p378 = scmp.ne.s32.totalorder %s366, %s367
      %p379 = scmp.eq.s32.totalorder %s54, 1
      %p380 = por %p378, %p379
      %p382 = scmp.ne.s32.totalorder %s367, %s381
      %p383 = scmp.eq.s32.totalorder %s54, 0
      %p384 = por %p382, %p383
      %s386 = sadd.s32 %s385, 1
      %p389 = scmp.eq.s32.totalorder %s48, 1
      %p390 = scmp.ne.s32.totalorder %s385, %s387
      %p391 = scmp.eq.s32.totalorder %s48, 0
      %p392 = por %p390, %p391
      %p393 = scmp.ne.s32.totalorder %s385, %s387
      %p394 = scmp.eq.s32.totalorder %s53, 1
      %p395 = por %p393, %p394
      %p396 = scmp.ne.s32.totalorder %s387, %s388
      %p397 = scmp.eq.s32.totalorder %s53, 0
      %p398 = por %p396, %p397
      %p399 = scmp.ne.s32.totalorder %s387, %s388
      %p400 = scmp.eq.s32.totalorder %s54, 1
      %p401 = por %p399, %p400
      %p403 = scmp.ne.s32.totalorder %s388, %s402
      %p404 = scmp.eq.s32.totalorder %s54, 0
      %p405 = por %p403, %p404
      %s407 = sadd.s32 %s406, 1
      %p410 = scmp.eq.s32.totalorder %s48, 1
      %p411 = scmp.ne.s32.totalorder %s406, %s408
      %p412 = scmp.eq.s32.totalorder %s48, 0
      %p413 = por %p411, %p412
      %p414 = scmp.ne.s32.totalorder %s406, %s408
      %p415 = scmp.eq.s32.totalorder %s53, 1
      %p416 = por %p414, %p415
      %p417 = scmp.ne.s32.totalorder %s408, %s409
      %p418 = scmp.eq.s32.totalorder %s53, 0
      %p419 = por %p417, %p418
      %p420 = scmp.ne.s32.totalorder %s408, %s409
      %p421 = scmp.eq.s32.totalorder %s54, 1
      %p422 = por %p420, %p421
      %p424 = scmp.ne.s32.totalorder %s409, %s423
      %p425 = scmp.eq.s32.totalorder %s54, 0
      %p426 = por %p424, %p425
      %s428 = sadd.s32 %s427, 1
      %p431 = scmp.eq.s32.totalorder %s48, 1
      %p432 = scmp.ne.s32.totalorder %s427, %s429
      %p433 = scmp.eq.s32.totalorder %s48, 0
      %p434 = por %p432, %p433
      %p435 = scmp.ne.s32.totalorder %s427, %s429
      %p436 = scmp.eq.s32.totalorder %s53, 1
      %p437 = por %p435, %p436
      %p438 = scmp.ne.s32.totalorder %s429, %s430
      %p439 = scmp.eq.s32.totalorder %s53, 0
      %p440 = por %p438, %p439
      %p441 = scmp.ne.s32.totalorder %s429, %s430
      %p442 = scmp.eq.s32.totalorder %s54, 1
      %p443 = por %p441, %p442
      %p445 = scmp.ne.s32.totalorder %s430, %s444
      %p446 = scmp.eq.s32.totalorder %s54, 0
      %p447 = por %p445, %p446
      %s449 = sadd.s32 %s448, 1
      %p452 = scmp.eq.s32.totalorder %s48, 1
      %p453 = scmp.ne.s32.totalorder %s448, %s450
      %p454 = scmp.eq.s32.totalorder %s48, 0
      %p455 = por %p453, %p454
      %p456 = scmp.ne.s32.totalorder %s448, %s450
      %p457 = scmp.eq.s32.totalorder %s53, 1
      %p458 = por %p456, %p457
      %p459 = scmp.ne.s32.totalorder %s450, %s451
      %p460 = scmp.eq.s32.totalorder %s53, 0
      %p461 = por %p459, %p460
      %p462 = scmp.ne.s32.totalorder %s450, %s451
      %p463 = scmp.eq.s32.totalorder %s54, 1
      %p464 = por %p462, %p463
      %p466 = scmp.ne.s32.totalorder %s451, %s465
      %p467 = scmp.eq.s32.totalorder %s54, 0
      %p468 = por %p466, %p467
      %s470 = sadd.s32 %s469, 1
      %p473 = scmp.eq.s32.totalorder %s48, 1
      %p474 = scmp.ne.s32.totalorder %s469, %s471
      %p475 = scmp.eq.s32.totalorder %s48, 0
      %p476 = por %p474, %p475
      %p477 = scmp.ne.s32.totalorder %s469, %s471
      %p478 = scmp.eq.s32.totalorder %s53, 1
      %p479 = por %p477, %p478
      %p480 = scmp.ne.s32.totalorder %s471, %s472
      %p481 = scmp.eq.s32.totalorder %s53, 0
      %p482 = por %p480, %p481
      %p483 = scmp.ne.s32.totalorder %s471, %s472
      %p484 = scmp.eq.s32.totalorder %s54, 1
      %p485 = por %p483, %p484
      %p487 = scmp.ne.s32.totalorder %s472, %s486
      %p488 = scmp.eq.s32.totalorder %s54, 0
      %p489 = por %p487, %p488
      %s491 = sadd.s32 %s490, 1
      %p494 = scmp.eq.s32.totalorder %s48, 1
      %p495 = scmp.ne.s32.totalorder %s490, %s492
      %p496 = scmp.eq.s32.totalorder %s48, 0
      %p497 = por %p495, %p496
      %p498 = scmp.ne.s32.totalorder %s490, %s492
      %p499 = scmp.eq.s32.totalorder %s53, 1
      %p500 = por %p498, %p499
      %p501 = scmp.ne.s32.totalorder %s492, %s493
      %p502 = scmp.eq.s32.totalorder %s53, 0
      %p503 = por %p501, %p502
      %p504 = scmp.ne.s32.totalorder %s492, %s493
      %p505 = scmp.eq.s32.totalorder %s54, 1
      %p506 = por %p504, %p505
      %p508 = scmp.ne.s32.totalorder %s493, %s507
      %p509 = scmp.eq.s32.totalorder %s54, 0
      %p510 = por %p508, %p509
      %s511 = ssub.s32 %s48, %s55
      %p512 = scmp.eq.s32.totalorder %s511, 0
      %s514 = sadd.s32 %s513, 1
      %s515 = scalar_select %p512, %s513, %s514
      %p518 = pneg %p512
      %p519 = scmp.eq.s32.totalorder %s48, 1
      %p520 = por %p518, %p519
      %p521 = scmp.ne.s32.totalorder %s513, %s516
      %p522 = scmp.eq.s32.totalorder %s48, 0
      %p523 = por %p521, %p522
      %p524 = scmp.ne.s32.totalorder %s513, %s516
      %p525 = scmp.eq.s32.totalorder %s53, 1
      %p526 = por %p524, %p525
      %p527 = scmp.ne.s32.totalorder %s516, %s517
      %p528 = scmp.eq.s32.totalorder %s53, 0
      %p529 = por %p527, %p528
      %p530 = scmp.ne.s32.totalorder %s516, %s517
      %p531 = scmp.eq.s32.totalorder %s54, 1
      %p532 = por %p530, %p531
      %p534 = scmp.ne.s32.totalorder %s517, %s533
      %p535 = scmp.eq.s32.totalorder %s54, 0
      %p536 = por %p534, %p535
      %s537 = ssub.s32 %s48, %s55
      %p538 = scmp.eq.s32.totalorder %s537, 0
      %s540 = sadd.s32 %s539, 1
      %s541 = scalar_select %p538, %s539, %s540
      %p544 = pneg %p538
      %p545 = scmp.eq.s32.totalorder %s48, 1
      %p546 = por %p544, %p545
      %p547 = scmp.ne.s32.totalorder %s539, %s542
      %p548 = scmp.eq.s32.totalorder %s48, 0
      %p549 = por %p547, %p548
      %p550 = scmp.ne.s32.totalorder %s539, %s542
      %p551 = scmp.eq.s32.totalorder %s53, 1
      %p552 = por %p550, %p551
      %p553 = scmp.ne.s32.totalorder %s542, %s543
      %p554 = scmp.eq.s32.totalorder %s53, 0
      %p555 = por %p553, %p554
      %p556 = scmp.ne.s32.totalorder %s542, %s543
      %p557 = scmp.eq.s32.totalorder %s54, 1
      %p558 = por %p556, %p557
      %p560 = scmp.ne.s32.totalorder %s543, %s559
      %p561 = scmp.eq.s32.totalorder %s54, 0
      %p562 = por %p560, %p561
      %s563 = ssub.s32 %s48, %s55
      %p564 = scmp.eq.s32.totalorder %s563, 0
      %s566 = sadd.s32 %s565, 1
      %s567 = scalar_select %p564, %s565, %s566
      %p570 = pneg %p564
      %p571 = scmp.eq.s32.totalorder %s48, 1
      %p572 = por %p570, %p571
      %p573 = scmp.ne.s32.totalorder %s565, %s568
      %p574 = scmp.eq.s32.totalorder %s48, 0
      %p575 = por %p573, %p574
      %p576 = scmp.ne.s32.totalorder %s565, %s568
      %p577 = scmp.eq.s32.totalorder %s53, 1
      %p578 = por %p576, %p577
      %p579 = scmp.ne.s32.totalorder %s568, %s569
      %p580 = scmp.eq.s32.totalorder %s53, 0
      %p581 = por %p579, %p580
      %p582 = scmp.ne.s32.totalorder %s568, %s569
      %p583 = scmp.eq.s32.totalorder %s54, 1
      %p584 = por %p582, %p583
      %p586 = scmp.ne.s32.totalorder %s569, %s585
      %p587 = scmp.eq.s32.totalorder %s54, 0
      %p588 = por %p586, %p587
      %s589 = ssub.s32 %s48, %s55
      %p590 = scmp.eq.s32.totalorder %s589, 0
      %s592 = sadd.s32 %s591, 1
      %s593 = scalar_select %p590, %s591, %s592
      %p596 = pneg %p590
      %p597 = scmp.eq.s32.totalorder %s48, 1
      %p598 = por %p596, %p597
      %p599 = scmp.ne.s32.totalorder %s591, %s594
      %p600 = scmp.eq.s32.totalorder %s48, 0
      %p601 = por %p599, %p600
      %p602 = scmp.ne.s32.totalorder %s591, %s594
      %p603 = scmp.eq.s32.totalorder %s53, 1
      %p604 = por %p602, %p603
      %p605 = scmp.ne.s32.totalorder %s594, %s595
      %p606 = scmp.eq.s32.totalorder %s53, 0
      %p607 = por %p605, %p606
      %p608 = scmp.ne.s32.totalorder %s594, %s595
      %p609 = scmp.eq.s32.totalorder %s54, 1
      %p610 = por %p608, %p609
      %p612 = scmp.ne.s32.totalorder %s595, %s611
      %p613 = scmp.eq.s32.totalorder %s54, 0
      %p614 = por %p612, %p613
      %p615 = scmp.le.s32.totalorder 1, %s48
      %p616 = scmp.lt.s32.totalorder %s48, 3
      %p617 = pnand %p615, %p616
      %p618 = pneg %p617
      // Predicated region
      $region9: #{_run_episode_jit.4} parent=5 // pred_check
        _
      $region10: #{_run_episode_jit.4} parent=5 // pred_check_branch
        %620 = sbr.rel (%p617) target = $region12
      $region11: #{_run_episode_jit.4} parent=5 // pred_region
        %s621 = ssub.s32 %s48, 1
        // Predicated region
        $region13: #{_run_episode_jit.4} parent=11 // pred_check
          %p622 = pneg %p69
        $region14: #{_run_episode_jit.4} parent=11 // pred_check_branch
          %624 = sbr.rel (%p622) target = $region16
        $region15: #{_run_episode_jit.4} parent=11 // pred_region
          %626 = vsyncadd [#allocation7], 0
          %s628 = sshll.u32 %s1, 4
          %s629 = int_to_ptr.vmem [resolvable:$true] %s628
          %631 = dma.vmem_to_smem %s629, 16, [#allocation5], [#allocation7]
        $region16: #{_run_episode_jit.4} parent=11 // pred_fallthru
          _
        // Predicated region
        $region17: #{_run_episode_jit.4} parent=11 // pred_check
          %p632 = pneg %p90
        $region18: #{_run_episode_jit.4} parent=11 // pred_check_branch
          %634 = sbr.rel (%p632) target = $region20
        $region19: #{_run_episode_jit.4} parent=11 // pred_region
          _
        $region20: #{_run_episode_jit.4} parent=11 // pred_fallthru
          _
        // Predicated region
        $region21: #{_run_episode_jit.4} parent=11 // pred_check
          %p635 = pneg %p111
        $region22: #{_run_episode_jit.4} parent=11 // pred_check_branch
          %637 = sbr.rel (%p635) target = $region24
        $region23: #{_run_episode_jit.4} parent=11 // pred_region
          %639 = vsyncadd [#allocation9], 0
          %s641 = sshll.u32 %s3, 4
          %s642 = int_to_ptr.vmem [resolvable:$true] %s641
          %644 = dma.vmem_to_smem %s642, 16, [#allocation8], [#allocation9]
        $region24: #{_run_episode_jit.4} parent=11 // pred_fallthru
          _
        // Predicated region
        $region25: #{_run_episode_jit.4} parent=11 // pred_check
          %p645 = pneg %p132
        $region26: #{_run_episode_jit.4} parent=11 // pred_check_branch
          %647 = sbr.rel (%p645) target = $region28
        $region27: #{_run_episode_jit.4} parent=11 // pred_region
          %649 = vsyncadd [#allocation9], 0
          %s651 = sshll.u32 %s4, 4
          %s652 = int_to_ptr.vmem [resolvable:$true] %s651
          %654 = dma.vmem_to_smem %s652, 16, [#allocation10], [#allocation9]
        $region28: #{_run_episode_jit.4} parent=11 // pred_fallthru
          _
        // Predicated region
        $region29: #{_run_episode_jit.4} parent=11 // pred_check
          %p655 = pneg %p231
        $region30: #{_run_episode_jit.4} parent=11 // pred_check_branch
          %657 = sbr.rel (%p655) target = $region32
        $region31: #{_run_episode_jit.4} parent=11 // pred_region
          _
        $region32: #{_run_episode_jit.4} parent=11 // pred_fallthru
          _
        // Predicated region
        $region33: #{_run_episode_jit.4} parent=11 // pred_check
          %p658 = pneg %p356
        $region34: #{_run_episode_jit.4} parent=11 // pred_check_branch
          %660 = sbr.rel (%p658) target = $region36
        $region35: #{_run_episode_jit.4} parent=11 // pred_region
          _
        $region36: #{_run_episode_jit.4} parent=11 // pred_fallthru
          _
        // Predicated region
        $region37: #{_run_episode_jit.4} parent=11 // pred_check
          %p661 = pneg %p377
        $region38: #{_run_episode_jit.4} parent=11 // pred_check_branch
          %663 = sbr.rel (%p661) target = $region40
        $region39: #{_run_episode_jit.4} parent=11 // pred_region
          _
        $region40: #{_run_episode_jit.4} parent=11 // pred_fallthru
          _
        // Predicated region
        $region41: #{_run_episode_jit.4} parent=11 // pred_check
          %p664 = pneg %p398
        $region42: #{_run_episode_jit.4} parent=11 // pred_check_branch
          %666 = sbr.rel (%p664) target = $region44
        $region43: #{_run_episode_jit.4} parent=11 // pred_region
          _
        $region44: #{_run_episode_jit.4} parent=11 // pred_fallthru
          _
        // Predicated region
        $region45: #{_run_episode_jit.4} parent=11 // pred_check
          %p667 = pneg %p419
        $region46: #{_run_episode_jit.4} parent=11 // pred_check_branch
          %669 = sbr.rel (%p667) target = $region48
        $region47: #{_run_episode_jit.4} parent=11 // pred_region
          _
        $region48: #{_run_episode_jit.4} parent=11 // pred_fallthru
          _
        // Predicated region
        $region49: #{_run_episode_jit.4} parent=11 // pred_check
          %p670 = pneg %p440
        $region50: #{_run_episode_jit.4} parent=11 // pred_check_branch
          %672 = sbr.rel (%p670) target = $region52
        $region51: #{_run_episode_jit.4} parent=11 // pred_region
          _
        $region52: #{_run_episode_jit.4} parent=11 // pred_fallthru
          _
        // Predicated region
        $region53: #{_run_episode_jit.4} parent=11 // pred_check
          %p673 = pneg %p461
        $region54: #{_run_episode_jit.4} parent=11 // pred_check_branch
          %675 = sbr.rel (%p673) target = $region56
        $region55: #{_run_episode_jit.4} parent=11 // pred_region
          _
        $region56: #{_run_episode_jit.4} parent=11 // pred_fallthru
          _
        // Predicated region
        $region57: #{_run_episode_jit.4} parent=11 // pred_check
          %p676 = pneg %p482
        $region58: #{_run_episode_jit.4} parent=11 // pred_check_branch
          %678 = sbr.rel (%p676) target = $region60
        $region59: #{_run_episode_jit.4} parent=11 // pred_region
          _
        $region60: #{_run_episode_jit.4} parent=11 // pred_fallthru
          _
        // Predicated region
        $region61: #{_run_episode_jit.4} parent=11 // pred_check
          %p679 = pneg %p503
        $region62: #{_run_episode_jit.4} parent=11 // pred_check_branch
          %681 = sbr.rel (%p679) target = $region64
        $region63: #{_run_episode_jit.4} parent=11 // pred_region
          _
        $region64: #{_run_episode_jit.4} parent=11 // pred_fallthru
          _
      $region12: #{_run_episode_jit.4} parent=5 // pred_fallthru
        _
      %p682 = scmp.lt.s32.totalorder %s48, 2
      // Predicated region
      $region65: #{_run_episode_jit.4} parent=5 // pred_check
        %p683 = pneg %p682
      $region66: #{_run_episode_jit.4} parent=5 // pred_check_branch
        %685 = sbr.rel (%p683) target = $region68
      $region67: #{_run_episode_jit.4} parent=5 // pred_region
        // Predicated region
        $region69: #{_run_episode_jit.4} parent=67 // pred_check
          %p686 = pneg %p152
        $region70: #{_run_episode_jit.4} parent=67 // pred_check_branch
          %688 = sbr.rel (%p686) target = $region72
        $region71: #{_run_episode_jit.4} parent=67 // pred_region
          %p689 = scmp.lt.s32.totalorder %s48, 1
          %s690 = scalar_select %p689, %s48, 1
          %s691 = smul.addr %s690, 8
          %s692 = scalar_lea.vmem %s5, %s691
        $region72: #{_run_episode_jit.4} parent=67 // pred_fallthru
          _
        // Predicated region
        $region73: #{_run_episode_jit.4} parent=67 // pred_check
          %p693 = pneg %p178
        $region74: #{_run_episode_jit.4} parent=67 // pred_check_branch
          %695 = sbr.rel (%p693) target = $region76
        $region75: #{_run_episode_jit.4} parent=67 // pred_region
          %p696 = scmp.lt.s32.totalorder %s48, 1
          %s697 = scalar_select %p696, %s48, 1
          %s698 = smul.addr %s697, 8
          %s699 = scalar_lea.vmem %s6, %s698
        $region76: #{_run_episode_jit.4} parent=67 // pred_fallthru
          _
        // Predicated region
        $region77: #{_run_episode_jit.4} parent=67 // pred_check
          %p700 = pneg %p204
        $region78: #{_run_episode_jit.4} parent=67 // pred_check_branch
          %702 = sbr.rel (%p700) target = $region80
        $region79: #{_run_episode_jit.4} parent=67 // pred_region
          %p703 = scmp.lt.s32.totalorder %s48, 1
          %s704 = scalar_select %p703, %s48, 1
          %s705 = scalar_lea.vmem %s7, %s704
        $region80: #{_run_episode_jit.4} parent=67 // pred_fallthru
          _
        // Predicated region
        $region81: #{_run_episode_jit.4} parent=67 // pred_check
          %p706 = pneg %p251
        $region82: #{_run_episode_jit.4} parent=67 // pred_check_branch
          %708 = sbr.rel (%p706) target = $region84
        $region83: #{_run_episode_jit.4} parent=67 // pred_region
          %p709 = scmp.lt.s32.totalorder %s48, 1
          %s710 = scalar_select %p709, %s48, 1
          %s711 = smul.addr %s710, 8
          %s712 = scalar_lea.vmem %s9, %s711
        $region84: #{_run_episode_jit.4} parent=67 // pred_fallthru
          _
        // Predicated region
        $region85: #{_run_episode_jit.4} parent=67 // pred_check
          %p713 = pneg %p277
        $region86: #{_run_episode_jit.4} parent=67 // pred_check_branch
          %715 = sbr.rel (%p713) target = $region88
        $region87: #{_run_episode_jit.4} parent=67 // pred_region
          %p716 = scmp.lt.s32.totalorder %s48, 1
          %s717 = scalar_select %p716, %s48, 1
          %s718 = smul.addr %s717, 8
          %s719 = scalar_lea.vmem %s10, %s718
        $region88: #{_run_episode_jit.4} parent=67 // pred_fallthru
          _
        // Predicated region
        $region89: #{_run_episode_jit.4} parent=67 // pred_check
          %p720 = pneg %p303
        $region90: #{_run_episode_jit.4} parent=67 // pred_check_branch
          %722 = sbr.rel (%p720) target = $region92
        $region91: #{_run_episode_jit.4} parent=67 // pred_region
          %p723 = scmp.lt.s32.totalorder %s48, 1
          %s724 = scalar_select %p723, %s48, 1
          %s725 = scalar_lea.vmem %s11, %s724
        $region92: #{_run_episode_jit.4} parent=67 // pred_fallthru
          _
        // Predicated region
        $region93: #{_run_episode_jit.4} parent=67 // pred_check
          %p726 = pneg %p329
        $region94: #{_run_episode_jit.4} parent=67 // pred_check_branch
          %728 = sbr.rel (%p726) target = $region96
        $region95: #{_run_episode_jit.4} parent=67 // pred_region
          %p729 = scmp.lt.s32.totalorder %s48, 1
          %s730 = scalar_select %p729, %s48, 1
          %s731 = scalar_lea.vmem %s12, %s730
        $region96: #{_run_episode_jit.4} parent=67 // pred_fallthru
          _
      $region68: #{_run_episode_jit.4} parent=5 // pred_fallthru
        _
      %p732 = scmp.le.s32.totalorder 1, %s48
      %p733 = scmp.lt.s32.totalorder %s48, 3
      %p734 = pnand %p732, %p733
      %p735 = pneg %p734
      // Predicated region
      $region97: #{_run_episode_jit.4} parent=5 // pred_check
        _
      $region98: #{_run_episode_jit.4} parent=5 // pred_check_branch
        %737 = sbr.rel (%p734) target = $region100
      $region99: #{_run_episode_jit.4} parent=5 // pred_region
        %s738 = ssub.s32 %s48, 1
        // Predicated region
        $region101: #{_run_episode_jit.4} parent=99 // pred_check
          %p739 = pneg %p69
        $region102: #{_run_episode_jit.4} parent=99 // pred_check_branch
          %741 = sbr.rel (%p739) target = $region104
        $region103: #{_run_episode_jit.4} parent=99 // pred_region
          %743 = dma.done [#allocation7], 16
        $region104: #{_run_episode_jit.4} parent=99 // pred_fallthru
          _
        // Predicated region
        $region105: #{_run_episode_jit.4} parent=99 // pred_check
          %p744 = pneg %p111
        $region106: #{_run_episode_jit.4} parent=99 // pred_check_branch
          %746 = sbr.rel (%p744) target = $region108
        $region107: #{_run_episode_jit.4} parent=99 // pred_region
          %748 = dma.done [#allocation9], 16
        $region108: #{_run_episode_jit.4} parent=99 // pred_fallthru
          _
        // Predicated region
        $region109: #{_run_episode_jit.4} parent=99 // pred_check
          %p749 = pneg %p132
        $region110: #{_run_episode_jit.4} parent=99 // pred_check_branch
          %751 = sbr.rel (%p749) target = $region112
        $region111: #{_run_episode_jit.4} parent=99 // pred_region
          %753 = dma.done [#allocation9], 16
        $region112: #{_run_episode_jit.4} parent=99 // pred_fallthru
          _
        %754 = sfence
        %p755 = pneg %p69
        %p756 = pneg %p66
        %p757 = pneg %p90
        %p758 = pneg %p87
        %p759 = pneg %p111
        %p760 = pneg %p108
        %p761 = pneg %p132
        %p762 = pneg %p129
        %p763 = scmp.lt.s32.totalorder %s53, 1
        %s764 = scalar_select %p763, %s53, 1
        %s765 = smul.addr %s764, 8
        %s766 = scalar_lea.vmem %s5, %s765
        %p767 = pneg %p158
        %p768 = pneg %p155
        %p769 = scmp.lt.s32.totalorder %s53, 1
        %s770 = scalar_select %p769, %s53, 1
        %s771 = smul.addr %s770, 8
        %s772 = scalar_lea.vmem %s6, %s771
        %p773 = pneg %p184
        %p774 = pneg %p181
        %p775 = scmp.lt.s32.totalorder %s53, 1
        %s776 = scalar_select %p775, %s53, 1
        %s777 = scalar_lea.vmem %s7, %s776
        %p778 = pneg %p210
        %p779 = pneg %p207
        %p780 = pneg %p231
        %p781 = pneg %p228
        %p782 = scmp.lt.s32.totalorder %s53, 1
        %s783 = scalar_select %p782, %s53, 1
        %s784 = smul.addr %s783, 8
        %s785 = scalar_lea.vmem %s9, %s784
        %p786 = pneg %p257
        %p787 = pneg %p254
        %p788 = scmp.lt.s32.totalorder %s53, 1
        %s789 = scalar_select %p788, %s53, 1
        %s790 = smul.addr %s789, 8
        %s791 = scalar_lea.vmem %s10, %s790
        %p792 = pneg %p283
        %p793 = pneg %p280
        %p794 = scmp.lt.s32.totalorder %s53, 1
        %s795 = scalar_select %p794, %s53, 1
        %s796 = scalar_lea.vmem %s11, %s795
        %p797 = pneg %p309
        %p798 = pneg %p306
        %p799 = scmp.lt.s32.totalorder %s53, 1
        %s800 = scalar_select %p799, %s53, 1
        %s801 = scalar_lea.vmem %s12, %s800
        %p802 = pneg %p335
        %p803 = pneg %p332
        %p804 = pneg %p356
        %p805 = pneg %p353
        %p806 = pneg %p377
        %p807 = pneg %p374
        %p808 = pneg %p398
        %p809 = pneg %p395
        %p810 = pneg %p419
        %p811 = pneg %p416
        %p812 = pneg %p440
        %p813 = pneg %p437
        %p814 = pneg %p461
        %p815 = pneg %p458
        %p816 = pneg %p482
        %p817 = pneg %p479
        %p818 = pneg %p503
        %p819 = pneg %p500
        %p820 = pneg %p529
        %p821 = pneg %p526
        %p822 = scmp.lt.s32.totalorder %s53, 1
        %s823 = scalar_select %p822, %s53, 1
        %s824 = scalar_lea.vmem %s21, %s823
        %p825 = pneg %p555
        %p826 = pneg %p552
        %p827 = scmp.lt.s32.totalorder %s53, 1
        %s828 = scalar_select %p827, %s53, 1
        %s829 = smul.addr %s828, 8
        %s830 = scalar_lea.vmem %s22, %s829
        %p831 = pneg %p581
        %p832 = pneg %p578
        %s833 = sand.u32 %s568, 1
        %s834 = scalar_lea.sflag [#allocation6], %s833
        %s835 = sand.u32 %s568, 1
        %s836 = scalar_lea.vmem [#allocation11], %s835
        %p837 = pneg %p607
        %p838 = pneg %p604
        %s839 = sand.u32 %s594, 1
        %s840 = scalar_lea.sflag [#allocation13], %s839
        %s841 = sand.u32 %s594, 1
        %s842 = scalar_lea.vmem [#allocation12], %s841
        %p843 = scmp.lt.s32.totalorder %s53, 1
        %s844 = scalar_select %p843, %s53, 1
        %s845 = smul.addr %s844, 8
        %s846 = scalar_lea.vmem %s5, %s845
        %p847 = scmp.lt.s32.totalorder %s53, 1
        %s848 = scalar_select %p847, %s53, 1
        %s849 = smul.addr %s848, 8
        %s850 = scalar_lea.vmem %s6, %s849
        %p851 = scmp.lt.s32.totalorder %s53, 1
        %s852 = scalar_select %p851, %s53, 1
        %s853 = scalar_lea.vmem %s7, %s852
        %p854 = scmp.lt.s32.totalorder %s53, 1
        %s855 = scalar_select %p854, %s53, 1
        %s856 = smul.addr %s855, 8
        %s857 = scalar_lea.vmem %s9, %s856
        %p858 = scmp.lt.s32.totalorder %s53, 1
        %s859 = scalar_select %p858, %s53, 1
        %s860 = smul.addr %s859, 8
        %s861 = scalar_lea.vmem %s10, %s860
        %p862 = scmp.lt.s32.totalorder %s53, 1
        %s863 = scalar_select %p862, %s53, 1
        %s864 = scalar_lea.vmem %s11, %s863
        %p865 = scmp.lt.s32.totalorder %s53, 1
        %s866 = scalar_select %p865, %s53, 1
        %s867 = scalar_lea.vmem %s12, %s866
        %p868 = scmp.lt.s32.totalorder %s53, 1
        %s869 = scalar_select %p868, %s53, 1
        %s870 = scalar_lea.vmem %s21, %s869
        %p871 = scmp.lt.s32.totalorder %s53, 1
        %s872 = scalar_select %p871, %s53, 1
        %s873 = smul.addr %s872, 8
        %s874 = scalar_lea.vmem %s22, %s873
        %s875 = sld [smem:[#allocation3 + %s53]]
        %s876 = sld [smem:[#allocation5 + %s53]]
        %s877 = sld [smem:[#allocation4]]
        %s878 = sld [smem:[#allocation8 + %s53]]
        %s879 = sld [smem:[#allocation10 + %s53]]
        %v880 = vld [vmem:[%s846] sm:$0xff]
        %v881 = vlaneseq
        %v882 = vand.u32 %v881, 127
        %v883 = vstv %s875
        %vm884 = vcmp.eq.s32.totalorder %v882, %v883
        %v885 = vsel %vm884, 1, 0
        %v886 = vcvt.s32.f32 %v885
        %v887 = vlaneseq
        %v888 = vshrl.u32 %v887, 7
        %vm889 = vcmp.eq.s32.totalorder %v888, %v883
        %v890 = vsel %vm889, 1, 0
        %v891 = vcvt.s32.f32 %v890
        %v892 = vld [vmem:[%s8] sm:$0xff]
        %v893 = vstv %s876
        %vm894 = vcmask 64512
        %v896 = vsel %vm894, %v886, 0
        %898 = vmatpush.msra.mxu0 0.0
        %899 = vmatpush.msra.mxu0 0.0
        %900 = vmatpush.msra.mxu0 0.0
        %901 = vmatpush.msra.mxu0 0.0
        %902 = vmatpush.msra.mxu0 0.0
        %903 = vmatpush.msra.mxu0 0.0
        %904 = vmatpush.msra.mxu0 0.0
        %905 = vmatpush.msra.mxu0 0.0
        %906 = vmatpush.msra.mxu0 0.0
        %907 = vmatpush.msra.mxu0 0.0
        %908 = vmatpush.msra.mxu0 0.0
        %909 = vmatpush.msra.mxu0 0.0
        %910 = vmatpush.msra.mxu0 0.0
        %911 = vmatpush.msra.mxu0 0.0
        %912 = vmatpush.msra.mxu0 0.0
        %913 = vmatpush.msra.mxu0 %v892
        %914 = vmatmul.f32.gmra.mxu0 %v896
        %v915 = vpop.f32.mrf.mxu0
        %v916 = vadd.f32 %v893, %v915
        %917 = vdwg.mxu0
        %v918 = vsub.f32 %v880, %v916
        %v919 = vmax.f32 %v918, 0.0
        %v920 = vadd.f32 %v916, %v919
        %v922 = vrot.slane %v880, 1
        %vm924 = vcmp.le.f32.partialorder %v920, %v922
        %v925 = vsel %vm924, 1, 0
        %v926 = vcvt.s32.f32 %v925
        %v927 = vrot.slane %v880, 2
        %v929 = vadd.f32 %v920, %v927
        %v930 = vrot.slane %v880, 4
        %v932 = vadd.f32 %v929, %v930
        %v933 = vstv %s877
        %vm934 = vcmp.le.f32.partialorder %v932, %v933
        %v935 = vsel %vm934, 1, 0
        %v936 = vcvt.s32.f32 %v935
        %v937 = vld [vmem:[%s853] sm:$0x1]
        %v938 = vmul.f32 %v937, %v926
        %v939 = vmul.f32 %v938, %v936
        %p940 = scmp.gt.s32.totalorder %s879, 0
        %s941 = scalar_select %p940, 1, 0
        %v942 = vstv %s941
        %vm943 = vcmp.eq.s32.totalorder %v942, 1
        %v944 = vsel %vm943, %v939, %v937
        %vm945 = vcmask 57344
        %946 = vst.msk [vmem:[%s870] sm:$0x1] %vm945, %v944
        %v948 = vrot.slane %v920, 7
        %v950 = vsub.f32 %v880, %v948
        %v952 = vrot.slane %v929, 5
        %v954 = vsub.f32 %v880, %v952
        %v956 = vrot.slane %v919, 7
        %v959 = vrot.slane %v950, 7
        %vm961 = vcmask 1040384
        %v962 = vsel %vm961, %v916, %v956
        %vm963 = vcmask 1041408
        %v964 = vsel %vm963, %v962, %v959
        %vm965 = vcmask 1042432
        %v966 = vsel %vm965, %v964, %v954
        %v967 = vld [vmem:[%s850] sm:$0xff]
        %968 = vxpose.xlu0.b32.start [1/16] %v892, 128
        %969 = vxpose.xlu0.b32.cont [2/16] 0.0, 128
        %970 = vxpose.xlu0.b32.cont [3/16] 0.0, 128
        %971 = vxpose.xlu0.b32.cont [4/16] 0.0, 128
        %972 = vxpose.xlu0.b32.cont [5/16] 0.0, 128
        %973 = vxpose.xlu0.b32.cont [6/16] 0.0, 128
        %974 = vxpose.xlu0.b32.cont [7/16] 0.0, 128
        %975 = vxpose.xlu0.b32.cont [8/16] 0.0, 128
        %976 = vxpose.xlu0.b32.cont [9/16] 0.0, 128
        %977 = vxpose.xlu0.b32.cont [10/16] 0.0, 128
        %978 = vxpose.xlu0.b32.cont [11/16] 0.0, 128
        %979 = vxpose.xlu0.b32.cont [12/16] 0.0, 128
        %980 = vxpose.xlu0.b32.cont [13/16] 0.0, 128
        %981 = vxpose.xlu0.b32.cont [14/16] 0.0, 128
        %982 = vxpose.xlu0.b32.cont [15/16] 0.0, 128
        %983 = vxpose.xlu0.b32.end [16/16] 0.0, 128
        %v984 = vpop.trf.xlu0
        %v985 = vpop.trf.xlu0
        %v986 = vpop.trf.xlu0
        %v987 = vpop.trf.xlu0
        %v988 = vpop.trf.xlu0
        %v989 = vpop.trf.xlu0
        %v990 = vpop.trf.xlu0
        %v991 = vpop.trf.xlu0
        %v992 = vpop.trf.xlu0
        %v993 = vpop.trf.xlu0
        %v994 = vpop.trf.xlu0
        %v995 = vpop.trf.xlu0
        %v996 = vpop.trf.xlu0
        %v997 = vpop.trf.xlu0
        %v998 = vpop.trf.xlu0
        %v999 = vpop.trf.xlu0
        %v1001 = vsel %vm894, %v984, 0
        %1003 = vmatpush.msra.mxu0 0.0
        %1004 = vmatpush.msra.mxu0 0.0
        %1005 = vmatpush.msra.mxu0 0.0
        %1006 = vmatpush.msra.mxu0 0.0
        %1007 = vmatpush.msra.mxu0 0.0
        %1008 = vmatpush.msra.mxu0 0.0
        %1009 = vmatpush.msra.mxu0 0.0
        %1010 = vmatpush.msra.mxu0 0.0
        %1011 = vmatpush.msra.mxu0 0.0
        %1012 = vmatpush.msra.mxu0 0.0
        %1013 = vmatpush.msra.mxu0 0.0
        %1014 = vmatpush.msra.mxu0 0.0
        %1015 = vmatpush.msra.mxu0 0.0
        %1016 = vmatpush.msra.mxu0 0.0
        %1017 = vmatpush.msra.mxu0 0.0
        %1018 = vmatpush.msra.mxu0 %v891
        %1019 = vmatmul.f32.gmra.mxu0 %v1001
        %v1020 = vpop.f32.mrf.mxu0
        %v1021 = vadd.f32 %v893, %v1020
        %1022 = vdwg.mxu0
        %v1023 = vsub.f32 %v967, %v1021
        %v1024 = vmax.f32 %v1023, 0.0
        %v1025 = vadd.f32 %v1021, %v1024
        %1027 = vrot.lane.b32.xlu0 %v967, 126
        %v1028 = vpop.permute.xlu0 %1027
        %v1030 = vadd.f32 %v1025, %v1028
        %1032 = vset.pattern.permute.xlu0 0
        %1033 = vperm.xlu0 %1032, %v1030
        %v1034 = vpop.permute.xlu0 %1033
        %v1036 = vadd.f32 %v892, %v1034
        %1037 = vset.pattern.permute.xlu0 0
        %1038 = vperm.xlu0 %1037, %v967
        %v1039 = vpop.permute.xlu0 %1038
        %v1041 = vsub.f32 %v1039, %v1036
        %v1042 = vmax.f32 %v1041, 0.0
        %v1043 = vadd.f32 %v1036, %v1042
        %v1044 = vperm.slane %v880, 1
        %vm1045 = vcmp.le.f32.partialorder %v1043, %v1044
        %v1046 = vsel %vm1045, 1, 0
        %v1047 = vcvt.s32.f32 %v1046
        %v1048 = vperm.slane %v880, 2
        %v1049 = vadd.f32 %v1043, %v1048
        %v1050 = vperm.slane %v880, 4
        %v1051 = vadd.f32 %v1049, %v1050
        %v1052 = vstv %s878
        %vm1053 = vcmp.le.f32.partialorder %v1051, %v1052
        %v1054 = vsel %vm1053, 1, 0
        %v1055 = vcvt.s32.f32 %v1054
        %vm1056 = vcmp.eq.s32.totalorder %v888, %v882
        %v1058 = vperm.slane %v939, 0
        %v1060 = vmul.f32 %v1058, %v1047
        %v1061 = vmul.f32 %v1060, %v1055
        %v1062 = vsel %vm1056, 1.0, %v1061
        %v1063 = vsel %vm894, %v1062, 0.0
        %1064 = vadd.xlane.f32.xlu0 %v1063
        %v1065 = vpop.xlane.xlu0 %1064
        %v1066 = vmax.f32 %v1065, 1.0
        %v1067 = vrcp.pop %v1066
        %v1068 = vmul.f32 %v1062, %v1067
        %v1069 = vld [vmem:[%s13] sm:$0xf]
        %1070 = vxpose.xlu0.b32.start [1/16] %v966, 128
        %1071 = vxpose.xlu0.b32.cont [2/16] 0.0, 128
        %1072 = vxpose.xlu0.b32.cont [3/16] 0.0, 128
        %1073 = vxpose.xlu0.b32.cont [4/16] 0.0, 128
        %1074 = vxpose.xlu0.b32.cont [5/16] 0.0, 128
        %1075 = vxpose.xlu0.b32.cont [6/16] 0.0, 128
        %1076 = vxpose.xlu0.b32.cont [7/16] 0.0, 128
        %1077 = vxpose.xlu0.b32.cont [8/16] 0.0, 128
        %1078 = vxpose.xlu0.b32.cont [9/16] 0.0, 128
        %1079 = vxpose.xlu0.b32.cont [10/16] 0.0, 128
        %1080 = vxpose.xlu0.b32.cont [11/16] 0.0, 128
        %1081 = vxpose.xlu0.b32.cont [12/16] 0.0, 128
        %1082 = vxpose.xlu0.b32.cont [13/16] 0.0, 128
        %1083 = vxpose.xlu0.b32.cont [14/16] 0.0, 128
        %1084 = vxpose.xlu0.b32.cont [15/16] 0.0, 128
        %1085 = vxpose.xlu0.b32.end [16/16] 0.0, 128
        %v1086 = vpop.trf.xlu0
        %v1087 = vpop.trf.xlu0
        %v1088 = vpop.trf.xlu0
        %v1089 = vpop.trf.xlu0
        %v1090 = vpop.trf.xlu0
        %v1091 = vpop.trf.xlu0
        %v1092 = vpop.trf.xlu0
        %v1093 = vpop.trf.xlu0
        %v1094 = vpop.trf.xlu0
        %v1095 = vpop.trf.xlu0
        %v1096 = vpop.trf.xlu0
        %v1097 = vpop.trf.xlu0
        %v1098 = vpop.trf.xlu0
        %v1099 = vpop.trf.xlu0
        %v1100 = vpop.trf.xlu0
        %v1101 = vpop.trf.xlu0
        %vm1102 = vcmask 31744
        %v1104 = vsel %vm1102, %v1086, 0
        %vm1106 = vcmask 1043456
        %v1108 = vsel %vm1106, %v1069, 0
        %1110 = vmatpush.msra.mxu0 0.0
        %1111 = vmatpush.msra.mxu0 0.0
        %1112 = vmatpush.msra.mxu0 0.0
        %1113 = vmatpush.msra.mxu0 0.0
        %1114 = vmatpush.msra.mxu0 0.0
        %1115 = vmatpush.msra.mxu0 0.0
        %1116 = vmatpush.msra.mxu0 0.0
        %1117 = vmatpush.msra.mxu0 0.0
        %1118 = vmatpush.msra.mxu0 0.0
        %1119 = vmatpush.msra.mxu0 0.0
        %1120 = vmatpush.msra.mxu0 0.0
        %1121 = vmatpush.msra.mxu0 0.0
        %1122 = vmatpush.msra.mxu0 0.0
        %1123 = vmatpush.msra.mxu0 0.0
        %1124 = vmatpush.msra.mxu0 0.0
        %1125 = vmatpush.msra.mxu0 %v1108
        %1126 = vmatmul.f32.gmra.mxu0 %v1104
        %v1127 = vpop.f32.mrf.mxu0
        %v1128 = vadd.f32 0.0, %v1127
        %1129 = vdwg.mxu0
        %v1130 = vld [vmem:[%s14] sm:$0xf]
        %v1132 = vsel %vm1106, %v1130, 0
        %1134 = vmatpush.msra.mxu0 0.0
        %1135 = vmatpush.msra.mxu0 0.0
        %1136 = vmatpush.msra.mxu0 0.0
        %1137 = vmatpush.msra.mxu0 0.0
        %1138 = vmatpush.msra.mxu0 0.0
        %1139 = vmatpush.msra.mxu0 0.0
        %1140 = vmatpush.msra.mxu0 0.0
        %1141 = vmatpush.msra.mxu0 0.0
        %1142 = vmatpush.msra.mxu0 0.0
        %1143 = vmatpush.msra.mxu0 0.0
        %1144 = vmatpush.msra.mxu0 0.0
        %1145 = vmatpush.msra.mxu0 0.0
        %1146 = vmatpush.msra.mxu0 0.0
        %1147 = vmatpush.msra.mxu0 0.0
        %1148 = vmatpush.msra.mxu0 0.0
        %1149 = vmatpush.msra.mxu0 %v1132
        %1150 = vmatmul.f32.gmra.mxu0 %v1104
        %v1151 = vpop.f32.mrf.mxu0
        %v1152 = vadd.f32 0.0, %v1151
        %1153 = vdwg.mxu0
        %v1154 = vld [vmem:[%s861] sm:$0xff]
        %v1155 = vadd.f32 %v1154, %v1152
        %v1157 = vsel %vm894, %v1068, 0
        %1159 = vmatpush.msra.mxu0 0.0
        %1160 = vmatpush.msra.mxu0 0.0
        %1161 = vmatpush.msra.mxu0 0.0
        %1162 = vmatpush.msra.mxu0 0.0
        %1163 = vmatpush.msra.mxu0 0.0
        %1164 = vmatpush.msra.mxu0 0.0
        %1165 = vmatpush.msra.mxu0 0.0
        %1166 = vmatpush.msra.mxu0 0.0
        %1167 = vmatpush.msra.mxu0 0.0
        %1168 = vmatpush.msra.mxu0 0.0
        %1169 = vmatpush.msra.mxu0 0.0
        %1170 = vmatpush.msra.mxu0 0.0
        %1171 = vmatpush.msra.mxu0 0.0
        %1172 = vmatpush.msra.mxu0 0.0
        %1173 = vmatpush.msra.mxu0 0.0
        %1174 = vmatpush.msra.mxu0 %v1155
        %1175 = vmatmul.f32.gmra.mxu0 %v1157
        %v1176 = vpop.f32.mrf.mxu0
        %v1177 = vadd.f32 0.0, %v1176
        %1178 = vdwg.mxu0
        %v1179 = vld [vmem:[%s857] sm:$0xff]
        %v1180 = vadd.f32 %v1179, %v1128
        %v1181 = vadd.f32 %v1180, %v1177
        %v1182 = vmax.f32 %v1181, 0.0
        %vm1183 = vcmask 261120
        %1184 = vst.msk [vmem:[%s874] sm:$0xff] %vm1183, %v1182
        %v1185 = vld [vmem:[%s864] sm:$0x1]
        %v1186 = vld [vmem:[%s867] sm:$0x1]
        %v1187 = vld [vmem:[%s15] sm:$0xff]
        %v1188 = vld [vmem:[%s15 + $0x8] sm:$0xff]
        %v1189 = vld [vmem:[%s15 + $0x10] sm:$0xff]
        %v1190 = vld [vmem:[%s15 + $0x18] sm:$0xff]
        %v1191 = vld [vmem:[%s16] sm:$0xff]
        %v1192 = vld [vmem:[%s16 + $0x8] sm:$0xff]
        %v1193 = vld [vmem:[%s16 + $0x10] sm:$0xff]
        %v1194 = vld [vmem:[%s16 + $0x18] sm:$0xff]
        %v1196 = vsel %vm1183, %v1186, 0
        %1198 = vmatpush.msra.mxu0 0.0
        %1199 = vmatpush.msra.mxu0 0.0
        %1200 = vmatpush.msra.mxu0 0.0
        %1201 = vmatpush.msra.mxu0 0.0
        %1202 = vmatpush.msra.mxu0 0.0
        %1203 = vmatpush.msra.mxu0 0.0
        %1204 = vmatpush.msra.mxu0 0.0
        %1205 = vmatpush.msra.mxu0 0.0
        %1206 = vmatpush.msra.mxu0 0.0
        %1207 = vmatpush.msra.mxu0 0.0
        %1208 = vmatpush.msra.mxu0 0.0
        %1209 = vmatpush.msra.mxu0 0.0
        %1210 = vmatpush.msra.mxu0 %v1194
        %1211 = vmatpush.msra.mxu0 %v1193
        %1212 = vmatpush.msra.mxu0 %v1192
        %1213 = vmatpush.msra.mxu0 %v1191
        %1214 = vmatmul.f32.gmra.mxu0 %v1196
        %v1215 = vpop.f32.mrf.mxu0
        %v1216 = vadd.f32 0.0, %v1215
        %1217 = vdwg.mxu0
        %v1219 = vsel %vm1183, %v1185, 0
        %1221 = vmatpush.msra.mxu0 0.0
        %1222 = vmatpush.msra.mxu0 0.0
        %1223 = vmatpush.msra.mxu0 0.0
        %1224 = vmatpush.msra.mxu0 0.0
        %1225 = vmatpush.msra.mxu0 0.0
        %1226 = vmatpush.msra.mxu0 0.0
        %1227 = vmatpush.msra.mxu0 0.0
        %1228 = vmatpush.msra.mxu0 0.0
        %1229 = vmatpush.msra.mxu0 0.0
        %1230 = vmatpush.msra.mxu0 0.0
        %1231 = vmatpush.msra.mxu0 0.0
        %1232 = vmatpush.msra.mxu0 0.0
        %1233 = vmatpush.msra.mxu0 %v1190
        %1234 = vmatpush.msra.mxu0 %v1189
        %1235 = vmatpush.msra.mxu0 %v1188
        %1236 = vmatpush.msra.mxu0 %v1187
        %1237 = vmatmul.f32.gmra.mxu0 %v1219
        %v1238 = vpop.f32.mrf.mxu0
        %v1239 = vadd.f32 %v1216, %v1238
        %1240 = vdwg.mxu0
        %v1241 = vld [vmem:[%s17] sm:$0x1]
        %v1242 = vadd.f32 %v1239, %v1241
        %v1243 = vxor.u32 %v1242, 2147483648
        %v1244 = vmul.f32 %v1243, 1.442695
        %v1245 = vpow.pop %v1244
        %v1246 = vadd.f32 %v1245, 1.0
        %v1247 = vrcp.pop %v1246
        %v1248 = vmul.f32 %v1246, %v1247
        %v1249 = vsub.f32 1.0, %v1248
        %v1250 = vmul.f32 %v1247, %v1249
        %v1251 = vadd.f32 %v1247, %v1250
        %vm1252 = vweird.f32 %v1246
        %vm1253 = vweird.f32 %v1247
        %vm1254 = vmor %vm1252, %vm1253
        %v1255 = vsel %vm1254, %v1247, %v1251
        %v1256 = vand.u32 2147483647, %v1246
        %vm1257 = vcmp.eq.f32.partialorder %v1256, 8.507059e+37
        %v1258 = vand.u32 %v1246, 2147483648
        %v1259 = vor.u32 1.1754944e-38, %v1258
        %v1260 = vsel %vm1257, %v1259, %v1255
        %v1261 = vmul.f32 1.0, %v1260
        %v1262 = vtanh.pop %v1242
        %v1263 = vmul.f32 %v1261, %v1186
        %1265 = vrot.lane.b32.xlu0 %v1262, 64
        %v1266 = vpop.permute.xlu0 %1265
        %v1268 = vmul.f32 %v1261, %v1266
        %1270 = vrot.lane.b32.xlu0 %v1268, 32
        %v1271 = vpop.permute.xlu0 %1270
        %v1273 = vadd.f32 %v1263, %v1271
        %v1274 = vtanh.pop %v1273
        %1276 = vrot.lane.b32.xlu0 %v1274, 64
        %v1277 = vpop.permute.xlu0 %1276
        %v1279 = vmul.f32 %v1261, %v1277
        %1281 = vrot.lane.b32.xlu0 %v1279, 32
        %v1282 = vpop.permute.xlu0 %1281
        %v1284 = vsel %vm1183, %v1282, %v1273
        %vm1285 = vcmask 516096
        %1286 = vst.msk [vmem:[%s836] sm:$0x1] %vm1285, %v1284
        %v1287 = vld [vmem:[%s18] sm:$0xff]
        %v1288 = vld [vmem:[%s18 + $0x8] sm:$0xff]
        %v1289 = vld [vmem:[%s18 + $0x10] sm:$0xff]
        %v1290 = vld [vmem:[%s18 + $0x18] sm:$0xff]
        %v1291 = vld [vmem:[%s19] sm:$0xff]
        %v1292 = vld [vmem:[%s19 + $0x8] sm:$0xff]
        %v1293 = vld [vmem:[%s19 + $0x10] sm:$0xff]
        %v1294 = vld [vmem:[%s19 + $0x18] sm:$0xff]
        %v1295 = vsel %vm1183, %v1282, 0
        %1297 = vmatpush.msra.mxu0 0.0
        %1298 = vmatpush.msra.mxu0 0.0
        %1299 = vmatpush.msra.mxu0 0.0
        %1300 = vmatpush.msra.mxu0 0.0
        %1301 = vmatpush.msra.mxu0 0.0
        %1302 = vmatpush.msra.mxu0 0.0
        %1303 = vmatpush.msra.mxu0 0.0
        %1304 = vmatpush.msra.mxu0 0.0
        %1305 = vmatpush.msra.mxu0 0.0
        %1306 = vmatpush.msra.mxu0 0.0
        %1307 = vmatpush.msra.mxu0 0.0
        %1308 = vmatpush.msra.mxu0 0.0
        %1309 = vmatpush.msra.mxu0 %v1294
        %1310 = vmatpush.msra.mxu0 %v1293
        %1311 = vmatpush.msra.mxu0 %v1292
        %1312 = vmatpush.msra.mxu0 %v1291
        %1313 = vmatmul.f32.gmra.mxu0 %v1295
        %v1314 = vpop.f32.mrf.mxu0
        %v1315 = vadd.f32 0.0, %v1314
        %1316 = vdwg.mxu0
        %v1317 = vperm.slane %v1315, 0
        %v1319 = vsel %vm1183, %v1182, 0
        %1321 = vmatpush.msra.mxu0 0.0
        %1322 = vmatpush.msra.mxu0 0.0
        %1323 = vmatpush.msra.mxu0 0.0
        %1324 = vmatpush.msra.mxu0 0.0
        %1325 = vmatpush.msra.mxu0 0.0
        %1326 = vmatpush.msra.mxu0 0.0
        %1327 = vmatpush.msra.mxu0 0.0
        %1328 = vmatpush.msra.mxu0 0.0
        %1329 = vmatpush.msra.mxu0 0.0
        %1330 = vmatpush.msra.mxu0 0.0
        %1331 = vmatpush.msra.mxu0 0.0
        %1332 = vmatpush.msra.mxu0 0.0
        %1333 = vmatpush.msra.mxu0 %v1290
        %1334 = vmatpush.msra.mxu0 %v1289
        %1335 = vmatpush.msra.mxu0 %v1288
        %1336 = vmatpush.msra.mxu0 %v1287
        %1337 = vmatmul.f32.gmra.mxu0 %v1319
        %v1338 = vpop.f32.mrf.mxu0
        %v1339 = vadd.f32 %v1317, %v1338
        %1340 = vdwg.mxu0
        %v1341 = vtanh.pop %v1339
        %v1342 = vld [vmem:[%s20] sm:$0x1]
        %v1344 = vsel %vm1183, %v1342, 0
        %v1347 = vsel %vm1183, %v1341, 0
        %1349 = vmatpush.xpose.msra.mxu0 0.0
        %1350 = vmatpush.xpose.msra.mxu0 0.0
        %1351 = vmatpush.xpose.msra.mxu0 0.0
        %1352 = vmatpush.xpose.msra.mxu0 0.0
        %1353 = vmatpush.xpose.msra.mxu0 0.0
        %1354 = vmatpush.xpose.msra.mxu0 0.0
        %1355 = vmatpush.xpose.msra.mxu0 0.0
        %1356 = vmatpush.xpose.msra.mxu0 0.0
        %1357 = vmatpush.xpose.msra.mxu0 0.0
        %1358 = vmatpush.xpose.msra.mxu0 0.0
        %1359 = vmatpush.xpose.msra.mxu0 0.0
        %1360 = vmatpush.xpose.msra.mxu0 0.0
        %1361 = vmatpush.xpose.msra.mxu0 0.0
        %1362 = vmatpush.xpose.msra.mxu0 0.0
        %1363 = vmatpush.xpose.msra.mxu0 0.0
        %1364 = vmatpush.xpose.msra.mxu0 %v1347
        %1365 = vmatmul.f32.gmra.mxu0 %v1344
        %v1366 = vpop.f32.mrf.mxu0
        %v1367 = vadd.f32 0.0, %v1366
        %1368 = vdwg.mxu0
        %vm1369 = vcmp.gt.f32.partialorder %v939, 0.0
        %v1370 = vsel %vm1369, %v1367, -1e+09
        %v1371 = vsel %vm945, %v1370, -inf
        %1372 = vmax.xlane.f32.xlu0 %v1371
        %v1373 = vpop.xlane.xlu0 %1372
        %v1374 = vsub.f32 %v1370, %v1373
        %v1375 = vmul.f32 %v1374, 1.442695
        %v1376 = vpow.pop %v1375
        %v1377 = vsel %vm945, %v1376, 0.0
        %1378 = vadd.xlane.f32.xlu0 %v1377
        %v1379 = vpop.xlane.xlu0 %1378
        %v1380 = vrcp.pop %v1379
        %v1381 = vmul.f32 %v1379, %v1380
        %v1382 = vsub.f32 1.0, %v1381
        %v1383 = vmul.f32 %v1380, %v1382
        %v1384 = vadd.f32 %v1380, %v1383
        %vm1385 = vweird.f32 %v1379
        %vm1386 = vweird.f32 %v1380
        %vm1387 = vmor %vm1385, %vm1386
        %v1388 = vsel %vm1387, %v1380, %v1384
        %v1389 = vand.u32 2147483647, %v1379
        %vm1390 = vcmp.eq.f32.partialorder %v1389, 8.507059e+37
        %v1391 = vand.u32 %v1379, 2147483648
        %v1392 = vor.u32 1.1754944e-38, %v1391
        %v1393 = vsel %vm1390, %v1392, %v1388
        %v1394 = vmul.f32 %v1376, %v1393
        %1395 = vst.msk [vmem:[%s842] sm:$0x1] %vm945, %v1394
        %p1396 = scmp.lt.s32.totalorder %s53, 1
        %s1397 = scalar_select %p1396, %s53, 1
        %s1398 = scalar_lea.vmem %s21, %s1397
        %p1399 = scmp.lt.s32.totalorder %s53, 1
        %s1400 = scalar_select %p1399, %s53, 1
        %s1401 = smul.addr %s1400, 8
        %s1402 = scalar_lea.vmem %s22, %s1401
        %s1403 = sand.u32 %s568, 1
        %s1404 = scalar_lea.sflag [#allocation6], %s1403
        %s1405 = sand.u32 %s568, 1
        %s1406 = scalar_lea.vmem [#allocation11], %s1405
        %s1407 = sand.u32 %s594, 1
        %s1408 = scalar_lea.sflag [#allocation13], %s1407
        %s1409 = sand.u32 %s594, 1
        %s1410 = scalar_lea.vmem [#allocation12], %s1409
        // Predicated region
        $region113: #{_run_episode_jit.4} parent=99 // pred_check
          %p1411 = pneg %p526
        $region114: #{_run_episode_jit.4} parent=99 // pred_check_branch
          %1413 = sbr.rel (%p1411) target = $region116
        $region115: #{_run_episode_jit.4} parent=99 // pred_region
          _
        $region116: #{_run_episode_jit.4} parent=99 // pred_fallthru
          _
        // Predicated region
        $region117: #{_run_episode_jit.4} parent=99 // pred_check
          %p1414 = pneg %p552
        $region118: #{_run_episode_jit.4} parent=99 // pred_check_branch
          %1416 = sbr.rel (%p1414) target = $region120
        $region119: #{_run_episode_jit.4} parent=99 // pred_region
          _
        $region120: #{_run_episode_jit.4} parent=99 // pred_fallthru
          _
        // Predicated region
        $region121: #{_run_episode_jit.4} parent=99 // pred_check
          %p1417 = pneg %p578
        $region122: #{_run_episode_jit.4} parent=99 // pred_check_branch
          %1419 = sbr.rel (%p1417) target = $region124
        $region123: #{_run_episode_jit.4} parent=99 // pred_region
          %1421 = vsyncadd %s1404, 0
          %s1422 = scalar_lea.hbm %s23, %s53
          %s1424 = sshll.u32 %s1406, 4
          %s1425 = int_to_ptr.vmem [resolvable:$true] %s1424
          %s1426 = sshll.u32 %s1422, 4
          %s1427 = int_to_ptr.hbm [resolvable:$true] %s1426
          %1429 = dma.vmem_to_hbm [thread:$0]  %s1425, 16, %s1427, %s1404
        $region124: #{_run_episode_jit.4} parent=99 // pred_fallthru
          _
        // Predicated region
        $region125: #{_run_episode_jit.4} parent=99 // pred_check
          %p1430 = pneg %p604
        $region126: #{_run_episode_jit.4} parent=99 // pred_check_branch
          %1432 = sbr.rel (%p1430) target = $region128
        $region127: #{_run_episode_jit.4} parent=99 // pred_region
          %1434 = vsyncadd %s1408, 0
          %s1435 = scalar_lea.hbm %s24, %s53
          %s1437 = sshll.u32 %s1410, 4
          %s1438 = int_to_ptr.vmem [resolvable:$true] %s1437
          %s1439 = sshll.u32 %s1435, 4
          %s1440 = int_to_ptr.hbm [resolvable:$true] %s1439
          %1442 = dma.vmem_to_hbm [thread:$0]  %s1438, 16, %s1440, %s1408
        $region128: #{_run_episode_jit.4} parent=99 // pred_fallthru
          _
      $region100: #{_run_episode_jit.4} parent=5 // pred_fallthru
        _
      %p1443 = scmp.le.s32.totalorder 2, %s48
      // Predicated region
      $region129: #{_run_episode_jit.4} parent=5 // pred_check
        %p1444 = pneg %p1443
      $region130: #{_run_episode_jit.4} parent=5 // pred_check_branch
        %1446 = sbr.rel (%p1444) target = $region132
      $region131: #{_run_episode_jit.4} parent=5 // pred_region
        %s1447 = ssub.s32 %s48, 2
        // Predicated region
        $region133: #{_run_episode_jit.4} parent=131 // pred_check
          %p1448 = pneg %p532
        $region134: #{_run_episode_jit.4} parent=131 // pred_check_branch
          %1450 = sbr.rel (%p1448) target = $region136
        $region135: #{_run_episode_jit.4} parent=131 // pred_region
          %p1451 = scmp.lt.s32.totalorder %s54, 1
          %s1452 = scalar_select %p1451, %s54, 1
          %s1453 = scalar_lea.vmem %s21, %s1452
        $region136: #{_run_episode_jit.4} parent=131 // pred_fallthru
          _
        // Predicated region
        $region137: #{_run_episode_jit.4} parent=131 // pred_check
          %p1454 = pneg %p558
        $region138: #{_run_episode_jit.4} parent=131 // pred_check_branch
          %1456 = sbr.rel (%p1454) target = $region140
        $region139: #{_run_episode_jit.4} parent=131 // pred_region
          %p1457 = scmp.lt.s32.totalorder %s54, 1
          %s1458 = scalar_select %p1457, %s54, 1
          %s1459 = smul.addr %s1458, 8
          %s1460 = scalar_lea.vmem %s22, %s1459
        $region140: #{_run_episode_jit.4} parent=131 // pred_fallthru
          _
        // Predicated region
        $region141: #{_run_episode_jit.4} parent=131 // pred_check
          %p1461 = pneg %p584
        $region142: #{_run_episode_jit.4} parent=131 // pred_check_branch
          %1463 = sbr.rel (%p1461) target = $region144
        $region143: #{_run_episode_jit.4} parent=131 // pred_region
          %s1464 = sand.u32 %s569, 1
          %s1465 = scalar_lea.sflag [#allocation6], %s1464
          %s1466 = sand.u32 %s569, 1
          %s1467 = scalar_lea.vmem [#allocation11], %s1466
          %1469 = dma.done %s1465, 16
        $region144: #{_run_episode_jit.4} parent=131 // pred_fallthru
          _
        // Predicated region
        $region145: #{_run_episode_jit.4} parent=131 // pred_check
          %p1470 = pneg %p610
        $region146: #{_run_episode_jit.4} parent=131 // pred_check_branch
          %1472 = sbr.rel (%p1470) target = $region148
        $region147: #{_run_episode_jit.4} parent=131 // pred_region
          %s1473 = sand.u32 %s595, 1
          %s1474 = scalar_lea.sflag [#allocation13], %s1473
          %s1475 = sand.u32 %s595, 1
          %s1476 = scalar_lea.vmem [#allocation12], %s1475
          %1478 = dma.done %s1474, 16
        $region148: #{_run_episode_jit.4} parent=131 // pred_fallthru
          _
      $region132: #{_run_episode_jit.4} parent=5 // pred_fallthru
        _
    $region6: #{_run_episode_jit.4} parent=1 // loop_footer
      %s52 = sadd.s32 1, %s48
    $region7: #{_run_episode_jit.4} parent=1 // loop_footer_branch
      %47 = sbr.rel target = $region3
    $region8: #{_run_episode_jit.4} parent=1 // loop_exit
      _
    %1479 = vsyncpa [#allocation6], 1
    %s1480 = scalar_lea.sflag [#allocation6], 1
    %1481 = vsyncpa %s1480, 1
    %1482 = vsyncpa [#allocation13], 1
    %s1483 = scalar_lea.sflag [#allocation13], 1
    %1484 = vsyncpa %s1483, 1
    %1485 = vsyncpa [#allocation7], 1
    %s1486 = scalar_lea.sflag [#allocation7], 1
    %1487 = vsyncpa %s1486, 1
    %1488 = vsyncpa [#allocation9], 1

// kernel: _run_episode_jit.5
$region0: #{_run_episode_jit.5}
  #allocation0 [shape = 'u32[]', space=smem, size = 0x4, offset = 0x4, fixed_abs, tag = 'smem constant byte address 0x4 - core index']
  #allocation1 [shape = 'u32[72,128]{1,0:T(1,128)}', space=vmem, size = 0x9000, scoped, tag = 'internal scratch']
  #allocation2 [shape = 's32[1]{0}', space=sflag, size = 0x4, scoped, tag = 'scoped memory for _run_episode_jit.5']
  #allocation3 [shape = 'u8[512]{0}', space=smem, size = 0x200, scoped, tag = 'prefetched SMEM operand 0']
  #allocation4 [shape = 'f32[1]{0:T(128)S(6)}', space=smem, size = 0x200, scoped, tag = 'scoped memory for _run_episode_jit.5']
  %s0 = inlined_call_operand.vmem [shape: s32[2], index: 0, kind: input, shape index: {}]
  %s1 = inlined_call_operand.vmem [shape: f32[2], index: 1, kind: input, shape index: {}]
  %s2 = inlined_call_operand.<no memory space> [shape: f32[1], index: 2, kind: input, shape index: {}]
  %s3 = inlined_call_operand.vmem [shape: f32[2], index: 3, kind: input, shape index: {}]
  %s4 = inlined_call_operand.vmem [shape: s32[2], index: 4, kind: input, shape index: {}]
  %s5 = inlined_call_operand.vmem [shape: f32[2,8,8], index: 5, kind: input, shape index: {}]
  %s6 = inlined_call_operand.vmem [shape: f32[2,8,4], index: 6, kind: input, shape index: {}]
  %s7 = inlined_call_operand.vmem [shape: f32[2,1,8], index: 7, kind: input, shape index: {}]
  %s8 = inlined_call_operand.vmem [shape: f32[8,8], index: 8, kind: input, shape index: {}]
  %s9 = inlined_call_operand.vmem [shape: f32[2,8,32], index: 9, kind: input, shape index: {}]
  %s10 = inlined_call_operand.vmem [shape: f32[2,8,32], index: 10, kind: input, shape index: {}]
  %s11 = inlined_call_operand.vmem [shape: f32[2,1,32], index: 11, kind: input, shape index: {}]
  %s12 = inlined_call_operand.vmem [shape: f32[2,1,64], index: 12, kind: input, shape index: {}]
  %s13 = inlined_call_operand.vmem [shape: f32[4,32], index: 13, kind: input, shape index: {}]
  %s14 = inlined_call_operand.vmem [shape: f32[4,32], index: 14, kind: input, shape index: {}]
  %s15 = inlined_call_operand.vmem [shape: f32[32,128], index: 15, kind: input, shape index: {}]
  %s16 = inlined_call_operand.vmem [shape: f32[32,128], index: 16, kind: input, shape index: {}]
  %s17 = inlined_call_operand.vmem [shape: f32[1,128], index: 17, kind: input, shape index: {}]
  %s18 = inlined_call_operand.vmem [shape: f32[32,32], index: 18, kind: input, shape index: {}]
  %s19 = inlined_call_operand.vmem [shape: f32[32,32], index: 19, kind: input, shape index: {}]
  %s20 = inlined_call_operand.vmem [shape: f32[1,32], index: 20, kind: input, shape index: {}]
  %s21 = inlined_call_operand.vmem [shape: f32[2,1,8], index: 21, kind: output, shape index: {0}]
  %s22 = inlined_call_operand.vmem [shape: f32[2,8,32], index: 22, kind: output, shape index: {1}]
  %s23 = inlined_call_operand.vmem [shape: f32[2,1,64], index: 23, kind: output, shape index: {2}]
  %s24 = inlined_call_operand.vmem [shape: f32[2,1,8], index: 24, kind: output, shape index: {3}]
  %25 = xla_tuple %s21, %s22, %s23, %s24
  %s26 = sld [smem:[#allocation0]]
  $region149: #{_run_episode_jit.5} parent=0
    _
  %s28 = ssub.s32 1, %s26
  %s29 = scalar_select 0, %s28, %s26
  %s31 = sshll.u32 %s0, 4
  %s32 = int_to_ptr.vmem [resolvable:$true] %s31
  %34 = dma.vmem_to_smem %s32, 16, [#allocation3], [#allocation2]
  %35 = sst [smem:[#allocation4]] %s2
  %37 = dma.done [#allocation2], 16
  %38 = sfence
  $region1: #{_run_episode_jit.5} parent=0
    #allocation5 [shape = 'u8[512]{0}', space=smem, size = 0x200, scoped, tag = 'input window, operand 1, single buffered']
    #allocation6 [shape = 's32[2]{0}', space=sflag, size = 0x8, scoped, tag = 'scoped memory for _run_episode_jit.5']
    #allocation7 [shape = 'u8[512]{0}', space=smem, size = 0x200, scoped, tag = 'input window, operand 3, single buffered']
    #allocation8 [shape = 's32[1]{0}', space=sflag, size = 0x4, scoped, tag = 'scoped memory for _run_episode_jit.5']
    #allocation9 [shape = 'u8[512]{0}', space=smem, size = 0x200, scoped, tag = 'input window, operand 4, single buffered']
    %39 = vsyncpa [#allocation6], 0
    %40 = vsyncpa [#allocation8], 0
    loop: start=0, step=1, limit=4
    $region2: #{_run_episode_jit.5} parent=1 // loop_pre_header
      _
    $region3: #{_run_episode_jit.5} parent=1 // loop_header
      %s42 = sphi 0, %s46
      %p43 = scmp.ge.s32.totalorder %s42, 4
      %s50 = sphi 0, %s50
      %s52 = sphi 0, %s50
      %s53 = sphi 0, %s52
      %s67 = sphi 0, %s53
      %s71 = sphi 0, %s71
      %s73 = sphi 0, %s71
      %s74 = sphi 0, %s73
      %s88 = sphi 0, %s74
      %s92 = sphi 0, %s92
      %s94 = sphi 0, %s92
      %s95 = sphi 0, %s94
      %s109 = sphi 0, %s95
      %s113 = sphi 0, %s113
      %s115 = sphi 0, %s113
      %s116 = sphi 0, %s115
      %s130 = sphi 0, %s116
      %s136 = sphi 0, %s138
      %s139 = sphi 0, %s136
      %s140 = sphi 0, %s139
      %s156 = sphi 0, %s140
      %s162 = sphi 0, %s164
      %s165 = sphi 0, %s162
      %s166 = sphi 0, %s165
      %s182 = sphi 0, %s166
      %s188 = sphi 0, %s190
      %s191 = sphi 0, %s188
      %s192 = sphi 0, %s191
      %s208 = sphi 0, %s192
      %s212 = sphi 0, %s212
      %s214 = sphi 0, %s212
      %s215 = sphi 0, %s214
      %s229 = sphi 0, %s215
      %s235 = sphi 0, %s237
      %s238 = sphi 0, %s235
      %s239 = sphi 0, %s238
      %s255 = sphi 0, %s239
      %s261 = sphi 0, %s263
      %s264 = sphi 0, %s261
      %s265 = sphi 0, %s264
      %s281 = sphi 0, %s265
      %s287 = sphi 0, %s289
      %s290 = sphi 0, %s287
      %s291 = sphi 0, %s290
      %s307 = sphi 0, %s291
      %s313 = sphi 0, %s315
      %s316 = sphi 0, %s313
      %s317 = sphi 0, %s316
      %s333 = sphi 0, %s317
      %s337 = sphi 0, %s337
      %s339 = sphi 0, %s337
      %s340 = sphi 0, %s339
      %s354 = sphi 0, %s340
      %s358 = sphi 0, %s358
      %s360 = sphi 0, %s358
      %s361 = sphi 0, %s360
      %s375 = sphi 0, %s361
      %s379 = sphi 0, %s379
      %s381 = sphi 0, %s379
      %s382 = sphi 0, %s381
      %s396 = sphi 0, %s382
      %s400 = sphi 0, %s400
      %s402 = sphi 0, %s400
      %s403 = sphi 0, %s402
      %s417 = sphi 0, %s403
      %s421 = sphi 0, %s421
      %s423 = sphi 0, %s421
      %s424 = sphi 0, %s423
      %s438 = sphi 0, %s424
      %s442 = sphi 0, %s442
      %s444 = sphi 0, %s442
      %s445 = sphi 0, %s444
      %s459 = sphi 0, %s445
      %s463 = sphi 0, %s463
      %s465 = sphi 0, %s463
      %s466 = sphi 0, %s465
      %s480 = sphi 0, %s466
      %s484 = sphi 0, %s484
      %s486 = sphi 0, %s484
      %s487 = sphi 0, %s486
      %s501 = sphi 0, %s487
      %s507 = sphi 0, %s509
      %s510 = sphi 0, %s507
      %s511 = sphi 0, %s510
      %s527 = sphi 0, %s511
      %s533 = sphi 0, %s535
      %s536 = sphi 0, %s533
      %s537 = sphi 0, %s536
      %s553 = sphi 0, %s537
      %s559 = sphi 0, %s561
      %s562 = sphi 0, %s559
      %s563 = sphi 0, %s562
      %s579 = sphi 0, %s563
      %s585 = sphi 0, %s587
      %s588 = sphi 0, %s585
      %s589 = sphi 0, %s588
      %s605 = sphi 0, %s589
    $region4: #{_run_episode_jit.5} parent=1 // loop_header_branch
      %45 = sbr.rel (%p43) target = $region8
    $region5: #{_run_episode_jit.5} parent=1 // loop_body
      %s47 = ssub.s32 %s42, 1
      %s48 = ssub.s32 %s42, 2
      %s49 = sadd.s32 %s42, 1
      %s51 = sadd.s32 %s50, 1
      %p54 = scmp.eq.s32.totalorder %s42, 1
      %p55 = scmp.ne.s32.totalorder %s50, %s52
      %p56 = scmp.eq.s32.totalorder %s42, 0
      %p57 = por %p55, %p56
      %p58 = scmp.ne.s32.totalorder %s50, %s52
      %p59 = scmp.eq.s32.totalorder %s47, 1
      %p60 = por %p58, %p59
      %p61 = scmp.ne.s32.totalorder %s52, %s53
      %p62 = scmp.eq.s32.totalorder %s47, 0
      %p63 = por %p61, %p62
      %p64 = scmp.ne.s32.totalorder %s52, %s53
      %p65 = scmp.eq.s32.totalorder %s48, 1
      %p66 = por %p64, %p65
      %p68 = scmp.ne.s32.totalorder %s53, %s67
      %p69 = scmp.eq.s32.totalorder %s48, 0
      %p70 = por %p68, %p69
      %s72 = sadd.s32 %s71, 1
      %p75 = scmp.eq.s32.totalorder %s42, 1
      %p76 = scmp.ne.s32.totalorder %s71, %s73
      %p77 = scmp.eq.s32.totalorder %s42, 0
      %p78 = por %p76, %p77
      %p79 = scmp.ne.s32.totalorder %s71, %s73
      %p80 = scmp.eq.s32.totalorder %s47, 1
      %p81 = por %p79, %p80
      %p82 = scmp.ne.s32.totalorder %s73, %s74
      %p83 = scmp.eq.s32.totalorder %s47, 0
      %p84 = por %p82, %p83
      %p85 = scmp.ne.s32.totalorder %s73, %s74
      %p86 = scmp.eq.s32.totalorder %s48, 1
      %p87 = por %p85, %p86
      %p89 = scmp.ne.s32.totalorder %s74, %s88
      %p90 = scmp.eq.s32.totalorder %s48, 0
      %p91 = por %p89, %p90
      %s93 = sadd.s32 %s92, 1
      %p96 = scmp.eq.s32.totalorder %s42, 1
      %p97 = scmp.ne.s32.totalorder %s92, %s94
      %p98 = scmp.eq.s32.totalorder %s42, 0
      %p99 = por %p97, %p98
      %p100 = scmp.ne.s32.totalorder %s92, %s94
      %p101 = scmp.eq.s32.totalorder %s47, 1
      %p102 = por %p100, %p101
      %p103 = scmp.ne.s32.totalorder %s94, %s95
      %p104 = scmp.eq.s32.totalorder %s47, 0
      %p105 = por %p103, %p104
      %p106 = scmp.ne.s32.totalorder %s94, %s95
      %p107 = scmp.eq.s32.totalorder %s48, 1
      %p108 = por %p106, %p107
      %p110 = scmp.ne.s32.totalorder %s95, %s109
      %p111 = scmp.eq.s32.totalorder %s48, 0
      %p112 = por %p110, %p111
      %s114 = sadd.s32 %s113, 1
      %p117 = scmp.eq.s32.totalorder %s42, 1
      %p118 = scmp.ne.s32.totalorder %s113, %s115
      %p119 = scmp.eq.s32.totalorder %s42, 0
      %p120 = por %p118, %p119
      %p121 = scmp.ne.s32.totalorder %s113, %s115
      %p122 = scmp.eq.s32.totalorder %s47, 1
      %p123 = por %p121, %p122
      %p124 = scmp.ne.s32.totalorder %s115, %s116
      %p125 = scmp.eq.s32.totalorder %s47, 0
      %p126 = por %p124, %p125
      %p127 = scmp.ne.s32.totalorder %s115, %s116
      %p128 = scmp.eq.s32.totalorder %s48, 1
      %p129 = por %p127, %p128
      %p131 = scmp.ne.s32.totalorder %s116, %s130
      %p132 = scmp.eq.s32.totalorder %s48, 0
      %p133 = por %p131, %p132
      %s134 = ssub.s32 %s42, %s49
      %p135 = scmp.eq.s32.totalorder %s134, 0
      %s137 = sadd.s32 %s136, 1
      %s138 = scalar_select %p135, %s136, %s137
      %p141 = pneg %p135
      %p142 = scmp.eq.s32.totalorder %s42, 1
      %p143 = por %p141, %p142
      %p144 = scmp.ne.s32.totalorder %s136, %s139
      %p145 = scmp.eq.s32.totalorder %s42, 0
      %p146 = por %p144, %p145
      %p147 = scmp.ne.s32.totalorder %s136, %s139
      %p148 = scmp.eq.s32.totalorder %s47, 1
      %p149 = por %p147, %p148
      %p150 = scmp.ne.s32.totalorder %s139, %s140
      %p151 = scmp.eq.s32.totalorder %s47, 0
      %p152 = por %p150, %p151
      %p153 = scmp.ne.s32.totalorder %s139, %s140
      %p154 = scmp.eq.s32.totalorder %s48, 1
      %p155 = por %p153, %p154
      %p157 = scmp.ne.s32.totalorder %s140, %s156
      %p158 = scmp.eq.s32.totalorder %s48, 0
      %p159 = por %p157, %p158
      %s160 = ssub.s32 %s42, %s49
      %p161 = scmp.eq.s32.totalorder %s160, 0
      %s163 = sadd.s32 %s162, 1
      %s164 = scalar_select %p161, %s162, %s163
      %p167 = pneg %p161
      %p168 = scmp.eq.s32.totalorder %s42, 1
      %p169 = por %p167, %p168
      %p170 = scmp.ne.s32.totalorder %s162, %s165
      %p171 = scmp.eq.s32.totalorder %s42, 0
      %p172 = por %p170, %p171
      %p173 = scmp.ne.s32.totalorder %s162, %s165
      %p174 = scmp.eq.s32.totalorder %s47, 1
      %p175 = por %p173, %p174
      %p176 = scmp.ne.s32.totalorder %s165, %s166
      %p177 = scmp.eq.s32.totalorder %s47, 0
      %p178 = por %p176, %p177
      %p179 = scmp.ne.s32.totalorder %s165, %s166
      %p180 = scmp.eq.s32.totalorder %s48, 1
      %p181 = por %p179, %p180
      %p183 = scmp.ne.s32.totalorder %s166, %s182
      %p184 = scmp.eq.s32.totalorder %s48, 0
      %p185 = por %p183, %p184
      %s186 = ssub.s32 %s42, %s49
      %p187 = scmp.eq.s32.totalorder %s186, 0
      %s189 = sadd.s32 %s188, 1
      %s190 = scalar_select %p187, %s188, %s189
      %p193 = pneg %p187
      %p194 = scmp.eq.s32.totalorder %s42, 1
      %p195 = por %p193, %p194
      %p196 = scmp.ne.s32.totalorder %s188, %s191
      %p197 = scmp.eq.s32.totalorder %s42, 0
      %p198 = por %p196, %p197
      %p199 = scmp.ne.s32.totalorder %s188, %s191
      %p200 = scmp.eq.s32.totalorder %s47, 1
      %p201 = por %p199, %p200
      %p202 = scmp.ne.s32.totalorder %s191, %s192
      %p203 = scmp.eq.s32.totalorder %s47, 0
      %p204 = por %p202, %p203
      %p205 = scmp.ne.s32.totalorder %s191, %s192
      %p206 = scmp.eq.s32.totalorder %s48, 1
      %p207 = por %p205, %p206
      %p209 = scmp.ne.s32.totalorder %s192, %s208
      %p210 = scmp.eq.s32.totalorder %s48, 0
      %p211 = por %p209, %p210
      %s213 = sadd.s32 %s212, 1
      %p216 = scmp.eq.s32.totalorder %s42, 1
      %p217 = scmp.ne.s32.totalorder %s212, %s214
      %p218 = scmp.eq.s32.totalorder %s42, 0
      %p219 = por %p217, %p218
      %p220 = scmp.ne.s32.totalorder %s212, %s214
      %p221 = scmp.eq.s32.totalorder %s47, 1
      %p222 = por %p220, %p221
      %p223 = scmp.ne.s32.totalorder %s214, %s215
      %p224 = scmp.eq.s32.totalorder %s47, 0
      %p225 = por %p223, %p224
      %p226 = scmp.ne.s32.totalorder %s214, %s215
      %p227 = scmp.eq.s32.totalorder %s48, 1
      %p228 = por %p226, %p227
      %p230 = scmp.ne.s32.totalorder %s215, %s229
      %p231 = scmp.eq.s32.totalorder %s48, 0
      %p232 = por %p230, %p231
      %s233 = ssub.s32 %s42, %s49
      %p234 = scmp.eq.s32.totalorder %s233, 0
      %s236 = sadd.s32 %s235, 1
      %s237 = scalar_select %p234, %s235, %s236
      %p240 = pneg %p234
      %p241 = scmp.eq.s32.totalorder %s42, 1
      %p242 = por %p240, %p241
      %p243 = scmp.ne.s32.totalorder %s235, %s238
      %p244 = scmp.eq.s32.totalorder %s42, 0
      %p245 = por %p243, %p244
      %p246 = scmp.ne.s32.totalorder %s235, %s238
      %p247 = scmp.eq.s32.totalorder %s47, 1
      %p248 = por %p246, %p247
      %p249 = scmp.ne.s32.totalorder %s238, %s239
      %p250 = scmp.eq.s32.totalorder %s47, 0
      %p251 = por %p249, %p250
      %p252 = scmp.ne.s32.totalorder %s238, %s239
      %p253 = scmp.eq.s32.totalorder %s48, 1
      %p254 = por %p252, %p253
      %p256 = scmp.ne.s32.totalorder %s239, %s255
      %p257 = scmp.eq.s32.totalorder %s48, 0
      %p258 = por %p256, %p257
      %s259 = ssub.s32 %s42, %s49
      %p260 = scmp.eq.s32.totalorder %s259, 0
      %s262 = sadd.s32 %s261, 1
      %s263 = scalar_select %p260, %s261, %s262
      %p266 = pneg %p260
      %p267 = scmp.eq.s32.totalorder %s42, 1
      %p268 = por %p266, %p267
      %p269 = scmp.ne.s32.totalorder %s261, %s264
      %p270 = scmp.eq.s32.totalorder %s42, 0
      %p271 = por %p269, %p270
      %p272 = scmp.ne.s32.totalorder %s261, %s264
      %p273 = scmp.eq.s32.totalorder %s47, 1
      %p274 = por %p272, %p273
      %p275 = scmp.ne.s32.totalorder %s264, %s265
      %p276 = scmp.eq.s32.totalorder %s47, 0
      %p277 = por %p275, %p276
      %p278 = scmp.ne.s32.totalorder %s264, %s265
      %p279 = scmp.eq.s32.totalorder %s48, 1
      %p280 = por %p278, %p279
      %p282 = scmp.ne.s32.totalorder %s265, %s281
      %p283 = scmp.eq.s32.totalorder %s48, 0
      %p284 = por %p282, %p283
      %s285 = ssub.s32 %s42, %s49
      %p286 = scmp.eq.s32.totalorder %s285, 0
      %s288 = sadd.s32 %s287, 1
      %s289 = scalar_select %p286, %s287, %s288
      %p292 = pneg %p286
      %p293 = scmp.eq.s32.totalorder %s42, 1
      %p294 = por %p292, %p293
      %p295 = scmp.ne.s32.totalorder %s287, %s290
      %p296 = scmp.eq.s32.totalorder %s42, 0
      %p297 = por %p295, %p296
      %p298 = scmp.ne.s32.totalorder %s287, %s290
      %p299 = scmp.eq.s32.totalorder %s47, 1
      %p300 = por %p298, %p299
      %p301 = scmp.ne.s32.totalorder %s290, %s291
      %p302 = scmp.eq.s32.totalorder %s47, 0
      %p303 = por %p301, %p302
      %p304 = scmp.ne.s32.totalorder %s290, %s291
      %p305 = scmp.eq.s32.totalorder %s48, 1
      %p306 = por %p304, %p305
      %p308 = scmp.ne.s32.totalorder %s291, %s307
      %p309 = scmp.eq.s32.totalorder %s48, 0
      %p310 = por %p308, %p309
      %s311 = ssub.s32 %s42, %s49
      %p312 = scmp.eq.s32.totalorder %s311, 0
      %s314 = sadd.s32 %s313, 1
      %s315 = scalar_select %p312, %s313, %s314
      %p318 = pneg %p312
      %p319 = scmp.eq.s32.totalorder %s42, 1
      %p320 = por %p318, %p319
      %p321 = scmp.ne.s32.totalorder %s313, %s316
      %p322 = scmp.eq.s32.totalorder %s42, 0
      %p323 = por %p321, %p322
      %p324 = scmp.ne.s32.totalorder %s313, %s316
      %p325 = scmp.eq.s32.totalorder %s47, 1
      %p326 = por %p324, %p325
      %p327 = scmp.ne.s32.totalorder %s316, %s317
      %p328 = scmp.eq.s32.totalorder %s47, 0
      %p329 = por %p327, %p328
      %p330 = scmp.ne.s32.totalorder %s316, %s317
      %p331 = scmp.eq.s32.totalorder %s48, 1
      %p332 = por %p330, %p331
      %p334 = scmp.ne.s32.totalorder %s317, %s333
      %p335 = scmp.eq.s32.totalorder %s48, 0
      %p336 = por %p334, %p335
      %s338 = sadd.s32 %s337, 1
      %p341 = scmp.eq.s32.totalorder %s42, 1
      %p342 = scmp.ne.s32.totalorder %s337, %s339
      %p343 = scmp.eq.s32.totalorder %s42, 0
      %p344 = por %p342, %p343
      %p345 = scmp.ne.s32.totalorder %s337, %s339
      %p346 = scmp.eq.s32.totalorder %s47, 1
      %p347 = por %p345, %p346
      %p348 = scmp.ne.s32.totalorder %s339, %s340
      %p349 = scmp.eq.s32.totalorder %s47, 0
      %p350 = por %p348, %p349
      %p351 = scmp.ne.s32.totalorder %s339, %s340
      %p352 = scmp.eq.s32.totalorder %s48, 1
      %p353 = por %p351, %p352
      %p355 = scmp.ne.s32.totalorder %s340, %s354
      %p356 = scmp.eq.s32.totalorder %s48, 0
      %p357 = por %p355, %p356
      %s359 = sadd.s32 %s358, 1
      %p362 = scmp.eq.s32.totalorder %s42, 1
      %p363 = scmp.ne.s32.totalorder %s358, %s360
      %p364 = scmp.eq.s32.totalorder %s42, 0
      %p365 = por %p363, %p364
      %p366 = scmp.ne.s32.totalorder %s358, %s360
      %p367 = scmp.eq.s32.totalorder %s47, 1
      %p368 = por %p366, %p367
      %p369 = scmp.ne.s32.totalorder %s360, %s361
      %p370 = scmp.eq.s32.totalorder %s47, 0
      %p371 = por %p369, %p370
      %p372 = scmp.ne.s32.totalorder %s360, %s361
      %p373 = scmp.eq.s32.totalorder %s48, 1
      %p374 = por %p372, %p373
      %p376 = scmp.ne.s32.totalorder %s361, %s375
      %p377 = scmp.eq.s32.totalorder %s48, 0
      %p378 = por %p376, %p377
      %s380 = sadd.s32 %s379, 1
      %p383 = scmp.eq.s32.totalorder %s42, 1
      %p384 = scmp.ne.s32.totalorder %s379, %s381
      %p385 = scmp.eq.s32.totalorder %s42, 0
      %p386 = por %p384, %p385
      %p387 = scmp.ne.s32.totalorder %s379, %s381
      %p388 = scmp.eq.s32.totalorder %s47, 1
      %p389 = por %p387, %p388
      %p390 = scmp.ne.s32.totalorder %s381, %s382
      %p391 = scmp.eq.s32.totalorder %s47, 0
      %p392 = por %p390, %p391
      %p393 = scmp.ne.s32.totalorder %s381, %s382
      %p394 = scmp.eq.s32.totalorder %s48, 1
      %p395 = por %p393, %p394
      %p397 = scmp.ne.s32.totalorder %s382, %s396
      %p398 = scmp.eq.s32.totalorder %s48, 0
      %p399 = por %p397, %p398
      %s401 = sadd.s32 %s400, 1
      %p404 = scmp.eq.s32.totalorder %s42, 1
      %p405 = scmp.ne.s32.totalorder %s400, %s402
      %p406 = scmp.eq.s32.totalorder %s42, 0
      %p407 = por %p405, %p406
      %p408 = scmp.ne.s32.totalorder %s400, %s402
      %p409 = scmp.eq.s32.totalorder %s47, 1
      %p410 = por %p408, %p409
      %p411 = scmp.ne.s32.totalorder %s402, %s403
      %p412 = scmp.eq.s32.totalorder %s47, 0
      %p413 = por %p411, %p412
      %p414 = scmp.ne.s32.totalorder %s402, %s403
      %p415 = scmp.eq.s32.totalorder %s48, 1
      %p416 = por %p414, %p415
      %p418 = scmp.ne.s32.totalorder %s403, %s417
      %p419 = scmp.eq.s32.totalorder %s48, 0
      %p420 = por %p418, %p419
      %s422 = sadd.s32 %s421, 1
      %p425 = scmp.eq.s32.totalorder %s42, 1
      %p426 = scmp.ne.s32.totalorder %s421, %s423
      %p427 = scmp.eq.s32.totalorder %s42, 0
      %p428 = por %p426, %p427
      %p429 = scmp.ne.s32.totalorder %s421, %s423
      %p430 = scmp.eq.s32.totalorder %s47, 1
      %p431 = por %p429, %p430
      %p432 = scmp.ne.s32.totalorder %s423, %s424
      %p433 = scmp.eq.s32.totalorder %s47, 0
      %p434 = por %p432, %p433
      %p435 = scmp.ne.s32.totalorder %s423, %s424
      %p436 = scmp.eq.s32.totalorder %s48, 1
      %p437 = por %p435, %p436
      %p439 = scmp.ne.s32.totalorder %s424, %s438
      %p440 = scmp.eq.s32.totalorder %s48, 0
      %p441 = por %p439, %p440
      %s443 = sadd.s32 %s442, 1
      %p446 = scmp.eq.s32.totalorder %s42, 1
      %p447 = scmp.ne.s32.totalorder %s442, %s444
      %p448 = scmp.eq.s32.totalorder %s42, 0
      %p449 = por %p447, %p448
      %p450 = scmp.ne.s32.totalorder %s442, %s444
      %p451 = scmp.eq.s32.totalorder %s47, 1
      %p452 = por %p450, %p451
      %p453 = scmp.ne.s32.totalorder %s444, %s445
      %p454 = scmp.eq.s32.totalorder %s47, 0
      %p455 = por %p453, %p454
      %p456 = scmp.ne.s32.totalorder %s444, %s445
      %p457 = scmp.eq.s32.totalorder %s48, 1
      %p458 = por %p456, %p457
      %p460 = scmp.ne.s32.totalorder %s445, %s459
      %p461 = scmp.eq.s32.totalorder %s48, 0
      %p462 = por %p460, %p461
      %s464 = sadd.s32 %s463, 1
      %p467 = scmp.eq.s32.totalorder %s42, 1
      %p468 = scmp.ne.s32.totalorder %s463, %s465
      %p469 = scmp.eq.s32.totalorder %s42, 0
      %p470 = por %p468, %p469
      %p471 = scmp.ne.s32.totalorder %s463, %s465
      %p472 = scmp.eq.s32.totalorder %s47, 1
      %p473 = por %p471, %p472
      %p474 = scmp.ne.s32.totalorder %s465, %s466
      %p475 = scmp.eq.s32.totalorder %s47, 0
      %p476 = por %p474, %p475
      %p477 = scmp.ne.s32.totalorder %s465, %s466
      %p478 = scmp.eq.s32.totalorder %s48, 1
      %p479 = por %p477, %p478
      %p481 = scmp.ne.s32.totalorder %s466, %s480
      %p482 = scmp.eq.s32.totalorder %s48, 0
      %p483 = por %p481, %p482
      %s485 = sadd.s32 %s484, 1
      %p488 = scmp.eq.s32.totalorder %s42, 1
      %p489 = scmp.ne.s32.totalorder %s484, %s486
      %p490 = scmp.eq.s32.totalorder %s42, 0
      %p491 = por %p489, %p490
      %p492 = scmp.ne.s32.totalorder %s484, %s486
      %p493 = scmp.eq.s32.totalorder %s47, 1
      %p494 = por %p492, %p493
      %p495 = scmp.ne.s32.totalorder %s486, %s487
      %p496 = scmp.eq.s32.totalorder %s47, 0
      %p497 = por %p495, %p496
      %p498 = scmp.ne.s32.totalorder %s486, %s487
      %p499 = scmp.eq.s32.totalorder %s48, 1
      %p500 = por %p498, %p499
      %p502 = scmp.ne.s32.totalorder %s487, %s501
      %p503 = scmp.eq.s32.totalorder %s48, 0
      %p504 = por %p502, %p503
      %s505 = ssub.s32 %s42, %s49
      %p506 = scmp.eq.s32.totalorder %s505, 0
      %s508 = sadd.s32 %s507, 1
      %s509 = scalar_select %p506, %s507, %s508
      %p512 = pneg %p506
      %p513 = scmp.eq.s32.totalorder %s42, 1
      %p514 = por %p512, %p513
      %p515 = scmp.ne.s32.totalorder %s507, %s510
      %p516 = scmp.eq.s32.totalorder %s42, 0
      %p517 = por %p515, %p516
      %p518 = scmp.ne.s32.totalorder %s507, %s510
      %p519 = scmp.eq.s32.totalorder %s47, 1
      %p520 = por %p518, %p519
      %p521 = scmp.ne.s32.totalorder %s510, %s511
      %p522 = scmp.eq.s32.totalorder %s47, 0
      %p523 = por %p521, %p522
      %p524 = scmp.ne.s32.totalorder %s510, %s511
      %p525 = scmp.eq.s32.totalorder %s48, 1
      %p526 = por %p524, %p525
      %p528 = scmp.ne.s32.totalorder %s511, %s527
      %p529 = scmp.eq.s32.totalorder %s48, 0
      %p530 = por %p528, %p529
      %s531 = ssub.s32 %s42, %s49
      %p532 = scmp.eq.s32.totalorder %s531, 0
      %s534 = sadd.s32 %s533, 1
      %s535 = scalar_select %p532, %s533, %s534
      %p538 = pneg %p532
      %p539 = scmp.eq.s32.totalorder %s42, 1
      %p540 = por %p538, %p539
      %p541 = scmp.ne.s32.totalorder %s533, %s536
      %p542 = scmp.eq.s32.totalorder %s42, 0
      %p543 = por %p541, %p542
      %p544 = scmp.ne.s32.totalorder %s533, %s536
      %p545 = scmp.eq.s32.totalorder %s47, 1
      %p546 = por %p544, %p545
      %p547 = scmp.ne.s32.totalorder %s536, %s537
      %p548 = scmp.eq.s32.totalorder %s47, 0
      %p549 = por %p547, %p548
      %p550 = scmp.ne.s32.totalorder %s536, %s537
      %p551 = scmp.eq.s32.totalorder %s48, 1
      %p552 = por %p550, %p551
      %p554 = scmp.ne.s32.totalorder %s537, %s553
      %p555 = scmp.eq.s32.totalorder %s48, 0
      %p556 = por %p554, %p555
      %s557 = ssub.s32 %s42, %s49
      %p558 = scmp.eq.s32.totalorder %s557, 0
      %s560 = sadd.s32 %s559, 1
      %s561 = scalar_select %p558, %s559, %s560
      %p564 = pneg %p558
      %p565 = scmp.eq.s32.totalorder %s42, 1
      %p566 = por %p564, %p565
      %p567 = scmp.ne.s32.totalorder %s559, %s562
      %p568 = scmp.eq.s32.totalorder %s42, 0
      %p569 = por %p567, %p568
      %p570 = scmp.ne.s32.totalorder %s559, %s562
      %p571 = scmp.eq.s32.totalorder %s47, 1
      %p572 = por %p570, %p571
      %p573 = scmp.ne.s32.totalorder %s562, %s563
      %p574 = scmp.eq.s32.totalorder %s47, 0
      %p575 = por %p573, %p574
      %p576 = scmp.ne.s32.totalorder %s562, %s563
      %p577 = scmp.eq.s32.totalorder %s48, 1
      %p578 = por %p576, %p577
      %p580 = scmp.ne.s32.totalorder %s563, %s579
      %p581 = scmp.eq.s32.totalorder %s48, 0
      %p582 = por %p580, %p581
      %s583 = ssub.s32 %s42, %s49
      %p584 = scmp.eq.s32.totalorder %s583, 0
      %s586 = sadd.s32 %s585, 1
      %s587 = scalar_select %p584, %s585, %s586
      %p590 = pneg %p584
      %p591 = scmp.eq.s32.totalorder %s42, 1
      %p592 = por %p590, %p591
      %p593 = scmp.ne.s32.totalorder %s585, %s588
      %p594 = scmp.eq.s32.totalorder %s42, 0
      %p595 = por %p593, %p594
      %p596 = scmp.ne.s32.totalorder %s585, %s588
      %p597 = scmp.eq.s32.totalorder %s47, 1
      %p598 = por %p596, %p597
      %p599 = scmp.ne.s32.totalorder %s588, %s589
      %p600 = scmp.eq.s32.totalorder %s47, 0
      %p601 = por %p599, %p600
      %p602 = scmp.ne.s32.totalorder %s588, %s589
      %p603 = scmp.eq.s32.totalorder %s48, 1
      %p604 = por %p602, %p603
      %p606 = scmp.ne.s32.totalorder %s589, %s605
      %p607 = scmp.eq.s32.totalorder %s48, 0
      %p608 = por %p606, %p607
      %p609 = scmp.le.s32.totalorder 1, %s42
      %p610 = scmp.lt.s32.totalorder %s42, 3
      %p611 = pnand %p609, %p610
      %p612 = pneg %p611
      // Predicated region
      $region9: #{_run_episode_jit.5} parent=5 // pred_check
        _
      $region10: #{_run_episode_jit.5} parent=5 // pred_check_branch
        %614 = sbr.rel (%p611) target = $region12
      $region11: #{_run_episode_jit.5} parent=5 // pred_region
        %s615 = ssub.s32 %s42, 1
        // Predicated region
        $region13: #{_run_episode_jit.5} parent=11 // pred_check
          %p616 = pneg %p63
        $region14: #{_run_episode_jit.5} parent=11 // pred_check_branch
          %618 = sbr.rel (%p616) target = $region16
        $region15: #{_run_episode_jit.5} parent=11 // pred_region
          %620 = vsyncadd [#allocation6], 0
          %s622 = sshll.u32 %s1, 4
          %s623 = int_to_ptr.vmem [resolvable:$true] %s622
          %625 = dma.vmem_to_smem %s623, 16, [#allocation5], [#allocation6]
        $region16: #{_run_episode_jit.5} parent=11 // pred_fallthru
          _
        // Predicated region
        $region17: #{_run_episode_jit.5} parent=11 // pred_check
          %p626 = pneg %p84
        $region18: #{_run_episode_jit.5} parent=11 // pred_check_branch
          %628 = sbr.rel (%p626) target = $region20
        $region19: #{_run_episode_jit.5} parent=11 // pred_region
          _
        $region20: #{_run_episode_jit.5} parent=11 // pred_fallthru
          _
        // Predicated region
        $region21: #{_run_episode_jit.5} parent=11 // pred_check
          %p629 = pneg %p105
        $region22: #{_run_episode_jit.5} parent=11 // pred_check_branch
          %631 = sbr.rel (%p629) target = $region24
        $region23: #{_run_episode_jit.5} parent=11 // pred_region
          %633 = vsyncadd [#allocation8], 0
          %s635 = sshll.u32 %s3, 4
          %s636 = int_to_ptr.vmem [resolvable:$true] %s635
          %638 = dma.vmem_to_smem %s636, 16, [#allocation7], [#allocation8]
        $region24: #{_run_episode_jit.5} parent=11 // pred_fallthru
          _
        // Predicated region
        $region25: #{_run_episode_jit.5} parent=11 // pred_check
          %p639 = pneg %p126
        $region26: #{_run_episode_jit.5} parent=11 // pred_check_branch
          %641 = sbr.rel (%p639) target = $region28
        $region27: #{_run_episode_jit.5} parent=11 // pred_region
          %643 = vsyncadd [#allocation8], 0
          %s645 = sshll.u32 %s4, 4
          %s646 = int_to_ptr.vmem [resolvable:$true] %s645
          %648 = dma.vmem_to_smem %s646, 16, [#allocation9], [#allocation8]
        $region28: #{_run_episode_jit.5} parent=11 // pred_fallthru
          _
        // Predicated region
        $region29: #{_run_episode_jit.5} parent=11 // pred_check
          %p649 = pneg %p225
        $region30: #{_run_episode_jit.5} parent=11 // pred_check_branch
          %651 = sbr.rel (%p649) target = $region32
        $region31: #{_run_episode_jit.5} parent=11 // pred_region
          _
        $region32: #{_run_episode_jit.5} parent=11 // pred_fallthru
          _
        // Predicated region
        $region33: #{_run_episode_jit.5} parent=11 // pred_check
          %p652 = pneg %p350
        $region34: #{_run_episode_jit.5} parent=11 // pred_check_branch
          %654 = sbr.rel (%p652) target = $region36
        $region35: #{_run_episode_jit.5} parent=11 // pred_region
          _
        $region36: #{_run_episode_jit.5} parent=11 // pred_fallthru
          _
        // Predicated region
        $region37: #{_run_episode_jit.5} parent=11 // pred_check
          %p655 = pneg %p371
        $region38: #{_run_episode_jit.5} parent=11 // pred_check_branch
          %657 = sbr.rel (%p655) target = $region40
        $region39: #{_run_episode_jit.5} parent=11 // pred_region
          _
        $region40: #{_run_episode_jit.5} parent=11 // pred_fallthru
          _
        // Predicated region
        $region41: #{_run_episode_jit.5} parent=11 // pred_check
          %p658 = pneg %p392
        $region42: #{_run_episode_jit.5} parent=11 // pred_check_branch
          %660 = sbr.rel (%p658) target = $region44
        $region43: #{_run_episode_jit.5} parent=11 // pred_region
          _
        $region44: #{_run_episode_jit.5} parent=11 // pred_fallthru
          _
        // Predicated region
        $region45: #{_run_episode_jit.5} parent=11 // pred_check
          %p661 = pneg %p413
        $region46: #{_run_episode_jit.5} parent=11 // pred_check_branch
          %663 = sbr.rel (%p661) target = $region48
        $region47: #{_run_episode_jit.5} parent=11 // pred_region
          _
        $region48: #{_run_episode_jit.5} parent=11 // pred_fallthru
          _
        // Predicated region
        $region49: #{_run_episode_jit.5} parent=11 // pred_check
          %p664 = pneg %p434
        $region50: #{_run_episode_jit.5} parent=11 // pred_check_branch
          %666 = sbr.rel (%p664) target = $region52
        $region51: #{_run_episode_jit.5} parent=11 // pred_region
          _
        $region52: #{_run_episode_jit.5} parent=11 // pred_fallthru
          _
        // Predicated region
        $region53: #{_run_episode_jit.5} parent=11 // pred_check
          %p667 = pneg %p455
        $region54: #{_run_episode_jit.5} parent=11 // pred_check_branch
          %669 = sbr.rel (%p667) target = $region56
        $region55: #{_run_episode_jit.5} parent=11 // pred_region
          _
        $region56: #{_run_episode_jit.5} parent=11 // pred_fallthru
          _
        // Predicated region
        $region57: #{_run_episode_jit.5} parent=11 // pred_check
          %p670 = pneg %p476
        $region58: #{_run_episode_jit.5} parent=11 // pred_check_branch
          %672 = sbr.rel (%p670) target = $region60
        $region59: #{_run_episode_jit.5} parent=11 // pred_region
          _
        $region60: #{_run_episode_jit.5} parent=11 // pred_fallthru
          _
        // Predicated region
        $region61: #{_run_episode_jit.5} parent=11 // pred_check
          %p673 = pneg %p497
        $region62: #{_run_episode_jit.5} parent=11 // pred_check_branch
          %675 = sbr.rel (%p673) target = $region64
        $region63: #{_run_episode_jit.5} parent=11 // pred_region
          _
        $region64: #{_run_episode_jit.5} parent=11 // pred_fallthru
          _
      $region12: #{_run_episode_jit.5} parent=5 // pred_fallthru
        _
      %p676 = scmp.lt.s32.totalorder %s42, 2
      // Predicated region
      $region65: #{_run_episode_jit.5} parent=5 // pred_check
        %p677 = pneg %p676
      $region66: #{_run_episode_jit.5} parent=5 // pred_check_branch
        %679 = sbr.rel (%p677) target = $region68
      $region67: #{_run_episode_jit.5} parent=5 // pred_region
        // Predicated region
        $region69: #{_run_episode_jit.5} parent=67 // pred_check
          %p680 = pneg %p146
        $region70: #{_run_episode_jit.5} parent=67 // pred_check_branch
          %682 = sbr.rel (%p680) target = $region72
        $region71: #{_run_episode_jit.5} parent=67 // pred_region
          %p683 = scmp.lt.s32.totalorder %s42, 1
          %s684 = scalar_select %p683, %s42, 1
          %s685 = smul.addr %s684, 8
          %s686 = scalar_lea.vmem %s5, %s685
        $region72: #{_run_episode_jit.5} parent=67 // pred_fallthru
          _
        // Predicated region
        $region73: #{_run_episode_jit.5} parent=67 // pred_check
          %p687 = pneg %p172
        $region74: #{_run_episode_jit.5} parent=67 // pred_check_branch
          %689 = sbr.rel (%p687) target = $region76
        $region75: #{_run_episode_jit.5} parent=67 // pred_region
          %p690 = scmp.lt.s32.totalorder %s42, 1
          %s691 = scalar_select %p690, %s42, 1
          %s692 = smul.addr %s691, 8
          %s693 = scalar_lea.vmem %s6, %s692
        $region76: #{_run_episode_jit.5} parent=67 // pred_fallthru
          _
        // Predicated region
        $region77: #{_run_episode_jit.5} parent=67 // pred_check
          %p694 = pneg %p198
        $region78: #{_run_episode_jit.5} parent=67 // pred_check_branch
          %696 = sbr.rel (%p694) target = $region80
        $region79: #{_run_episode_jit.5} parent=67 // pred_region
          %p697 = scmp.lt.s32.totalorder %s42, 1
          %s698 = scalar_select %p697, %s42, 1
          %s699 = scalar_lea.vmem %s7, %s698
        $region80: #{_run_episode_jit.5} parent=67 // pred_fallthru
          _
        // Predicated region
        $region81: #{_run_episode_jit.5} parent=67 // pred_check
          %p700 = pneg %p245
        $region82: #{_run_episode_jit.5} parent=67 // pred_check_branch
          %702 = sbr.rel (%p700) target = $region84
        $region83: #{_run_episode_jit.5} parent=67 // pred_region
          %p703 = scmp.lt.s32.totalorder %s42, 1
          %s704 = scalar_select %p703, %s42, 1
          %s705 = smul.addr %s704, 8
          %s706 = scalar_lea.vmem %s9, %s705
        $region84: #{_run_episode_jit.5} parent=67 // pred_fallthru
          _
        // Predicated region
        $region85: #{_run_episode_jit.5} parent=67 // pred_check
          %p707 = pneg %p271
        $region86: #{_run_episode_jit.5} parent=67 // pred_check_branch
          %709 = sbr.rel (%p707) target = $region88
        $region87: #{_run_episode_jit.5} parent=67 // pred_region
          %p710 = scmp.lt.s32.totalorder %s42, 1
          %s711 = scalar_select %p710, %s42, 1
          %s712 = smul.addr %s711, 8
          %s713 = scalar_lea.vmem %s10, %s712
        $region88: #{_run_episode_jit.5} parent=67 // pred_fallthru
          _
        // Predicated region
        $region89: #{_run_episode_jit.5} parent=67 // pred_check
          %p714 = pneg %p297
        $region90: #{_run_episode_jit.5} parent=67 // pred_check_branch
          %716 = sbr.rel (%p714) target = $region92
        $region91: #{_run_episode_jit.5} parent=67 // pred_region
          %p717 = scmp.lt.s32.totalorder %s42, 1
          %s718 = scalar_select %p717, %s42, 1
          %s719 = scalar_lea.vmem %s11, %s718
        $region92: #{_run_episode_jit.5} parent=67 // pred_fallthru
          _
        // Predicated region
        $region93: #{_run_episode_jit.5} parent=67 // pred_check
          %p720 = pneg %p323
        $region94: #{_run_episode_jit.5} parent=67 // pred_check_branch
          %722 = sbr.rel (%p720) target = $region96
        $region95: #{_run_episode_jit.5} parent=67 // pred_region
          %p723 = scmp.lt.s32.totalorder %s42, 1
          %s724 = scalar_select %p723, %s42, 1
          %s725 = scalar_lea.vmem %s12, %s724
        $region96: #{_run_episode_jit.5} parent=67 // pred_fallthru
          _
      $region68: #{_run_episode_jit.5} parent=5 // pred_fallthru
        _
      %p726 = scmp.le.s32.totalorder 1, %s42
      %p727 = scmp.lt.s32.totalorder %s42, 3
      %p728 = pnand %p726, %p727
      %p729 = pneg %p728
      // Predicated region
      $region97: #{_run_episode_jit.5} parent=5 // pred_check
        _
      $region98: #{_run_episode_jit.5} parent=5 // pred_check_branch
        %731 = sbr.rel (%p728) target = $region100
      $region99: #{_run_episode_jit.5} parent=5 // pred_region
        %s732 = ssub.s32 %s42, 1
        // Predicated region
        $region101: #{_run_episode_jit.5} parent=99 // pred_check
          %p733 = pneg %p63
        $region102: #{_run_episode_jit.5} parent=99 // pred_check_branch
          %735 = sbr.rel (%p733) target = $region104
        $region103: #{_run_episode_jit.5} parent=99 // pred_region
          %737 = dma.done [#allocation6], 16
        $region104: #{_run_episode_jit.5} parent=99 // pred_fallthru
          _
        // Predicated region
        $region105: #{_run_episode_jit.5} parent=99 // pred_check
          %p738 = pneg %p105
        $region106: #{_run_episode_jit.5} parent=99 // pred_check_branch
          %740 = sbr.rel (%p738) target = $region108
        $region107: #{_run_episode_jit.5} parent=99 // pred_region
          %742 = dma.done [#allocation8], 16
        $region108: #{_run_episode_jit.5} parent=99 // pred_fallthru
          _
        // Predicated region
        $region109: #{_run_episode_jit.5} parent=99 // pred_check
          %p743 = pneg %p126
        $region110: #{_run_episode_jit.5} parent=99 // pred_check_branch
          %745 = sbr.rel (%p743) target = $region112
        $region111: #{_run_episode_jit.5} parent=99 // pred_region
          %747 = dma.done [#allocation8], 16
        $region112: #{_run_episode_jit.5} parent=99 // pred_fallthru
          _
        %748 = sfence
        %p749 = pneg %p63
        %p750 = pneg %p60
        %p751 = pneg %p84
        %p752 = pneg %p81
        %p753 = pneg %p105
        %p754 = pneg %p102
        %p755 = pneg %p126
        %p756 = pneg %p123
        %p757 = scmp.lt.s32.totalorder %s47, 1
        %s758 = scalar_select %p757, %s47, 1
        %s759 = smul.addr %s758, 8
        %s760 = scalar_lea.vmem %s5, %s759
        %p761 = pneg %p152
        %p762 = pneg %p149
        %p763 = scmp.lt.s32.totalorder %s47, 1
        %s764 = scalar_select %p763, %s47, 1
        %s765 = smul.addr %s764, 8
        %s766 = scalar_lea.vmem %s6, %s765
        %p767 = pneg %p178
        %p768 = pneg %p175
        %p769 = scmp.lt.s32.totalorder %s47, 1
        %s770 = scalar_select %p769, %s47, 1
        %s771 = scalar_lea.vmem %s7, %s770
        %p772 = pneg %p204
        %p773 = pneg %p201
        %p774 = pneg %p225
        %p775 = pneg %p222
        %p776 = scmp.lt.s32.totalorder %s47, 1
        %s777 = scalar_select %p776, %s47, 1
        %s778 = smul.addr %s777, 8
        %s779 = scalar_lea.vmem %s9, %s778
        %p780 = pneg %p251
        %p781 = pneg %p248
        %p782 = scmp.lt.s32.totalorder %s47, 1
        %s783 = scalar_select %p782, %s47, 1
        %s784 = smul.addr %s783, 8
        %s785 = scalar_lea.vmem %s10, %s784
        %p786 = pneg %p277
        %p787 = pneg %p274
        %p788 = scmp.lt.s32.totalorder %s47, 1
        %s789 = scalar_select %p788, %s47, 1
        %s790 = scalar_lea.vmem %s11, %s789
        %p791 = pneg %p303
        %p792 = pneg %p300
        %p793 = scmp.lt.s32.totalorder %s47, 1
        %s794 = scalar_select %p793, %s47, 1
        %s795 = scalar_lea.vmem %s12, %s794
        %p796 = pneg %p329
        %p797 = pneg %p326
        %p798 = pneg %p350
        %p799 = pneg %p347
        %p800 = pneg %p371
        %p801 = pneg %p368
        %p802 = pneg %p392
        %p803 = pneg %p389
        %p804 = pneg %p413
        %p805 = pneg %p410
        %p806 = pneg %p434
        %p807 = pneg %p431
        %p808 = pneg %p455
        %p809 = pneg %p452
        %p810 = pneg %p476
        %p811 = pneg %p473
        %p812 = pneg %p497
        %p813 = pneg %p494
        %p814 = pneg %p523
        %p815 = pneg %p520
        %p816 = scmp.lt.s32.totalorder %s47, 1
        %s817 = scalar_select %p816, %s47, 1
        %s818 = scalar_lea.vmem %s21, %s817
        %p819 = pneg %p549
        %p820 = pneg %p546
        %p821 = scmp.lt.s32.totalorder %s47, 1
        %s822 = scalar_select %p821, %s47, 1
        %s823 = smul.addr %s822, 8
        %s824 = scalar_lea.vmem %s22, %s823
        %p825 = pneg %p575
        %p826 = pneg %p572
        %p827 = scmp.lt.s32.totalorder %s47, 1
        %s828 = scalar_select %p827, %s47, 1
        %s829 = scalar_lea.vmem %s23, %s828
        %p830 = pneg %p601
        %p831 = pneg %p598
        %p832 = scmp.lt.s32.totalorder %s47, 1
        %s833 = scalar_select %p832, %s47, 1
        %s834 = scalar_lea.vmem %s24, %s833
        %p835 = scmp.lt.s32.totalorder %s47, 1
        %s836 = scalar_select %p835, %s47, 1
        %s837 = smul.addr %s836, 8
        %s838 = scalar_lea.vmem %s5, %s837
        %p839 = scmp.lt.s32.totalorder %s47, 1
        %s840 = scalar_select %p839, %s47, 1
        %s841 = smul.addr %s840, 8
        %s842 = scalar_lea.vmem %s6, %s841
        %p843 = scmp.lt.s32.totalorder %s47, 1
        %s844 = scalar_select %p843, %s47, 1
        %s845 = scalar_lea.vmem %s7, %s844
        %p846 = scmp.lt.s32.totalorder %s47, 1
        %s847 = scalar_select %p846, %s47, 1
        %s848 = smul.addr %s847, 8
        %s849 = scalar_lea.vmem %s9, %s848
        %p850 = scmp.lt.s32.totalorder %s47, 1
        %s851 = scalar_select %p850, %s47, 1
        %s852 = smul.addr %s851, 8
        %s853 = scalar_lea.vmem %s10, %s852
        %p854 = scmp.lt.s32.totalorder %s47, 1
        %s855 = scalar_select %p854, %s47, 1
        %s856 = scalar_lea.vmem %s11, %s855
        %p857 = scmp.lt.s32.totalorder %s47, 1
        %s858 = scalar_select %p857, %s47, 1
        %s859 = scalar_lea.vmem %s12, %s858
        %p860 = scmp.lt.s32.totalorder %s47, 1
        %s861 = scalar_select %p860, %s47, 1
        %s862 = scalar_lea.vmem %s21, %s861
        %p863 = scmp.lt.s32.totalorder %s47, 1
        %s864 = scalar_select %p863, %s47, 1
        %s865 = smul.addr %s864, 8
        %s866 = scalar_lea.vmem %s22, %s865
        %p867 = scmp.lt.s32.totalorder %s47, 1
        %s868 = scalar_select %p867, %s47, 1
        %s869 = scalar_lea.vmem %s23, %s868
        %p870 = scmp.lt.s32.totalorder %s47, 1
        %s871 = scalar_select %p870, %s47, 1
        %s872 = scalar_lea.vmem %s24, %s871
        %s873 = sld [smem:[#allocation3 + %s47]]
        %s874 = sld [smem:[#allocation5 + %s47]]
        %s875 = sld [smem:[#allocation4]]
        %s876 = sld [smem:[#allocation7 + %s47]]
        %s877 = sld [smem:[#allocation9 + %s47]]
        %v878 = vld [vmem:[%s838] sm:$0xff]
        %v879 = vlaneseq
        %v880 = vand.u32 %v879, 127
        %v881 = vstv %s873
        %vm882 = vcmp.eq.s32.totalorder %v880, %v881
        %v883 = vsel %vm882, 1, 0
        %v884 = vcvt.s32.f32 %v883
        %v885 = vlaneseq
        %v886 = vshrl.u32 %v885, 7
        %vm887 = vcmp.eq.s32.totalorder %v886, %v881
        %v888 = vsel %vm887, 1, 0
        %v889 = vcvt.s32.f32 %v888
        %v890 = vld [vmem:[%s8] sm:$0xff]
        %v891 = vstv %s874
        %vm892 = vcmask 64512
        %v894 = vsel %vm892, %v884, 0
        %896 = vmatpush.msra.mxu0 0.0
        %897 = vmatpush.msra.mxu0 0.0
        %898 = vmatpush.msra.mxu0 0.0
        %899 = vmatpush.msra.mxu0 0.0
        %900 = vmatpush.msra.mxu0 0.0
        %901 = vmatpush.msra.mxu0 0.0
        %902 = vmatpush.msra.mxu0 0.0
        %903 = vmatpush.msra.mxu0 0.0
        %904 = vmatpush.msra.mxu0 0.0
        %905 = vmatpush.msra.mxu0 0.0
        %906 = vmatpush.msra.mxu0 0.0
        %907 = vmatpush.msra.mxu0 0.0
        %908 = vmatpush.msra.mxu0 0.0
        %909 = vmatpush.msra.mxu0 0.0
        %910 = vmatpush.msra.mxu0 0.0
        %911 = vmatpush.msra.mxu0 %v890
        %912 = vmatmul.f32.gmra.mxu0 %v894
        %v913 = vpop.f32.mrf.mxu0
        %v914 = vadd.f32 %v891, %v913
        %915 = vdwg.mxu0
        %v916 = vsub.f32 %v878, %v914
        %v917 = vmax.f32 %v916, 0.0
        %v918 = vadd.f32 %v914, %v917
        %v920 = vrot.slane %v878, 1
        %vm922 = vcmp.le.f32.partialorder %v918, %v920
        %v923 = vsel %vm922, 1, 0
        %v924 = vcvt.s32.f32 %v923
        %v925 = vrot.slane %v878, 2
        %v927 = vadd.f32 %v918, %v925
        %v928 = vrot.slane %v878, 4
        %v930 = vadd.f32 %v927, %v928
        %v931 = vstv %s875
        %vm932 = vcmp.le.f32.partialorder %v930, %v931
        %v933 = vsel %vm932, 1, 0
        %v934 = vcvt.s32.f32 %v933
        %v935 = vld [vmem:[%s845] sm:$0x1]
        %v936 = vsel %vm882, 0.0, %v935
        %v937 = vmul.f32 %v936, %v924
        %v938 = vmul.f32 %v937, %v934
        %p939 = scmp.gt.s32.totalorder %s877, 0
        %s940 = scalar_select %p939, 1, 0
        %v941 = vstv %s940
        %vm942 = vcmp.eq.s32.totalorder %v941, 1
        %v943 = vsel %vm942, %v938, %v935
        %vm944 = vcmask 57344
        %945 = vst.msk [vmem:[%s862] sm:$0x1] %vm944, %v943
        %v947 = vrot.slane %v918, 7
        %v949 = vsub.f32 %v878, %v947
        %v951 = vrot.slane %v927, 5
        %v953 = vsub.f32 %v878, %v951
        %v955 = vrot.slane %v917, 7
        %v958 = vrot.slane %v949, 7
        %vm960 = vcmask 1040384
        %v961 = vsel %vm960, %v914, %v955
        %vm962 = vcmask 1041408
        %v963 = vsel %vm962, %v961, %v958
        %vm964 = vcmask 1042432
        %v965 = vsel %vm964, %v963, %v953
        %v966 = vld [vmem:[%s842] sm:$0xff]
        %967 = vxpose.xlu0.b32.start [1/16] %v890, 128
        %968 = vxpose.xlu0.b32.cont [2/16] 0.0, 128
        %969 = vxpose.xlu0.b32.cont [3/16] 0.0, 128
        %970 = vxpose.xlu0.b32.cont [4/16] 0.0, 128
        %971 = vxpose.xlu0.b32.cont [5/16] 0.0, 128
        %972 = vxpose.xlu0.b32.cont [6/16] 0.0, 128
        %973 = vxpose.xlu0.b32.cont [7/16] 0.0, 128
        %974 = vxpose.xlu0.b32.cont [8/16] 0.0, 128
        %975 = vxpose.xlu0.b32.cont [9/16] 0.0, 128
        %976 = vxpose.xlu0.b32.cont [10/16] 0.0, 128
        %977 = vxpose.xlu0.b32.cont [11/16] 0.0, 128
        %978 = vxpose.xlu0.b32.cont [12/16] 0.0, 128
        %979 = vxpose.xlu0.b32.cont [13/16] 0.0, 128
        %980 = vxpose.xlu0.b32.cont [14/16] 0.0, 128
        %981 = vxpose.xlu0.b32.cont [15/16] 0.0, 128
        %982 = vxpose.xlu0.b32.end [16/16] 0.0, 128
        %v983 = vpop.trf.xlu0
        %v984 = vpop.trf.xlu0
        %v985 = vpop.trf.xlu0
        %v986 = vpop.trf.xlu0
        %v987 = vpop.trf.xlu0
        %v988 = vpop.trf.xlu0
        %v989 = vpop.trf.xlu0
        %v990 = vpop.trf.xlu0
        %v991 = vpop.trf.xlu0
        %v992 = vpop.trf.xlu0
        %v993 = vpop.trf.xlu0
        %v994 = vpop.trf.xlu0
        %v995 = vpop.trf.xlu0
        %v996 = vpop.trf.xlu0
        %v997 = vpop.trf.xlu0
        %v998 = vpop.trf.xlu0
        %v1000 = vsel %vm892, %v983, 0
        %1002 = vmatpush.msra.mxu0 0.0
        %1003 = vmatpush.msra.mxu0 0.0
        %1004 = vmatpush.msra.mxu0 0.0
        %1005 = vmatpush.msra.mxu0 0.0
        %1006 = vmatpush.msra.mxu0 0.0
        %1007 = vmatpush.msra.mxu0 0.0
        %1008 = vmatpush.msra.mxu0 0.0
        %1009 = vmatpush.msra.mxu0 0.0
        %1010 = vmatpush.msra.mxu0 0.0
        %1011 = vmatpush.msra.mxu0 0.0
        %1012 = vmatpush.msra.mxu0 0.0
        %1013 = vmatpush.msra.mxu0 0.0
        %1014 = vmatpush.msra.mxu0 0.0
        %1015 = vmatpush.msra.mxu0 0.0
        %1016 = vmatpush.msra.mxu0 0.0
        %1017 = vmatpush.msra.mxu0 %v889
        %1018 = vmatmul.f32.gmra.mxu0 %v1000
        %v1019 = vpop.f32.mrf.mxu0
        %v1020 = vadd.f32 %v891, %v1019
        %1021 = vdwg.mxu0
        %v1022 = vsub.f32 %v966, %v1020
        %v1023 = vmax.f32 %v1022, 0.0
        %v1024 = vadd.f32 %v1020, %v1023
        %1026 = vrot.lane.b32.xlu0 %v966, 126
        %v1027 = vpop.permute.xlu0 %1026
        %v1029 = vadd.f32 %v1024, %v1027
        %1031 = vset.pattern.permute.xlu0 0
        %1032 = vperm.xlu0 %1031, %v1029
        %v1033 = vpop.permute.xlu0 %1032
        %v1035 = vadd.f32 %v890, %v1033
        %1036 = vset.pattern.permute.xlu0 0
        %1037 = vperm.xlu0 %1036, %v966
        %v1038 = vpop.permute.xlu0 %1037
        %v1040 = vsub.f32 %v1038, %v1035
        %v1041 = vmax.f32 %v1040, 0.0
        %v1042 = vadd.f32 %v1035, %v1041
        %v1043 = vperm.slane %v878, 1
        %vm1044 = vcmp.le.f32.partialorder %v1042, %v1043
        %v1045 = vsel %vm1044, 1, 0
        %v1046 = vcvt.s32.f32 %v1045
        %v1047 = vperm.slane %v878, 2
        %v1048 = vadd.f32 %v1042, %v1047
        %v1049 = vperm.slane %v878, 4
        %v1050 = vadd.f32 %v1048, %v1049
        %v1051 = vstv %s876
        %vm1052 = vcmp.le.f32.partialorder %v1050, %v1051
        %v1053 = vsel %vm1052, 1, 0
        %v1054 = vcvt.s32.f32 %v1053
        %vm1055 = vcmp.eq.s32.totalorder %v886, %v880
        %v1056 = vperm.slane %v938, 0
        %v1057 = vmul.f32 %v1056, %v1046
        %v1058 = vmul.f32 %v1057, %v1054
        %v1059 = vsel %vm1055, 1.0, %v1058
        %v1060 = vsel %vm892, %v1059, 0.0
        %1061 = vadd.xlane.f32.xlu0 %v1060
        %v1062 = vpop.xlane.xlu0 %1061
        %v1063 = vmax.f32 %v1062, 1.0
        %v1064 = vrcp.pop %v1063
        %v1065 = vmul.f32 %v1059, %v1064
        %v1066 = vld [vmem:[%s13] sm:$0xf]
        %1067 = vxpose.xlu0.b32.start [1/16] %v965, 128
        %1068 = vxpose.xlu0.b32.cont [2/16] 0.0, 128
        %1069 = vxpose.xlu0.b32.cont [3/16] 0.0, 128
        %1070 = vxpose.xlu0.b32.cont [4/16] 0.0, 128
        %1071 = vxpose.xlu0.b32.cont [5/16] 0.0, 128
        %1072 = vxpose.xlu0.b32.cont [6/16] 0.0, 128
        %1073 = vxpose.xlu0.b32.cont [7/16] 0.0, 128
        %1074 = vxpose.xlu0.b32.cont [8/16] 0.0, 128
        %1075 = vxpose.xlu0.b32.cont [9/16] 0.0, 128
        %1076 = vxpose.xlu0.b32.cont [10/16] 0.0, 128
        %1077 = vxpose.xlu0.b32.cont [11/16] 0.0, 128
        %1078 = vxpose.xlu0.b32.cont [12/16] 0.0, 128
        %1079 = vxpose.xlu0.b32.cont [13/16] 0.0, 128
        %1080 = vxpose.xlu0.b32.cont [14/16] 0.0, 128
        %1081 = vxpose.xlu0.b32.cont [15/16] 0.0, 128
        %1082 = vxpose.xlu0.b32.end [16/16] 0.0, 128
        %v1083 = vpop.trf.xlu0
        %v1084 = vpop.trf.xlu0
        %v1085 = vpop.trf.xlu0
        %v1086 = vpop.trf.xlu0
        %v1087 = vpop.trf.xlu0
        %v1088 = vpop.trf.xlu0
        %v1089 = vpop.trf.xlu0
        %v1090 = vpop.trf.xlu0
        %v1091 = vpop.trf.xlu0
        %v1092 = vpop.trf.xlu0
        %v1093 = vpop.trf.xlu0
        %v1094 = vpop.trf.xlu0
        %v1095 = vpop.trf.xlu0
        %v1096 = vpop.trf.xlu0
        %v1097 = vpop.trf.xlu0
        %v1098 = vpop.trf.xlu0
        %vm1099 = vcmask 31744
        %v1101 = vsel %vm1099, %v1083, 0
        %vm1103 = vcmask 1043456
        %v1105 = vsel %vm1103, %v1066, 0
        %1107 = vmatpush.msra.mxu0 0.0
        %1108 = vmatpush.msra.mxu0 0.0
        %1109 = vmatpush.msra.mxu0 0.0
        %1110 = vmatpush.msra.mxu0 0.0
        %1111 = vmatpush.msra.mxu0 0.0
        %1112 = vmatpush.msra.mxu0 0.0
        %1113 = vmatpush.msra.mxu0 0.0
        %1114 = vmatpush.msra.mxu0 0.0
        %1115 = vmatpush.msra.mxu0 0.0
        %1116 = vmatpush.msra.mxu0 0.0
        %1117 = vmatpush.msra.mxu0 0.0
        %1118 = vmatpush.msra.mxu0 0.0
        %1119 = vmatpush.msra.mxu0 0.0
        %1120 = vmatpush.msra.mxu0 0.0
        %1121 = vmatpush.msra.mxu0 0.0
        %1122 = vmatpush.msra.mxu0 %v1105
        %1123 = vmatmul.f32.gmra.mxu0 %v1101
        %v1124 = vpop.f32.mrf.mxu0
        %v1125 = vadd.f32 0.0, %v1124
        %1126 = vdwg.mxu0
        %v1127 = vld [vmem:[%s14] sm:$0xf]
        %v1129 = vsel %vm1103, %v1127, 0
        %1131 = vmatpush.msra.mxu0 0.0
        %1132 = vmatpush.msra.mxu0 0.0
        %1133 = vmatpush.msra.mxu0 0.0
        %1134 = vmatpush.msra.mxu0 0.0
        %1135 = vmatpush.msra.mxu0 0.0
        %1136 = vmatpush.msra.mxu0 0.0
        %1137 = vmatpush.msra.mxu0 0.0
        %1138 = vmatpush.msra.mxu0 0.0
        %1139 = vmatpush.msra.mxu0 0.0
        %1140 = vmatpush.msra.mxu0 0.0
        %1141 = vmatpush.msra.mxu0 0.0
        %1142 = vmatpush.msra.mxu0 0.0
        %1143 = vmatpush.msra.mxu0 0.0
        %1144 = vmatpush.msra.mxu0 0.0
        %1145 = vmatpush.msra.mxu0 0.0
        %1146 = vmatpush.msra.mxu0 %v1129
        %1147 = vmatmul.f32.gmra.mxu0 %v1101
        %v1148 = vpop.f32.mrf.mxu0
        %v1149 = vadd.f32 0.0, %v1148
        %1150 = vdwg.mxu0
        %v1151 = vld [vmem:[%s853] sm:$0xff]
        %v1152 = vadd.f32 %v1151, %v1149
        %v1154 = vsel %vm892, %v1065, 0
        %1156 = vmatpush.msra.mxu0 0.0
        %1157 = vmatpush.msra.mxu0 0.0
        %1158 = vmatpush.msra.mxu0 0.0
        %1159 = vmatpush.msra.mxu0 0.0
        %1160 = vmatpush.msra.mxu0 0.0
        %1161 = vmatpush.msra.mxu0 0.0
        %1162 = vmatpush.msra.mxu0 0.0
        %1163 = vmatpush.msra.mxu0 0.0
        %1164 = vmatpush.msra.mxu0 0.0
        %1165 = vmatpush.msra.mxu0 0.0
        %1166 = vmatpush.msra.mxu0 0.0
        %1167 = vmatpush.msra.mxu0 0.0
        %1168 = vmatpush.msra.mxu0 0.0
        %1169 = vmatpush.msra.mxu0 0.0
        %1170 = vmatpush.msra.mxu0 0.0
        %1171 = vmatpush.msra.mxu0 %v1152
        %1172 = vmatmul.f32.gmra.mxu0 %v1154
        %v1173 = vpop.f32.mrf.mxu0
        %v1174 = vadd.f32 0.0, %v1173
        %1175 = vdwg.mxu0
        %v1176 = vld [vmem:[%s849] sm:$0xff]
        %v1177 = vadd.f32 %v1176, %v1125
        %v1178 = vadd.f32 %v1177, %v1174
        %v1179 = vmax.f32 %v1178, 0.0
        %vm1180 = vcmask 261120
        %1181 = vst.msk [vmem:[%s866] sm:$0xff] %vm1180, %v1179
        %v1182 = vld [vmem:[%s856] sm:$0x1]
        %v1183 = vld [vmem:[%s859] sm:$0x1]
        %v1184 = vld [vmem:[%s15] sm:$0xff]
        %v1185 = vld [vmem:[%s15 + $0x8] sm:$0xff]
        %v1186 = vld [vmem:[%s15 + $0x10] sm:$0xff]
        %v1187 = vld [vmem:[%s15 + $0x18] sm:$0xff]
        %v1188 = vld [vmem:[%s16] sm:$0xff]
        %v1189 = vld [vmem:[%s16 + $0x8] sm:$0xff]
        %v1190 = vld [vmem:[%s16 + $0x10] sm:$0xff]
        %v1191 = vld [vmem:[%s16 + $0x18] sm:$0xff]
        %v1193 = vsel %vm1180, %v1183, 0
        %1195 = vmatpush.msra.mxu0 0.0
        %1196 = vmatpush.msra.mxu0 0.0
        %1197 = vmatpush.msra.mxu0 0.0
        %1198 = vmatpush.msra.mxu0 0.0
        %1199 = vmatpush.msra.mxu0 0.0
        %1200 = vmatpush.msra.mxu0 0.0
        %1201 = vmatpush.msra.mxu0 0.0
        %1202 = vmatpush.msra.mxu0 0.0
        %1203 = vmatpush.msra.mxu0 0.0
        %1204 = vmatpush.msra.mxu0 0.0
        %1205 = vmatpush.msra.mxu0 0.0
        %1206 = vmatpush.msra.mxu0 0.0
        %1207 = vmatpush.msra.mxu0 %v1191
        %1208 = vmatpush.msra.mxu0 %v1190
        %1209 = vmatpush.msra.mxu0 %v1189
        %1210 = vmatpush.msra.mxu0 %v1188
        %1211 = vmatmul.f32.gmra.mxu0 %v1193
        %v1212 = vpop.f32.mrf.mxu0
        %v1213 = vadd.f32 0.0, %v1212
        %1214 = vdwg.mxu0
        %v1216 = vsel %vm1180, %v1182, 0
        %1218 = vmatpush.msra.mxu0 0.0
        %1219 = vmatpush.msra.mxu0 0.0
        %1220 = vmatpush.msra.mxu0 0.0
        %1221 = vmatpush.msra.mxu0 0.0
        %1222 = vmatpush.msra.mxu0 0.0
        %1223 = vmatpush.msra.mxu0 0.0
        %1224 = vmatpush.msra.mxu0 0.0
        %1225 = vmatpush.msra.mxu0 0.0
        %1226 = vmatpush.msra.mxu0 0.0
        %1227 = vmatpush.msra.mxu0 0.0
        %1228 = vmatpush.msra.mxu0 0.0
        %1229 = vmatpush.msra.mxu0 0.0
        %1230 = vmatpush.msra.mxu0 %v1187
        %1231 = vmatpush.msra.mxu0 %v1186
        %1232 = vmatpush.msra.mxu0 %v1185
        %1233 = vmatpush.msra.mxu0 %v1184
        %1234 = vmatmul.f32.gmra.mxu0 %v1216
        %v1235 = vpop.f32.mrf.mxu0
        %v1236 = vadd.f32 %v1213, %v1235
        %1237 = vdwg.mxu0
        %v1238 = vld [vmem:[%s17] sm:$0x1]
        %v1239 = vadd.f32 %v1236, %v1238
        %v1240 = vxor.u32 %v1239, 2147483648
        %v1241 = vmul.f32 %v1240, 1.442695
        %v1242 = vpow.pop %v1241
        %v1243 = vadd.f32 %v1242, 1.0
        %v1244 = vrcp.pop %v1243
        %v1245 = vmul.f32 %v1243, %v1244
        %v1246 = vsub.f32 1.0, %v1245
        %v1247 = vmul.f32 %v1244, %v1246
        %v1248 = vadd.f32 %v1244, %v1247
        %vm1249 = vweird.f32 %v1243
        %vm1250 = vweird.f32 %v1244
        %vm1251 = vmor %vm1249, %vm1250
        %v1252 = vsel %vm1251, %v1244, %v1248
        %v1253 = vand.u32 2147483647, %v1243
        %vm1254 = vcmp.eq.f32.partialorder %v1253, 8.507059e+37
        %v1255 = vand.u32 %v1243, 2147483648
        %v1256 = vor.u32 1.1754944e-38, %v1255
        %v1257 = vsel %vm1254, %v1256, %v1252
        %v1258 = vmul.f32 1.0, %v1257
        %v1259 = vtanh.pop %v1239
        %v1260 = vmul.f32 %v1258, %v1183
        %1262 = vrot.lane.b32.xlu0 %v1259, 64
        %v1263 = vpop.permute.xlu0 %1262
        %v1265 = vmul.f32 %v1258, %v1263
        %1267 = vrot.lane.b32.xlu0 %v1265, 32
        %v1268 = vpop.permute.xlu0 %1267
        %v1270 = vadd.f32 %v1260, %v1268
        %v1271 = vtanh.pop %v1270
        %1273 = vrot.lane.b32.xlu0 %v1271, 64
        %v1274 = vpop.permute.xlu0 %1273
        %v1276 = vmul.f32 %v1258, %v1274
        %1278 = vrot.lane.b32.xlu0 %v1276, 32
        %v1279 = vpop.permute.xlu0 %1278
        %v1281 = vsel %vm1180, %v1279, %v1270
        %vm1282 = vcmask 516096
        %1283 = vst.msk [vmem:[%s869] sm:$0x1] %vm1282, %v1281
        %v1284 = vld [vmem:[%s18] sm:$0xff]
        %v1285 = vld [vmem:[%s18 + $0x8] sm:$0xff]
        %v1286 = vld [vmem:[%s18 + $0x10] sm:$0xff]
        %v1287 = vld [vmem:[%s18 + $0x18] sm:$0xff]
        %v1288 = vld [vmem:[%s19] sm:$0xff]
        %v1289 = vld [vmem:[%s19 + $0x8] sm:$0xff]
        %v1290 = vld [vmem:[%s19 + $0x10] sm:$0xff]
        %v1291 = vld [vmem:[%s19 + $0x18] sm:$0xff]
        %v1292 = vsel %vm1180, %v1279, 0
        %1294 = vmatpush.msra.mxu0 0.0
        %1295 = vmatpush.msra.mxu0 0.0
        %1296 = vmatpush.msra.mxu0 0.0
        %1297 = vmatpush.msra.mxu0 0.0
        %1298 = vmatpush.msra.mxu0 0.0
        %1299 = vmatpush.msra.mxu0 0.0
        %1300 = vmatpush.msra.mxu0 0.0
        %1301 = vmatpush.msra.mxu0 0.0
        %1302 = vmatpush.msra.mxu0 0.0
        %1303 = vmatpush.msra.mxu0 0.0
        %1304 = vmatpush.msra.mxu0 0.0
        %1305 = vmatpush.msra.mxu0 0.0
        %1306 = vmatpush.msra.mxu0 %v1291
        %1307 = vmatpush.msra.mxu0 %v1290
        %1308 = vmatpush.msra.mxu0 %v1289
        %1309 = vmatpush.msra.mxu0 %v1288
        %1310 = vmatmul.f32.gmra.mxu0 %v1292
        %v1311 = vpop.f32.mrf.mxu0
        %v1312 = vadd.f32 0.0, %v1311
        %1313 = vdwg.mxu0
        %v1314 = vperm.slane %v1312, 0
        %v1316 = vsel %vm1180, %v1179, 0
        %1318 = vmatpush.msra.mxu0 0.0
        %1319 = vmatpush.msra.mxu0 0.0
        %1320 = vmatpush.msra.mxu0 0.0
        %1321 = vmatpush.msra.mxu0 0.0
        %1322 = vmatpush.msra.mxu0 0.0
        %1323 = vmatpush.msra.mxu0 0.0
        %1324 = vmatpush.msra.mxu0 0.0
        %1325 = vmatpush.msra.mxu0 0.0
        %1326 = vmatpush.msra.mxu0 0.0
        %1327 = vmatpush.msra.mxu0 0.0
        %1328 = vmatpush.msra.mxu0 0.0
        %1329 = vmatpush.msra.mxu0 0.0
        %1330 = vmatpush.msra.mxu0 %v1287
        %1331 = vmatpush.msra.mxu0 %v1286
        %1332 = vmatpush.msra.mxu0 %v1285
        %1333 = vmatpush.msra.mxu0 %v1284
        %1334 = vmatmul.f32.gmra.mxu0 %v1316
        %v1335 = vpop.f32.mrf.mxu0
        %v1336 = vadd.f32 %v1314, %v1335
        %1337 = vdwg.mxu0
        %v1338 = vtanh.pop %v1336
        %v1339 = vld [vmem:[%s20] sm:$0x1]
        %v1341 = vsel %vm1180, %v1339, 0
        %v1344 = vsel %vm1180, %v1338, 0
        %1346 = vmatpush.xpose.msra.mxu0 0.0
        %1347 = vmatpush.xpose.msra.mxu0 0.0
        %1348 = vmatpush.xpose.msra.mxu0 0.0
        %1349 = vmatpush.xpose.msra.mxu0 0.0
        %1350 = vmatpush.xpose.msra.mxu0 0.0
        %1351 = vmatpush.xpose.msra.mxu0 0.0
        %1352 = vmatpush.xpose.msra.mxu0 0.0
        %1353 = vmatpush.xpose.msra.mxu0 0.0
        %1354 = vmatpush.xpose.msra.mxu0 0.0
        %1355 = vmatpush.xpose.msra.mxu0 0.0
        %1356 = vmatpush.xpose.msra.mxu0 0.0
        %1357 = vmatpush.xpose.msra.mxu0 0.0
        %1358 = vmatpush.xpose.msra.mxu0 0.0
        %1359 = vmatpush.xpose.msra.mxu0 0.0
        %1360 = vmatpush.xpose.msra.mxu0 0.0
        %1361 = vmatpush.xpose.msra.mxu0 %v1344
        %1362 = vmatmul.f32.gmra.mxu0 %v1341
        %v1363 = vpop.f32.mrf.mxu0
        %v1364 = vadd.f32 0.0, %v1363
        %1365 = vdwg.mxu0
        %vm1366 = vcmp.gt.f32.partialorder %v938, 0.0
        %v1367 = vsel %vm1366, %v1364, -1e+09
        %v1368 = vsel %vm944, %v1367, -inf
        %1369 = vmax.xlane.f32.xlu0 %v1368
        %v1370 = vpop.xlane.xlu0 %1369
        %v1371 = vsub.f32 %v1367, %v1370
        %v1372 = vmul.f32 %v1371, 1.442695
        %v1373 = vpow.pop %v1372
        %v1374 = vsel %vm944, %v1373, 0.0
        %1375 = vadd.xlane.f32.xlu0 %v1374
        %v1376 = vpop.xlane.xlu0 %1375
        %v1377 = vrcp.pop %v1376
        %v1378 = vmul.f32 %v1376, %v1377
        %v1379 = vsub.f32 1.0, %v1378
        %v1380 = vmul.f32 %v1377, %v1379
        %v1381 = vadd.f32 %v1377, %v1380
        %vm1382 = vweird.f32 %v1376
        %vm1383 = vweird.f32 %v1377
        %vm1384 = vmor %vm1382, %vm1383
        %v1385 = vsel %vm1384, %v1377, %v1381
        %v1386 = vand.u32 2147483647, %v1376
        %vm1387 = vcmp.eq.f32.partialorder %v1386, 8.507059e+37
        %v1388 = vand.u32 %v1376, 2147483648
        %v1389 = vor.u32 1.1754944e-38, %v1388
        %v1390 = vsel %vm1387, %v1389, %v1385
        %v1391 = vmul.f32 %v1373, %v1390
        %1392 = vst.msk [vmem:[%s872] sm:$0x1] %vm944, %v1391
        %p1393 = scmp.lt.s32.totalorder %s47, 1
        %s1394 = scalar_select %p1393, %s47, 1
        %s1395 = scalar_lea.vmem %s21, %s1394
        %p1396 = scmp.lt.s32.totalorder %s47, 1
        %s1397 = scalar_select %p1396, %s47, 1
        %s1398 = smul.addr %s1397, 8
        %s1399 = scalar_lea.vmem %s22, %s1398
        %p1400 = scmp.lt.s32.totalorder %s47, 1
        %s1401 = scalar_select %p1400, %s47, 1
        %s1402 = scalar_lea.vmem %s23, %s1401
        %p1403 = scmp.lt.s32.totalorder %s47, 1
        %s1404 = scalar_select %p1403, %s47, 1
        %s1405 = scalar_lea.vmem %s24, %s1404
        // Predicated region
        $region113: #{_run_episode_jit.5} parent=99 // pred_check
          %p1406 = pneg %p520
        $region114: #{_run_episode_jit.5} parent=99 // pred_check_branch
          %1408 = sbr.rel (%p1406) target = $region116
        $region115: #{_run_episode_jit.5} parent=99 // pred_region
          _
        $region116: #{_run_episode_jit.5} parent=99 // pred_fallthru
          _
        // Predicated region
        $region117: #{_run_episode_jit.5} parent=99 // pred_check
          %p1409 = pneg %p546
        $region118: #{_run_episode_jit.5} parent=99 // pred_check_branch
          %1411 = sbr.rel (%p1409) target = $region120
        $region119: #{_run_episode_jit.5} parent=99 // pred_region
          _
        $region120: #{_run_episode_jit.5} parent=99 // pred_fallthru
          _
        // Predicated region
        $region121: #{_run_episode_jit.5} parent=99 // pred_check
          %p1412 = pneg %p572
        $region122: #{_run_episode_jit.5} parent=99 // pred_check_branch
          %1414 = sbr.rel (%p1412) target = $region124
        $region123: #{_run_episode_jit.5} parent=99 // pred_region
          _
        $region124: #{_run_episode_jit.5} parent=99 // pred_fallthru
          _
        // Predicated region
        $region125: #{_run_episode_jit.5} parent=99 // pred_check
          %p1415 = pneg %p598
        $region126: #{_run_episode_jit.5} parent=99 // pred_check_branch
          %1417 = sbr.rel (%p1415) target = $region128
        $region127: #{_run_episode_jit.5} parent=99 // pred_region
          _
        $region128: #{_run_episode_jit.5} parent=99 // pred_fallthru
          _
      $region100: #{_run_episode_jit.5} parent=5 // pred_fallthru
        _
      %p1418 = scmp.le.s32.totalorder 2, %s42
      // Predicated region
      $region129: #{_run_episode_jit.5} parent=5 // pred_check
        %p1419 = pneg %p1418
      $region130: #{_run_episode_jit.5} parent=5 // pred_check_branch
        %1421 = sbr.rel (%p1419) target = $region132
      $region131: #{_run_episode_jit.5} parent=5 // pred_region
        %s1422 = ssub.s32 %s42, 2
        // Predicated region
        $region133: #{_run_episode_jit.5} parent=131 // pred_check
          %p1423 = pneg %p526
        $region134: #{_run_episode_jit.5} parent=131 // pred_check_branch
          %1425 = sbr.rel (%p1423) target = $region136
        $region135: #{_run_episode_jit.5} parent=131 // pred_region
          %p1426 = scmp.lt.s32.totalorder %s48, 1
          %s1427 = scalar_select %p1426, %s48, 1
          %s1428 = scalar_lea.vmem %s21, %s1427
        $region136: #{_run_episode_jit.5} parent=131 // pred_fallthru
          _
        // Predicated region
        $region137: #{_run_episode_jit.5} parent=131 // pred_check
          %p1429 = pneg %p552
        $region138: #{_run_episode_jit.5} parent=131 // pred_check_branch
          %1431 = sbr.rel (%p1429) target = $region140
        $region139: #{_run_episode_jit.5} parent=131 // pred_region
          %p1432 = scmp.lt.s32.totalorder %s48, 1
          %s1433 = scalar_select %p1432, %s48, 1
          %s1434 = smul.addr %s1433, 8
          %s1435 = scalar_lea.vmem %s22, %s1434
        $region140: #{_run_episode_jit.5} parent=131 // pred_fallthru
          _
        // Predicated region
        $region141: #{_run_episode_jit.5} parent=131 // pred_check
          %p1436 = pneg %p578
        $region142: #{_run_episode_jit.5} parent=131 // pred_check_branch
          %1438 = sbr.rel (%p1436) target = $region144
        $region143: #{_run_episode_jit.5} parent=131 // pred_region
          %p1439 = scmp.lt.s32.totalorder %s48, 1
          %s1440 = scalar_select %p1439, %s48, 1
          %s1441 = scalar_lea.vmem %s23, %s1440
        $region144: #{_run_episode_jit.5} parent=131 // pred_fallthru
          _
        // Predicated region
        $region145: #{_run_episode_jit.5} parent=131 // pred_check
          %p1442 = pneg %p604
        $region146: #{_run_episode_jit.5} parent=131 // pred_check_branch
          %1444 = sbr.rel (%p1442) target = $region148
        $region147: #{_run_episode_jit.5} parent=131 // pred_region
          %p1445 = scmp.lt.s32.totalorder %s48, 1
          %s1446 = scalar_select %p1445, %s48, 1
          %s1447 = scalar_lea.vmem %s24, %s1446
        $region148: #{_run_episode_jit.5} parent=131 // pred_fallthru
          _
      $region132: #{_run_episode_jit.5} parent=5 // pred_fallthru
        _
    $region6: #{_run_episode_jit.5} parent=1 // loop_footer
      %s46 = sadd.s32 1, %s42
    $region7: #{_run_episode_jit.5} parent=1 // loop_footer_branch
      %41 = sbr.rel target = $region3
    $region8: #{_run_episode_jit.5} parent=1 // loop_exit
      _
    %1448 = vsyncpa [#allocation6], 1
    %s1449 = scalar_lea.sflag [#allocation6], 1
    %1450 = vsyncpa %s1449, 1
    %1451 = vsyncpa [#allocation8], 1

</llo_original>
